<compile_context>
chip_gen: v6e
topology: v6e:2x2x1
jax: 0.10.0
libtpu: 0.0.40
codegen_flags: <defaults>
</compile_context>

<pallas_src>
import functools

import jax
import jax.numpy as jnp
from jax.experimental import pallas as pl
from jax.experimental.pallas import tpu as pltpu


def _round_up(x, m):
    return (x + m - 1) // m * m


def _cdiv(a, b):
    return (a + b - 1) // b


def _epilogue_dtype():
    """bf16 swish epilogue on chips with bf16 VPU/EUP (v6e/v7x); f32 otherwise (v5e/older)."""
    try:
        kind = jax.devices()[0].device_kind.lower()
    except Exception:
        return jnp.float32
    if any(tag in kind for tag in ("v6", "v7", "7x")):
        return jnp.bfloat16
    return jnp.float32


def _pick_n_chunk(cf):
    """Number of head-output slabs (slab width stays a multiple of 128 lanes)."""
    for nc in (512, 256, 128):
        if cf % nc == 0:
            return cf // nc
    return 1


def _swish(x):
    """x * sigmoid(x). f32 path routes the divide to the EUP (approx reciprocal, v5e-friendly)."""
    if x.dtype == jnp.float32:
        return x * pl.reciprocal(1.0 + jnp.exp(-x), approx=True)
    return x * jax.nn.sigmoid(x)


# ----------------------------------------------------------------------------
# Fused Pallas kernel: stem conv (im2col matmul) -> head 1x1 conv -> masked GAP
# ----------------------------------------------------------------------------
def _fused_stem_head_pool_kernel(p_ref, ws_ref, bs_ref, wh_ref, bh_ref,
                                 temp_ref, *, hw, inv_hw, n_chunk, epi_dtype):
    t = pl.program_id(1)                       # HW-tile index (pool-reduction axis)
    tm = p_ref.shape[1]
    cf = wh_ref.shape[1]
    nc = cf // n_chunk

    @pl.when(t == 0)
    def _init():
        temp_ref[...] = jnp.zeros_like(temp_ref)

    # --- stem 3x3/s2 conv as im2col matmul: bf16 MXU operands, f32 accumulate ---
    patches = p_ref[0]                                             # (tm, KP) bf16
    stem = jnp.dot(patches, ws_ref[...],
                   preferred_element_type=jnp.float32)             # (tm, CSP) f32
    stem = _swish(stem + bs_ref[...])                              # swish in f32
    stem = stem.astype(jnp.bfloat16)                               # MXU operand for head

    # --- row-validity mask: cdiv-padded rows must NOT pollute the pooled mean
    #     (swish(bias) != 0). Folded into the pooling matmul below as its LHS. ---
    valid = hw - t * tm                                            # scalar; may exceed tm
    row_ids = jax.lax.broadcasted_iota(jnp.int32, (1, tm), 1)
    mvec = jnp.where(row_ids < valid,
                     jnp.ones((1, tm), epi_dtype),
                     jnp.zeros((1, tm), epi_dtype))                # (1, tm)

    # --- head 1x1 conv, chunked over output channels; feat never touches HBM ---
    pooled = []
    for s in range(n_chunk):
        lo = s * nc
        hi = lo + nc
        f = jnp.dot(stem, wh_ref[:, lo:hi],
                    preferred_element_type=jnp.float32)            # (tm, nc) f32
        f = _swish((f + bh_ref[:, lo:hi]).astype(epi_dtype))       # swish in epi dtype
        # masked row-sum on the MXU: (1, tm) @ (tm, nc) -> (1, nc) f32 accumulate
        pooled.append(jnp.dot(mvec, f, preferred_element_type=jnp.float32))

    # streaming global-average-pool: accumulate HW column-sums directly in the
    # resident f32 output block (its index_map ignores t -> accumulator).
    temp_ref[0] += jnp.concatenate(pooled, axis=-1)                # (1, cf)

    @pl.when(t == pl.num_programs(1) - 1)
    def _finalize():
        temp_ref[...] = temp_ref[...] * inv_hw                     # _avg_pooling mean


def fused_stem_head_pool(patches, w_stem, b_stem, w_head, b_head, *, hw, tm, epi_dtype):
    """patches: (B, HW_pad, KP) bf16 (rows >= hw zero-padded) -> (B, 1, CF) f32 pooled feat."""
    B, hw_pad, KP = patches.shape
    CSP = w_stem.shape[1]
    CF = w_head.shape[1]
    n_t = hw_pad // tm
    kernel = functools.partial(
        _fused_stem_head_pool_kernel,
        hw=hw, inv_hw=1.0 / hw, n_chunk=_pick_n_chunk(CF), epi_dtype=epi_dtype)
    return pl.pallas_call(
        kernel,
        out_shape=jax.ShapeDtypeStruct((B, 1, CF), jnp.float32),
        grid_spec=pltpu.PrefetchScalarGridSpec(
            num_scalar_prefetch=0,
            grid=(B, n_t),
            in_specs=[
                pl.BlockSpec((1, tm, KP), lambda b, t: (b, t, 0)),   # im2col patch tile
                pl.BlockSpec((KP, CSP), lambda b, t: (0, 0)),        # stem weight (resident)
                pl.BlockSpec((1, CSP), lambda b, t: (0, 0)),         # stem bias
                pl.BlockSpec((CSP, CF), lambda b, t: (0, 0)),        # head weight (resident)
                pl.BlockSpec((1, CF), lambda b, t: (0, 0)),          # head bias
            ],
            out_specs=pl.BlockSpec((1, 1, CF), lambda b, t: (b, 0, 0)),
        ),
        compiler_params=pltpu.CompilerParams(
            # batch axis shards across the 2 TCs on v7x; the HW axis carries the
            # resident pooled accumulator so it stays sequential ("arbitrary", last).
            # TODO(synk): for B==1 (or odd B) on v7x, flatten (B, HW-tiles) into one
            # parallel axis with per-core partial accumulators + a combine pass so
            # the second TensorCore is not idle.
            dimension_semantics=("parallel", "arbitrary"),
            # tm=1024 footprint: double-buffered (1,tm,32) bf16 patch tiles (~0.13 MiB)
            # + resident weights (~0.3 MiB) + chunked (tm,512) f32 intermediates
            # (a few MiB) -- well under 48 MiB, which itself leaves headroom inside
            # v7x's 64 MiB physical VMEM (v5e/v6e have 128 MiB).
            vmem_limit_bytes=48 * 1024 * 1024,
        ),
    )(patches, w_stem, b_stem, w_head, b_head)


# ----------------------------------------------------------------------------
# Glue (layout / im2col / parameter padding) in plain JAX
# ----------------------------------------------------------------------------
def im2col_3x3_s2_p1(x_nhwc):
    """3x3 patches, stride 2, padding 1 (EfficientNet stem geometry); ceil output size."""
    B, H, W, C = x_nhwc.shape
    Ho, Wo = (H + 1) // 2, (W + 1) // 2
    xp = jnp.pad(x_nhwc, ((0, 0), (1, 1), (1, 1), (0, 0)))
    cols = []
    for dy in range(3):
        for dx in range(3):
            cols.append(xp[:, dy:dy + 2 * Ho:2, dx:dx + 2 * Wo:2, :])
    patches = jnp.stack(cols, axis=3)            # (B, Ho, Wo, 9, C)
    return patches.reshape(B, Ho * Wo, 9 * C), (Ho, Wo)


def new_efficient2_forward(x_nchw, params, *, tile_hw=1024):
    x = jnp.transpose(x_nchw, (0, 2, 3, 1)).astype(jnp.float32)   # NCHW -> NHWC
    B, H, W, Cin = x.shape
    epi_dtype = _epilogue_dtype()

    # --- backbone.extract_features (abridged) ---
    # TODO(synk): the 39 MBConv blocks of EfficientNet-b5 are not reproduced here;
    # stem + head convs stand in for the full extract_features trunk.
    patches, (Ho, Wo) = im2col_3x3_s2_p1(x)                       # (B, HW, 9*Cin) f32
    # TODO(synk): build the 3x3 windows in-kernel (strided pl.ds loads on a padded
    # NHWC tile) to avoid materializing the 9x patch matrix in HBM at b5 resolutions.
    HW = Ho * Wo
    KP = 9 * Cin
    KP_pad = _round_up(KP, 32)            # 27 -> 32: avoid bf16 relayout of the LHS tile

    # HW tiling: cdiv grid + zero-padded (masked) rows, independent of HW's
    # factorization; tm defaults to 1024 so per-step MXU work dominates the
    # ~0.35us grid-step overhead on every generation.
    tm = _round_up(max(8, min(tile_hw, _round_up(HW, 8))), 8)
    n_t = _cdiv(HW, tm)
    HW_pad = n_t * tm
    patches = jnp.pad(patches.astype(jnp.bfloat16),
                      ((0, 0), (0, HW_pad - HW), (0, KP_pad - KP)))

    # --- parameter prep: fold/pad to MXU/lane-friendly shapes, cast MXU operands ---
    cs = params["w_stem"].shape[-1]
    cs_pad = _round_up(cs, 64)                                    # 48 -> 64 (single K-tile)
    cf = params["w_head"].shape[-1]
    ncls = params["w_fc"].shape[-1]

    w_stem = jnp.zeros((KP_pad, cs_pad), jnp.bfloat16).at[:KP, :cs].set(
        params["w_stem"].reshape(KP, cs).astype(jnp.bfloat16))
    b_stem = jnp.zeros((1, cs_pad), jnp.float32).at[:, :cs].set(
        params["b_stem"].astype(jnp.float32))
    w_head = jnp.zeros((cs_pad, cf), jnp.bfloat16).at[:cs, :].set(
        params["w_head"].astype(jnp.bfloat16))
    b_head = params["b_head"].reshape(1, cf).astype(jnp.float32)

    # --- fused stem -> head -> masked avg-pool (feat never written to HBM) ---
    temp = fused_stem_head_pool(patches, w_stem, b_stem, w_head, b_head,
                                hw=HW, tm=tm, epi_dtype=epi_dtype)
    temp = temp.reshape(B, cf)                                    # == `temp` output (B, C_FEAT)

    # --- batch-sum + dropout(eval, identity) + fc: plain XLA (4-element GEMV;
    #     a dedicated Pallas launch + 128-padded fc weights cost more than it saves).
    s = jnp.sum(temp, axis=0, keepdims=True)                      # (1, C_FEAT)
    out = jnp.dot(s, params["w_fc"].astype(jnp.float32)) \
        + params["b_fc"].reshape(1, ncls).astype(jnp.float32)     # (1, 4)
    return temp, out


# ----------------------------------------------------------------------------
# Pure-JAX f32 reference (same abridged trunk) for tolerance checking
# ----------------------------------------------------------------------------
def reference_forward(x_nchw, params):
    x = jnp.transpose(x_nchw, (0, 2, 3, 1)).astype(jnp.float32)
    patches, _ = im2col_3x3_s2_p1(x)
    KP = patches.shape[-1]
    cs = params["w_stem"].shape[-1]
    stem = patches @ params["w_stem"].reshape(KP, cs) + params["b_stem"]
    stem = stem * jax.nn.sigmoid(stem)
    feat = stem @ params["w_head"] + params["b_head"]
    feat = feat * jax.nn.sigmoid(feat)
    temp = jnp.mean(feat, axis=1)                  # (B, C_FEAT)
    s = jnp.sum(temp, axis=0, keepdims=True)
    out = s @ params["w_fc"] + params["b_fc"]
    return temp, out


# ----------------------------------------------------------------------------
# Main
# ----------------------------------------------------------------------------
if __name__ == "__main__":
    key = jax.random.PRNGKey(0)
    kx, k1, k2, k3, k4, k5, k6 = jax.random.split(key, 7)

    # Small shapes consistent with the module: RGB input, b5-style head widths.
    B, Cin, H, W = 2, 3, 32, 32
    C_STEM, C_FEAT, NUM_CLASSES = 48, 2048, 4     # b5: stem=48, features=2048, fc->4

    x_nchw = jax.random.normal(kx, (B, Cin, H, W), dtype=jnp.float32)

    # Deterministic synthetic parameters (BN folded into conv weight/bias).
    params = {
        "w_stem": jax.random.normal(k1, (3, 3, Cin, C_STEM), jnp.float32) * 0.1,
        "b_stem": jax.random.normal(k2, (1, C_STEM), jnp.float32) * 0.1,
        "w_head": jax.random.normal(k3, (C_STEM, C_FEAT), jnp.float32) * 0.05,
        "b_head": jax.random.normal(k4, (1, C_FEAT), jnp.float32) * 0.05,
        "w_fc":   jax.random.normal(k5, (C_FEAT, NUM_CLASSES), jnp.float32) * 0.02,
        "b_fc":   jax.random.normal(k6, (1, NUM_CLASSES), jnp.float32) * 0.02,
    }

    # f32 reference (bf16 MXU operands in the kernel -> loose tolerances).
    t_ref, o_ref = reference_forward(x_nchw, params)

    # (1) default large tile: HW=256 fits in one tile (no padding/masking).
    fwd = jax.jit(functools.partial(new_efficient2_forward, tile_hw=1024))
    temp, out = fwd(x_nchw, params)
    temp = jax.block_until_ready(temp)
    out = jax.block_until_ready(out)
    assert temp.shape == (B, C_FEAT), temp.shape
    assert out.shape == (1, NUM_CLASSES), out.shape
    assert bool(jnp.isfinite(temp).all()) and bool(jnp.isfinite(out).all())
    assert bool(jnp.allclose(temp, t_ref, rtol=5e-2, atol=5e-2)), "temp mismatch"
    assert bool(jnp.allclose(out, o_ref, rtol=5e-2, atol=5e-2)), "out mismatch"

    # (2) tile that does NOT divide HW (256 -> 3 tiles of 96): exercises the cdiv
    #     grid, padded-row masking, and streaming pool accumulation across t.
    fwd_m = jax.jit(functools.partial(new_efficient2_forward, tile_hw=96))
    temp_m, out_m = fwd_m(x_nchw, params)
    temp_m = jax.block_until_ready(temp_m)
    out_m = jax.block_until_ready(out_m)
    assert bool(jnp.allclose(temp_m, t_ref, rtol=5e-2, atol=5e-2)), "temp mismatch (masked)"
    assert bool(jnp.allclose(out_m, o_ref, rtol=5e-2, atol=5e-2)), "out mismatch (masked)"

    print("KERNEL_OK")
</pallas_src>

<mosaic_0001>
module attributes {stable_mosaic.version = 11 : i64} {
  func.func @_fused_stem_head_pool_kernel(%arg0: i32, %arg1: i32, %arg2: memref<1x256x32xbf16, #tpu.memory_space<vmem>>, %arg3: memref<32x64xbf16, #tpu.memory_space<vmem>>, %arg4: memref<1x64xf32, #tpu.memory_space<vmem>>, %arg5: memref<64x2048xbf16, #tpu.memory_space<vmem>>, %arg6: memref<1x2048xf32, #tpu.memory_space<vmem>>, %arg7: memref<1x1x2048xf32, #tpu.memory_space<vmem>>) attributes {dimension_semantics = [#tpu.dimension_semantics<parallel>, #tpu.dimension_semantics<arbitrary>], iteration_bounds = array<i64: 2, 1>, scalar_prefetch = 0 : i64, scratch_operands = 0 : i64, tpu.core_type = #tpu.core_type<tc>, window_params = [{transform_indices = @transform_0, window_bounds = array<i64: 1, 256, 32>}, {pipeline_mode = #tpu.pipeline_mode<synchronous>, transform_indices = @transform_1, window_bounds = array<i64: 32, 64>}, {pipeline_mode = #tpu.pipeline_mode<synchronous>, transform_indices = @transform_2, window_bounds = array<i64: 1, 64>}, {pipeline_mode = #tpu.pipeline_mode<synchronous>, transform_indices = @transform_3, window_bounds = array<i64: 64, 2048>}, {pipeline_mode = #tpu.pipeline_mode<synchronous>, transform_indices = @transform_4, window_bounds = array<i64: 1, 2048>}, {transform_indices = @transform_5, window_bounds = array<i64: 1, 1, 2048>}]} {
    %c0_i32 = arith.constant 0 : i32
    %0 = arith.cmpi eq, %arg1, %c0_i32 : i32
    %1 = arith.extui %0 : i1 to i32
    %c0_i32_0 = arith.constant 0 : i32
    %2 = arith.cmpi ne, %1, %c0_i32_0 : i32
    scf.if %2 {
      %cst_49 = arith.constant 0.000000e+00 : f32
      %88 = vector.broadcast %cst_49 : f32 to vector<1x1x2048xf32>
      %c0_50 = arith.constant 0 : index
      %c0_51 = arith.constant 0 : index
      %c0_52 = arith.constant 0 : index
      %89 = vector.load %arg7[%c0_50, %c0_51, %c0_52] : memref<1x1x2048xf32, #tpu.memory_space<vmem>>, vector<1x1x2048xf32>
      tpu.vector_store %arg7[%c0_50, %c0_51, %c0_52], %88 {strides = array<i32>} : memref<1x1x2048xf32, #tpu.memory_space<vmem>>, vector<1x1x2048xf32>,
    } else {
    }
    %c0 = arith.constant 0 : index
    %c0_1 = arith.constant 0 : index
    %c0_2 = arith.constant 0 : index
    %3 = vector.load %arg2[%c0, %c0_1, %c0_2] : memref<1x256x32xbf16, #tpu.memory_space<vmem>>, vector<1x256x32xbf16>
    %4 = vector.shape_cast %3 : vector<1x256x32xbf16> to vector<256x32xbf16>
    %c0_3 = arith.constant 0 : index
    %c0_4 = arith.constant 0 : index
    %5 = vector.load %arg3[%c0_3, %c0_4] : memref<32x64xbf16, #tpu.memory_space<vmem>>, vector<32x64xbf16>
    %cst = arith.constant dense<0.000000e+00> : vector<256x64xf32>
    %6 = tpu.matmul %4, %5, %cst {dimension_numbers = #tpu.dot_dimension_numbers<[1], [0], [0], [1], [0, 0, 1, 1], [], []>} : vector<256x32xbf16>, vector<32x64xbf16>, vector<256x64xf32> -> vector<256x64xf32>
    %c0_5 = arith.constant 0 : index
    %c0_6 = arith.constant 0 : index
    %7 = vector.load %arg4[%c0_5, %c0_6] : memref<1x64xf32, #tpu.memory_space<vmem>>, vector<1x64xf32>
    %8 = vector.broadcast %7 : vector<1x64xf32> to vector<256x64xf32>
    %9 = arith.addf %6, %8 : vector<256x64xf32>
    %cst_7 = arith.constant 0.000000e+00 : f32
    %10 = vector.broadcast %cst_7 : f32 to vector<256x64xf32>
    %11 = arith.subf %10, %9 : vector<256x64xf32>
    %12 = math.exp %11 : vector<256x64xf32>
    %cst_8 = arith.constant 1.000000e+00 : f32
    %13 = vector.broadcast %cst_8 : f32 to vector<256x64xf32>
    %14 = arith.addf %13, %12 : vector<256x64xf32>
    %15 = tpu.reciprocal %14 {approx = true} : vector<256x64xf32> -> vector<256x64xf32>
    %16 = arith.mulf %9, %15 : vector<256x64xf32>
    %17 = arith.truncf %16 : vector<256x64xf32> to vector<256x64xbf16>
    %c256_i32 = arith.constant 256 : i32
    %18 = arith.muli %arg1, %c256_i32 : i32
    %c256_i32_9 = arith.constant 256 : i32
    %19 = arith.subi %c256_i32_9, %18 : i32
    %20 = tpu.iota {dimensions = array<i32: 1>} : vector<1x256xi32>
    %21 = vector.broadcast %19 : i32 to vector<1x256xi32>
    %22 = arith.cmpi slt, %20, %21 : vector<1x256xi32>
    %cst_10 = arith.constant 1.000000e+00 : f32
    %23 = vector.broadcast %cst_10 : f32 to vector<1x256xf32>
    %cst_11 = arith.constant 0.000000e+00 : f32
    %24 = vector.broadcast %cst_11 : f32 to vector<1x256xf32>
    %25 = arith.select %22, %23, %24 : vector<1x256xi1>, vector<1x256xf32>
    %c0_12 = arith.constant 0 : index
    %c0_13 = arith.constant 0 : index
    %26 = vector.load %arg5[%c0_12, %c0_13] : memref<64x2048xbf16, #tpu.memory_space<vmem>>, vector<64x512xbf16>
    %cst_14 = arith.constant dense<0.000000e+00> : vector<256x512xf32>
    %27 = tpu.matmul %17, %26, %cst_14 {dimension_numbers = #tpu.dot_dimension_numbers<[1], [0], [0], [1], [0, 0, 1, 1], [], []>} : vector<256x64xbf16>, vector<64x512xbf16>, vector<256x512xf32> -> vector<256x512xf32>
    %c0_15 = arith.constant 0 : index
    %c0_16 = arith.constant 0 : index
    %28 = vector.load %arg6[%c0_15, %c0_16] : memref<1x2048xf32, #tpu.memory_space<vmem>>, vector<1x512xf32>
    %29 = vector.broadcast %28 : vector<1x512xf32> to vector<256x512xf32>
    %30 = arith.addf %27, %29 : vector<256x512xf32>
    %cst_17 = arith.constant 0.000000e+00 : f32
    %31 = vector.broadcast %cst_17 : f32 to vector<256x512xf32>
    %32 = arith.subf %31, %30 : vector<256x512xf32>
    %33 = math.exp %32 : vector<256x512xf32>
    %cst_18 = arith.constant 1.000000e+00 : f32
    %34 = vector.broadcast %cst_18 : f32 to vector<256x512xf32>
    %35 = arith.addf %34, %33 : vector<256x512xf32>
    %36 = tpu.reciprocal %35 {approx = true} : vector<256x512xf32> -> vector<256x512xf32>
    %37 = arith.mulf %30, %36 : vector<256x512xf32>
    %cst_19 = arith.constant dense<0.000000e+00> : vector<1x512xf32>
    %38 = tpu.matmul %25, %37, %cst_19 {dimension_numbers = #tpu.dot_dimension_numbers<[1], [0], [0], [1], [0, 0, 1, 1], [], []>} : vector<1x256xf32>, vector<256x512xf32>, vector<1x512xf32> -> vector<1x512xf32>
    %c0_20 = arith.constant 0 : index
    %c512 = arith.constant 512 : index
    %39 = vector.load %arg5[%c0_20, %c512] : memref<64x2048xbf16, #tpu.memory_space<vmem>>, vector<64x512xbf16>
    %cst_21 = arith.constant dense<0.000000e+00> : vector<256x512xf32>
    %40 = tpu.matmul %17, %39, %cst_21 {dimension_numbers = #tpu.dot_dimension_numbers<[1], [0], [0], [1], [0, 0, 1, 1], [], []>} : vector<256x64xbf16>, vector<64x512xbf16>, vector<256x512xf32> -> vector<256x512xf32>
    %c0_22 = arith.constant 0 : index
    %c512_23 = arith.constant 512 : index
    %41 = vector.load %arg6[%c0_22, %c512_23] : memref<1x2048xf32, #tpu.memory_space<vmem>>, vector<1x512xf32>
    %42 = vector.broadcast %41 : vector<1x512xf32> to vector<256x512xf32>
    %43 = arith.addf %40, %42 : vector<256x512xf32>
    %cst_24 = arith.constant 0.000000e+00 : f32
    %44 = vector.broadcast %cst_24 : f32 to vector<256x512xf32>
    %45 = arith.subf %44, %43 : vector<256x512xf32>
    %46 = math.exp %45 : vector<256x512xf32>
    %cst_25 = arith.constant 1.000000e+00 : f32
    %47 = vector.broadcast %cst_25 : f32 to vector<256x512xf32>
    %48 = arith.addf %47, %46 : vector<256x512xf32>
    %49 = tpu.reciprocal %48 {approx = true} : vector<256x512xf32> -> vector<256x512xf32>
    %50 = arith.mulf %43, %49 : vector<256x512xf32>
    %cst_26 = arith.constant dense<0.000000e+00> : vector<1x512xf32>
    %51 = tpu.matmul %25, %50, %cst_26 {dimension_numbers = #tpu.dot_dimension_numbers<[1], [0], [0], [1], [0, 0, 1, 1], [], []>} : vector<1x256xf32>, vector<256x512xf32>, vector<1x512xf32> -> vector<1x512xf32>
    %c0_27 = arith.constant 0 : index
    %c1024 = arith.constant 1024 : index
    %52 = vector.load %arg5[%c0_27, %c1024] : memref<64x2048xbf16, #tpu.memory_space<vmem>>, vector<64x512xbf16>
    %cst_28 = arith.constant dense<0.000000e+00> : vector<256x512xf32>
    %53 = tpu.matmul %17, %52, %cst_28 {dimension_numbers = #tpu.dot_dimension_numbers<[1], [0], [0], [1], [0, 0, 1, 1], [], []>} : vector<256x64xbf16>, vector<64x512xbf16>, vector<256x512xf32> -> vector<256x512xf32>
    %c0_29 = arith.constant 0 : index
    %c1024_30 = arith.constant 1024 : index
    %54 = vector.load %arg6[%c0_29, %c1024_30] : memref<1x2048xf32, #tpu.memory_space<vmem>>, vector<1x512xf32>
    %55 = vector.broadcast %54 : vector<1x512xf32> to vector<256x512xf32>
    %56 = arith.addf %53, %55 : vector<256x512xf32>
    %cst_31 = arith.constant 0.000000e+00 : f32
    %57 = vector.broadcast %cst_31 : f32 to vector<256x512xf32>
    %58 = arith.subf %57, %56 : vector<256x512xf32>
    %59 = math.exp %58 : vector<256x512xf32>
    %cst_32 = arith.constant 1.000000e+00 : f32
    %60 = vector.broadcast %cst_32 : f32 to vector<256x512xf32>
    %61 = arith.addf %60, %59 : vector<256x512xf32>
    %62 = tpu.reciprocal %61 {approx = true} : vector<256x512xf32> -> vector<256x512xf32>
    %63 = arith.mulf %56, %62 : vector<256x512xf32>
    %cst_33 = arith.constant dense<0.000000e+00> : vector<1x512xf32>
    %64 = tpu.matmul %25, %63, %cst_33 {dimension_numbers = #tpu.dot_dimension_numbers<[1], [0], [0], [1], [0, 0, 1, 1], [], []>} : vector<1x256xf32>, vector<256x512xf32>, vector<1x512xf32> -> vector<1x512xf32>
    %c0_34 = arith.constant 0 : index
    %c1536 = arith.constant 1536 : index
    %65 = vector.load %arg5[%c0_34, %c1536] : memref<64x2048xbf16, #tpu.memory_space<vmem>>, vector<64x512xbf16>
    %cst_35 = arith.constant dense<0.000000e+00> : vector<256x512xf32>
    %66 = tpu.matmul %17, %65, %cst_35 {dimension_numbers = #tpu.dot_dimension_numbers<[1], [0], [0], [1], [0, 0, 1, 1], [], []>} : vector<256x64xbf16>, vector<64x512xbf16>, vector<256x512xf32> -> vector<256x512xf32>
    %c0_36 = arith.constant 0 : index
    %c1536_37 = arith.constant 1536 : index
    %67 = vector.load %arg6[%c0_36, %c1536_37] : memref<1x2048xf32, #tpu.memory_space<vmem>>, vector<1x512xf32>
    %68 = vector.broadcast %67 : vector<1x512xf32> to vector<256x512xf32>
    %69 = arith.addf %66, %68 : vector<256x512xf32>
    %cst_38 = arith.constant 0.000000e+00 : f32
    %70 = vector.broadcast %cst_38 : f32 to vector<256x512xf32>
    %71 = arith.subf %70, %69 : vector<256x512xf32>
    %72 = math.exp %71 : vector<256x512xf32>
    %cst_39 = arith.constant 1.000000e+00 : f32
    %73 = vector.broadcast %cst_39 : f32 to vector<256x512xf32>
    %74 = arith.addf %73, %72 : vector<256x512xf32>
    %75 = tpu.reciprocal %74 {approx = true} : vector<256x512xf32> -> vector<256x512xf32>
    %76 = arith.mulf %69, %75 : vector<256x512xf32>
    %cst_40 = arith.constant dense<0.000000e+00> : vector<1x512xf32>
    %77 = tpu.matmul %25, %76, %cst_40 {dimension_numbers = #tpu.dot_dimension_numbers<[1], [0], [0], [1], [0, 0, 1, 1], [], []>} : vector<1x256xf32>, vector<256x512xf32>, vector<1x512xf32> -> vector<1x512xf32>
    %c0_41 = arith.constant 0 : index
    %c0_42 = arith.constant 0 : index
    %c0_43 = arith.constant 0 : index
    %78 = vector.load %arg7[%c0_41, %c0_42, %c0_43] : memref<1x1x2048xf32, #tpu.memory_space<vmem>>, vector<1x1x2048xf32>
    %79 = vector.shape_cast %78 : vector<1x1x2048xf32> to vector<1x2048xf32>
    %80 = tpu.concatenate %38, %51, %64, %77 in 1 : vector<1x512xf32>, vector<1x512xf32>, vector<1x512xf32>, vector<1x512xf32> -> vector<1x2048xf32>
    %81 = arith.addf %79, %80 : vector<1x2048xf32>
    %c0_44 = arith.constant 0 : index
    %c0_45 = arith.constant 0 : index
    %c0_46 = arith.constant 0 : index
    %82 = vector.load %arg7[%c0_44, %c0_45, %c0_46] : memref<1x1x2048xf32, #tpu.memory_space<vmem>>, vector<1x1x2048xf32>
    %83 = vector.shape_cast %82 : vector<1x1x2048xf32> to vector<1x2048xf32>
    %84 = vector.shape_cast %81 : vector<1x2048xf32> to vector<1x1x2048xf32>
    tpu.vector_store %arg7[%c0_44, %c0_45, %c0_46], %84 {strides = array<i32>} : memref<1x1x2048xf32, #tpu.memory_space<vmem>>, vector<1x1x2048xf32>,
    %c0_i32_47 = arith.constant 0 : i32
    %85 = arith.cmpi eq, %arg1, %c0_i32_47 : i32
    %86 = arith.extui %85 : i1 to i32
    %c0_i32_48 = arith.constant 0 : i32
    %87 = arith.cmpi ne, %86, %c0_i32_48 : i32
    scf.if %87 {
      %c0_49 = arith.constant 0 : index
      %c0_50 = arith.constant 0 : index
      %c0_51 = arith.constant 0 : index
      %88 = vector.load %arg7[%c0_49, %c0_50, %c0_51] : memref<1x1x2048xf32, #tpu.memory_space<vmem>>, vector<1x1x2048xf32>
      %cst_52 = arith.constant 3.906250e-03 : f32
      %89 = vector.broadcast %cst_52 : f32 to vector<1x1x2048xf32>
      %90 = arith.mulf %88, %89 : vector<1x1x2048xf32>
      %c0_53 = arith.constant 0 : index
      %c0_54 = arith.constant 0 : index
      %c0_55 = arith.constant 0 : index
      %91 = vector.load %arg7[%c0_53, %c0_54, %c0_55] : memref<1x1x2048xf32, #tpu.memory_space<vmem>>, vector<1x1x2048xf32>
      tpu.vector_store %arg7[%c0_53, %c0_54, %c0_55], %90 {strides = array<i32>} : memref<1x1x2048xf32, #tpu.memory_space<vmem>>, vector<1x1x2048xf32>,
    } else {
    }
    return
  }
  func.func @transform_0(%arg0: i32, %arg1: i32) -> (i32, i32, i32) {
    %c0_i32 = arith.constant 0 : i32
    %c0_i32_0 = arith.constant 0 : i32
    return %arg0, %arg1, %c0_i32 : i32, i32, i32
  }
  func.func @transform_1(%arg0: i32, %arg1: i32) -> (i32, i32) {
    %c0_i32 = arith.constant 0 : i32
    %c0_i32_0 = arith.constant 0 : i32
    %c0_i32_1 = arith.constant 0 : i32
    return %c0_i32, %c0_i32_0 : i32, i32
  }
  func.func @transform_2(%arg0: i32, %arg1: i32) -> (i32, i32) {
    %c0_i32 = arith.constant 0 : i32
    %c0_i32_0 = arith.constant 0 : i32
    %c0_i32_1 = arith.constant 0 : i32
    return %c0_i32, %c0_i32_0 : i32, i32
  }
  func.func @transform_3(%arg0: i32, %arg1: i32) -> (i32, i32) {
    %c0_i32 = arith.constant 0 : i32
    %c0_i32_0 = arith.constant 0 : i32
    %c0_i32_1 = arith.constant 0 : i32
    return %c0_i32, %c0_i32_0 : i32, i32
  }
  func.func @transform_4(%arg0: i32, %arg1: i32) -> (i32, i32) {
    %c0_i32 = arith.constant 0 : i32
    %c0_i32_0 = arith.constant 0 : i32
    %c0_i32_1 = arith.constant 0 : i32
    return %c0_i32, %c0_i32_0 : i32, i32
  }
  func.func @transform_5(%arg0: i32, %arg1: i32) -> (i32, i32, i32) {
    %c0_i32 = arith.constant 0 : i32
    %c0_i32_0 = arith.constant 0 : i32
    %c0_i32_1 = arith.constant 0 : i32
    return %arg0, %c0_i32, %c0_i32_0 : i32, i32, i32
  }
}

</mosaic_0001>

<llo_original>
// kernel: new_efficient2_forward.1
$region0: #{new_efficient2_forward.1}
  #allocation0 [shape = 'u32[]', space=smem, size = 0x4, offset = 0x4, fixed_abs, tag = 'smem constant byte address 0x4 - core index']
  #allocation1 [shape = 'u32[144,128]{1,0:T(1,128)}', space=vmem, size = 0x12000, scoped, tag = 'internal scratch']
  %s0 = inlined_call_operand.vmem [shape: bf16[2,256,32], index: 0, kind: input, shape index: {}]
  %s1 = inlined_call_operand.vmem [shape: bf16[32,64], index: 1, kind: input, shape index: {}]
  %s2 = inlined_call_operand.vmem [shape: f32[1,64], index: 2, kind: input, shape index: {}]
  %s3 = inlined_call_operand.vmem [shape: bf16[64,2048], index: 3, kind: input, shape index: {}]
  %s4 = inlined_call_operand.vmem [shape: f32[1,2048], index: 4, kind: input, shape index: {}]
  %s5 = inlined_call_operand.vmem [shape: f32[2,1,2048], index: 5, kind: output, shape index: {}]
  %s6 = sld [smem:[#allocation0]]
  $region61: #{new_efficient2_forward.1} parent=0
    _
  %s8 = ssub.s32 1, %s6
  %s9 = scalar_select 0, %s8, %s6
  loop: start=0, step=1, limit=4
  $region2: #{new_efficient2_forward.1} parent=0 // loop_pre_header
    _
  $region3: #{new_efficient2_forward.1} parent=0 // loop_header
    %s11 = sphi 0, %s15
    %p12 = scmp.ge.s32.totalorder %s11, 4
    %s18 = sphi 0, %s30
    %s19 = sphi 0, %s26
    %s20 = sphi 0, %s18
    %s21 = sphi 0, %s19
    %s22 = sphi 0, %s20
    %s23 = sphi 0, %s21
    %s35 = sphi 0, %s37
    %s38 = sphi 0, %s35
    %s39 = sphi 0, %s38
    %s55 = sphi 0, %s39
    %s59 = sphi 0, %s59
    %s61 = sphi 0, %s59
    %s62 = sphi 0, %s61
    %s76 = sphi 0, %s62
    %s80 = sphi 0, %s80
    %s82 = sphi 0, %s80
    %s83 = sphi 0, %s82
    %s97 = sphi 0, %s83
    %s101 = sphi 0, %s101
    %s103 = sphi 0, %s101
    %s104 = sphi 0, %s103
    %s118 = sphi 0, %s104
    %s122 = sphi 0, %s122
    %s124 = sphi 0, %s122
    %s125 = sphi 0, %s124
    %s139 = sphi 0, %s125
    %s145 = sphi 0, %s147
    %s148 = sphi 0, %s145
    %s149 = sphi 0, %s148
    %s165 = sphi 0, %s149
  $region4: #{new_efficient2_forward.1} parent=0 // loop_header_branch
    %14 = sbr.rel (%p12) target = $region8
  $region5: #{new_efficient2_forward.1} parent=0 // loop_body
    %s16 = ssub.s32 %s11, 1
    %s17 = ssub.s32 %s11, 2
    %s24 = sadd.s32 1, %s19
    %p25 = scmp.ge.s32.totalorder %s24, 1
    %s26 = scalar_select %p25, 0, %s24
    %s27 = sadd.s32 1, %s18
    %s28 = scalar_select %p25, %s27, %s18
    %p29 = scmp.ge.s32.totalorder %s28, 2
    %s30 = scalar_select %p29, 0, %s28
    %s31 = ssub.s32 %s18, %s30
    %s32 = ssub.s32 %s19, %s26
    %s33 = sor.u32 %s31, %s32
    %p34 = scmp.eq.s32.totalorder %s33, 0
    %s36 = sadd.s32 %s35, 1
    %s37 = scalar_select %p34, %s35, %s36
    %p40 = pneg %p34
    %p41 = scmp.eq.s32.totalorder %s11, 1
    %p42 = por %p40, %p41
    %p43 = scmp.ne.s32.totalorder %s35, %s38
    %p44 = scmp.eq.s32.totalorder %s11, 0
    %p45 = por %p43, %p44
    %p46 = scmp.ne.s32.totalorder %s35, %s38
    %p47 = scmp.eq.s32.totalorder %s16, 1
    %p48 = por %p46, %p47
    %p49 = scmp.ne.s32.totalorder %s38, %s39
    %p50 = scmp.eq.s32.totalorder %s16, 0
    %p51 = por %p49, %p50
    %p52 = scmp.ne.s32.totalorder %s38, %s39
    %p53 = scmp.eq.s32.totalorder %s17, 1
    %p54 = por %p52, %p53
    %p56 = scmp.ne.s32.totalorder %s39, %s55
    %p57 = scmp.eq.s32.totalorder %s17, 0
    %p58 = por %p56, %p57
    %s60 = sadd.s32 %s59, 1
    %p63 = scmp.eq.s32.totalorder %s11, 1
    %p64 = scmp.ne.s32.totalorder %s59, %s61
    %p65 = scmp.eq.s32.totalorder %s11, 0
    %p66 = por %p64, %p65
    %p67 = scmp.ne.s32.totalorder %s59, %s61
    %p68 = scmp.eq.s32.totalorder %s16, 1
    %p69 = por %p67, %p68
    %p70 = scmp.ne.s32.totalorder %s61, %s62
    %p71 = scmp.eq.s32.totalorder %s16, 0
    %p72 = por %p70, %p71
    %p73 = scmp.ne.s32.totalorder %s61, %s62
    %p74 = scmp.eq.s32.totalorder %s17, 1
    %p75 = por %p73, %p74
    %p77 = scmp.ne.s32.totalorder %s62, %s76
    %p78 = scmp.eq.s32.totalorder %s17, 0
    %p79 = por %p77, %p78
    %s81 = sadd.s32 %s80, 1
    %p84 = scmp.eq.s32.totalorder %s11, 1
    %p85 = scmp.ne.s32.totalorder %s80, %s82
    %p86 = scmp.eq.s32.totalorder %s11, 0
    %p87 = por %p85, %p86
    %p88 = scmp.ne.s32.totalorder %s80, %s82
    %p89 = scmp.eq.s32.totalorder %s16, 1
    %p90 = por %p88, %p89
    %p91 = scmp.ne.s32.totalorder %s82, %s83
    %p92 = scmp.eq.s32.totalorder %s16, 0
    %p93 = por %p91, %p92
    %p94 = scmp.ne.s32.totalorder %s82, %s83
    %p95 = scmp.eq.s32.totalorder %s17, 1
    %p96 = por %p94, %p95
    %p98 = scmp.ne.s32.totalorder %s83, %s97
    %p99 = scmp.eq.s32.totalorder %s17, 0
    %p100 = por %p98, %p99
    %s102 = sadd.s32 %s101, 1
    %p105 = scmp.eq.s32.totalorder %s11, 1
    %p106 = scmp.ne.s32.totalorder %s101, %s103
    %p107 = scmp.eq.s32.totalorder %s11, 0
    %p108 = por %p106, %p107
    %p109 = scmp.ne.s32.totalorder %s101, %s103
    %p110 = scmp.eq.s32.totalorder %s16, 1
    %p111 = por %p109, %p110
    %p112 = scmp.ne.s32.totalorder %s103, %s104
    %p113 = scmp.eq.s32.totalorder %s16, 0
    %p114 = por %p112, %p113
    %p115 = scmp.ne.s32.totalorder %s103, %s104
    %p116 = scmp.eq.s32.totalorder %s17, 1
    %p117 = por %p115, %p116
    %p119 = scmp.ne.s32.totalorder %s104, %s118
    %p120 = scmp.eq.s32.totalorder %s17, 0
    %p121 = por %p119, %p120
    %s123 = sadd.s32 %s122, 1
    %p126 = scmp.eq.s32.totalorder %s11, 1
    %p127 = scmp.ne.s32.totalorder %s122, %s124
    %p128 = scmp.eq.s32.totalorder %s11, 0
    %p129 = por %p127, %p128
    %p130 = scmp.ne.s32.totalorder %s122, %s124
    %p131 = scmp.eq.s32.totalorder %s16, 1
    %p132 = por %p130, %p131
    %p133 = scmp.ne.s32.totalorder %s124, %s125
    %p134 = scmp.eq.s32.totalorder %s16, 0
    %p135 = por %p133, %p134
    %p136 = scmp.ne.s32.totalorder %s124, %s125
    %p137 = scmp.eq.s32.totalorder %s17, 1
    %p138 = por %p136, %p137
    %p140 = scmp.ne.s32.totalorder %s125, %s139
    %p141 = scmp.eq.s32.totalorder %s17, 0
    %p142 = por %p140, %p141
    %s143 = ssub.s32 %s18, %s30
    %p144 = scmp.eq.s32.totalorder %s143, 0
    %s146 = sadd.s32 %s145, 1
    %s147 = scalar_select %p144, %s145, %s146
    %p150 = pneg %p144
    %p151 = scmp.eq.s32.totalorder %s11, 1
    %p152 = por %p150, %p151
    %p153 = scmp.ne.s32.totalorder %s145, %s148
    %p154 = scmp.eq.s32.totalorder %s11, 0
    %p155 = por %p153, %p154
    %p156 = scmp.ne.s32.totalorder %s145, %s148
    %p157 = scmp.eq.s32.totalorder %s16, 1
    %p158 = por %p156, %p157
    %p159 = scmp.ne.s32.totalorder %s148, %s149
    %p160 = scmp.eq.s32.totalorder %s16, 0
    %p161 = por %p159, %p160
    %p162 = scmp.ne.s32.totalorder %s148, %s149
    %p163 = scmp.eq.s32.totalorder %s17, 1
    %p164 = por %p162, %p163
    %p166 = scmp.ne.s32.totalorder %s149, %s165
    %p167 = scmp.eq.s32.totalorder %s17, 0
    %p168 = por %p166, %p167
    %p169 = scmp.le.s32.totalorder 1, %s11
    %p170 = scmp.lt.s32.totalorder %s11, 3
    %p171 = pnand %p169, %p170
    %p172 = pneg %p171
    // Predicated region
    $region9: #{new_efficient2_forward.1} parent=5 // pred_check
      _
    $region10: #{new_efficient2_forward.1} parent=5 // pred_check_branch
      %174 = sbr.rel (%p171) target = $region12
    $region11: #{new_efficient2_forward.1} parent=5 // pred_region
      %s175 = ssub.s32 %s11, 1
      // Predicated region
      $region13: #{new_efficient2_forward.1} parent=11 // pred_check
        %p176 = pneg %p72
      $region14: #{new_efficient2_forward.1} parent=11 // pred_check_branch
        %178 = sbr.rel (%p176) target = $region16
      $region15: #{new_efficient2_forward.1} parent=11 // pred_region
        _
      $region16: #{new_efficient2_forward.1} parent=11 // pred_fallthru
        _
      // Predicated region
      $region17: #{new_efficient2_forward.1} parent=11 // pred_check
        %p179 = pneg %p93
      $region18: #{new_efficient2_forward.1} parent=11 // pred_check_branch
        %181 = sbr.rel (%p179) target = $region20
      $region19: #{new_efficient2_forward.1} parent=11 // pred_region
        _
      $region20: #{new_efficient2_forward.1} parent=11 // pred_fallthru
        _
      // Predicated region
      $region21: #{new_efficient2_forward.1} parent=11 // pred_check
        %p182 = pneg %p114
      $region22: #{new_efficient2_forward.1} parent=11 // pred_check_branch
        %184 = sbr.rel (%p182) target = $region24
      $region23: #{new_efficient2_forward.1} parent=11 // pred_region
        _
      $region24: #{new_efficient2_forward.1} parent=11 // pred_fallthru
        _
      // Predicated region
      $region25: #{new_efficient2_forward.1} parent=11 // pred_check
        %p185 = pneg %p135
      $region26: #{new_efficient2_forward.1} parent=11 // pred_check_branch
        %187 = sbr.rel (%p185) target = $region28
      $region27: #{new_efficient2_forward.1} parent=11 // pred_region
        _
      $region28: #{new_efficient2_forward.1} parent=11 // pred_fallthru
        _
    $region12: #{new_efficient2_forward.1} parent=5 // pred_fallthru
      _
    %p188 = scmp.lt.s32.totalorder %s11, 2
    // Predicated region
    $region29: #{new_efficient2_forward.1} parent=5 // pred_check
      %p189 = pneg %p188
    $region30: #{new_efficient2_forward.1} parent=5 // pred_check_branch
      %191 = sbr.rel (%p189) target = $region32
    $region31: #{new_efficient2_forward.1} parent=5 // pred_region
      // Predicated region
      $region33: #{new_efficient2_forward.1} parent=31 // pred_check
        %p192 = pneg %p45
      $region34: #{new_efficient2_forward.1} parent=31 // pred_check_branch
        %194 = sbr.rel (%p192) target = $region36
      $region35: #{new_efficient2_forward.1} parent=31 // pred_region
        %s195 = smul.u32 32, %s19
        %p196 = scmp.lt.s32.totalorder %s18, 1
        %s197 = scalar_select %p196, %s18, 1
        %p198 = scmp.lt.s32.totalorder %s195, 31
        %s199 = scalar_select %p198, %s195, 31
        %s200 = smul.addr %s197, 32
        %s201 = sadd.s32 %s199, %s200
        %s202 = smul.addr %s201, 4
        %s203 = scalar_lea.vmem %s0, %s202
        %s204 = smul.u32 32, %s19
      $region36: #{new_efficient2_forward.1} parent=31 // pred_fallthru
        _
    $region32: #{new_efficient2_forward.1} parent=5 // pred_fallthru
      _
    %p205 = scmp.le.s32.totalorder 1, %s11
    %p206 = scmp.lt.s32.totalorder %s11, 3
    %p207 = pnand %p205, %p206
    %p208 = pneg %p207
    // Predicated region
    $region37: #{new_efficient2_forward.1} parent=5 // pred_check
      _
    $region38: #{new_efficient2_forward.1} parent=5 // pred_check_branch
      %210 = sbr.rel (%p207) target = $region40
    $region39: #{new_efficient2_forward.1} parent=5 // pred_region
      %s211 = ssub.s32 %s11, 1
      %s212 = smul.u32 32, %s21
      %p213 = scmp.lt.s32.totalorder %s20, 1
      %s214 = scalar_select %p213, %s20, 1
      %p215 = scmp.lt.s32.totalorder %s212, 31
      %s216 = scalar_select %p215, %s212, 31
      %s217 = smul.addr %s214, 32
      %s218 = sadd.s32 %s216, %s217
      %s219 = smul.addr %s218, 4
      %s220 = scalar_lea.vmem %s0, %s219
      %p221 = pneg %p51
      %p222 = pneg %p48
      %p223 = pneg %p72
      %p224 = pneg %p69
      %p225 = pneg %p93
      %p226 = pneg %p90
      %p227 = pneg %p114
      %p228 = pneg %p111
      %p229 = pneg %p135
      %p230 = pneg %p132
      %p231 = pneg %p161
      %p232 = pneg %p158
      %p233 = scmp.lt.s32.totalorder %s20, 1
      %s234 = scalar_select %p233, %s20, 1
      %s235 = smul.addr %s234, 16
      %s236 = scalar_lea.vmem %s5, %s235
      %s237 = smul.u32 32, %s21
      %p238 = scmp.lt.s32.totalorder %s20, 1
      %s239 = scalar_select %p238, %s20, 1
      %p240 = scmp.lt.s32.totalorder %s237, 31
      %s241 = scalar_select %p240, %s237, 31
      %s242 = smul.addr %s239, 32
      %s243 = sadd.s32 %s241, %s242
      %s244 = smul.addr %s243, 4
      %s245 = scalar_lea.vmem %s0, %s244
      %s246 = smul.u32 32, %s21
      %p247 = scmp.lt.s32.totalorder %s20, 1
      %s248 = scalar_select %p247, %s20, 1
      %s249 = smul.addr %s248, 16
      %s250 = scalar_lea.vmem %s5, %s249
      %p252 = scmp.eq.s32.totalorder %s21, 0
      // Predicated region
      $region41: #{new_efficient2_forward.1} parent=39 // pred_check
        %p253 = pneg %p252
      $region42: #{new_efficient2_forward.1} parent=39 // pred_check_branch
        %255 = sbr.rel (%p253) target = $region44
      $region43: #{new_efficient2_forward.1} parent=39 // pred_region
        %256 = vst [vmem:[%s250] sm:$0xff] 0.0
        %257 = vst [vmem:[%s250 + $0x8] sm:$0xff] 0.0
      $region44: #{new_efficient2_forward.1} parent=39 // pred_fallthru
        _
      %v258 = vld [vmem:[%s245] sm:$0xf]
      %v259 = vld [vmem:[%s245 + $0x4] sm:$0xf]
      %v260 = vld [vmem:[%s245 + $0x8] sm:$0xf]
      %v261 = vld [vmem:[%s245 + $0xc] sm:$0xf]
      %v262 = vld [vmem:[%s245 + $0x10] sm:$0xf]
      %v263 = vld [vmem:[%s245 + $0x14] sm:$0xf]
      %v264 = vld [vmem:[%s245 + $0x18] sm:$0xf]
      %v265 = vld [vmem:[%s245 + $0x1c] sm:$0xf]
      %v266 = vld [vmem:[%s245 + $0x20] sm:$0xf]
      %v267 = vld [vmem:[%s245 + $0x24] sm:$0xf]
      %v268 = vld [vmem:[%s245 + $0x28] sm:$0xf]
      %v269 = vld [vmem:[%s245 + $0x2c] sm:$0xf]
      %v270 = vld [vmem:[%s245 + $0x30] sm:$0xf]
      %v271 = vld [vmem:[%s245 + $0x34] sm:$0xf]
      %v272 = vld [vmem:[%s245 + $0x38] sm:$0xf]
      %v273 = vld [vmem:[%s245 + $0x3c] sm:$0xf]
      %v274 = vld [vmem:[%s245 + $0x40] sm:$0xf]
      %v275 = vld [vmem:[%s245 + $0x44] sm:$0xf]
      %v276 = vld [vmem:[%s245 + $0x48] sm:$0xf]
      %v277 = vld [vmem:[%s245 + $0x4c] sm:$0xf]
      %v278 = vld [vmem:[%s245 + $0x50] sm:$0xf]
      %v279 = vld [vmem:[%s245 + $0x54] sm:$0xf]
      %v280 = vld [vmem:[%s245 + $0x58] sm:$0xf]
      %v281 = vld [vmem:[%s245 + $0x5c] sm:$0xf]
      %v282 = vld [vmem:[%s245 + $0x60] sm:$0xf]
      %v283 = vld [vmem:[%s245 + $0x64] sm:$0xf]
      %v284 = vld [vmem:[%s245 + $0x68] sm:$0xf]
      %v285 = vld [vmem:[%s245 + $0x6c] sm:$0xf]
      %v286 = vld [vmem:[%s245 + $0x70] sm:$0xf]
      %v287 = vld [vmem:[%s245 + $0x74] sm:$0xf]
      %v288 = vld [vmem:[%s245 + $0x78] sm:$0xf]
      %v289 = vld [vmem:[%s245 + $0x7c] sm:$0xf]
      %v290 = vld [vmem:[%s1] sm:$0xf]
      %v291 = vld [vmem:[%s1 + $0x4] sm:$0xf]
      %v292 = vld [vmem:[%s1 + $0x8] sm:$0xf]
      %v293 = vld [vmem:[%s1 + $0xc] sm:$0xf]
      %v294 = vld [vmem:[%s2] sm:$0x1]
      %v296 = vlaneseq
      %v297 = vshrl.u32 %v296, 7
      %v298 = vsub.s32 0, %v297
      %v299 = vrot.slane %v294, %v298
      %v333 = vunpack.c.l.b16 %v258
      %v334 = vunpack.c.l.b16 %v259
      %v335 = vunpack.c.l.b16 %v260
      %v336 = vunpack.c.l.b16 %v261
      %v337 = vunpack.c.l.b16 %v262
      %v338 = vunpack.c.l.b16 %v263
      %v339 = vunpack.c.l.b16 %v264
      %v340 = vunpack.c.l.b16 %v265
      %v341 = vunpack.c.l.b16 %v266
      %v342 = vunpack.c.l.b16 %v267
      %v343 = vunpack.c.l.b16 %v268
      %v344 = vunpack.c.l.b16 %v269
      %v345 = vunpack.c.l.b16 %v270
      %v346 = vunpack.c.l.b16 %v271
      %v347 = vunpack.c.l.b16 %v272
      %v348 = vunpack.c.l.b16 %v273
      %v349 = vunpack.c.l.b16 %v274
      %v350 = vunpack.c.l.b16 %v275
      %v351 = vunpack.c.l.b16 %v276
      %v352 = vunpack.c.l.b16 %v277
      %v353 = vunpack.c.l.b16 %v278
      %v354 = vunpack.c.l.b16 %v279
      %v355 = vunpack.c.l.b16 %v280
      %v356 = vunpack.c.l.b16 %v281
      %v357 = vunpack.c.l.b16 %v282
      %v358 = vunpack.c.l.b16 %v283
      %v359 = vunpack.c.l.b16 %v284
      %v360 = vunpack.c.l.b16 %v285
      %v361 = vunpack.c.l.b16 %v286
      %v362 = vunpack.c.l.b16 %v287
      %v363 = vunpack.c.l.b16 %v288
      %v364 = vunpack.c.l.b16 %v289
      %v365 = vpack.c.b16 %v334, %v333
      %v366 = vpack.c.b16 %v336, %v335
      %v367 = vpack.c.b16 %v338, %v337
      %v368 = vpack.c.b16 %v340, %v339
      %v369 = vpack.c.b16 %v342, %v341
      %v370 = vpack.c.b16 %v344, %v343
      %v371 = vpack.c.b16 %v346, %v345
      %v372 = vpack.c.b16 %v348, %v347
      %v373 = vpack.c.b16 %v350, %v349
      %v374 = vpack.c.b16 %v352, %v351
      %v375 = vpack.c.b16 %v354, %v353
      %v376 = vpack.c.b16 %v356, %v355
      %v377 = vpack.c.b16 %v358, %v357
      %v378 = vpack.c.b16 %v360, %v359
      %v379 = vpack.c.b16 %v362, %v361
      %v380 = vpack.c.b16 %v364, %v363
      %v385 = vunpack.c.l.b16 %v290
      %v386 = vunpack.c.l.b16 %v291
      %v387 = vunpack.c.l.b16 %v292
      %v388 = vunpack.c.l.b16 %v293
      %v389 = vpack.c.b16 %v386, %v385
      %v390 = vpack.c.b16 %v388, %v387
      %vm393 = vcmask 261120
      %v395 = vsel %vm393, %v365, 0
      %v398 = vsel %vm393, %v366, 0
      %v401 = vsel %vm393, %v367, 0
      %v404 = vsel %vm393, %v368, 0
      %v407 = vsel %vm393, %v369, 0
      %v410 = vsel %vm393, %v370, 0
      %v413 = vsel %vm393, %v371, 0
      %v416 = vsel %vm393, %v372, 0
      %v419 = vsel %vm393, %v373, 0
      %v422 = vsel %vm393, %v374, 0
      %v425 = vsel %vm393, %v375, 0
      %v428 = vsel %vm393, %v376, 0
      %v431 = vsel %vm393, %v377, 0
      %v434 = vsel %vm393, %v378, 0
      %v437 = vsel %vm393, %v379, 0
      %v440 = vsel %vm393, %v380, 0
      %442 = vmatprep.subr.bf16.mxu0 0
      %443 = vmatpush1.bf16.msra.mxu0 0
      %444 = vmatprep.subr.bf16.mxu0 0
      %445 = vmatpush1.bf16.msra.mxu0 0
      %446 = vmatprep.subr.bf16.mxu0 0
      %447 = vmatpush1.bf16.msra.mxu0 0
      %448 = vmatprep.subr.bf16.mxu0 0
      %449 = vmatpush1.bf16.msra.mxu0 0
      %450 = vmatprep.subr.bf16.mxu0 0
      %451 = vmatpush1.bf16.msra.mxu0 0
      %452 = vmatprep.subr.bf16.mxu0 0
      %453 = vmatpush1.bf16.msra.mxu0 0
      %454 = vmatprep.subr.bf16.mxu0 0
      %455 = vmatpush1.bf16.msra.mxu0 %v390
      %456 = vmatprep.subr.bf16.mxu0 0
      %457 = vmatpush1.bf16.msra.mxu0 %v389
      %458 = vmatprep.subr.bf16.mxu0 0
      %459 = vmatpush2.bf16.msra.mxu0 0
      %460 = vmatprep.subr.bf16.mxu0 0
      %461 = vmatpush2.bf16.msra.mxu0 0
      %462 = vmatprep.subr.bf16.mxu0 0
      %463 = vmatpush2.bf16.msra.mxu0 0
      %464 = vmatprep.subr.bf16.mxu0 0
      %465 = vmatpush2.bf16.msra.mxu0 0
      %466 = vmatprep.subr.bf16.mxu0 0
      %467 = vmatpush2.bf16.msra.mxu0 0
      %468 = vmatprep.subr.bf16.mxu0 0
      %469 = vmatpush2.bf16.msra.mxu0 0
      %470 = vmatprep.subr.bf16.mxu0 0
      %471 = vmatpush2.bf16.msra.mxu0 0
      %472 = vmatprep.subr.bf16.mxu0 0
      %473 = vmatpush2.bf16.msra.mxu0 0
      %474 = vmatprep.mubr.bf16.mxu0 0
      %475 = vmatmul.mubr.bf16.gmra.mxu0 %v395
      %v476 = vpop.f32.mrf.mxu0
      %v477 = vadd.f32 %v299, %v476
      %v478 = vpop.f32.mrf.mxu0
      %v479 = vpop.f32.mrf.mxu0
      %v480 = vadd.f32 %v299, %v479
      %v481 = vpop.f32.mrf.mxu0
      %482 = vmatprep.mubr.bf16.mxu0 0
      %483 = vmatmul.mubr.bf16.gmra.mxu0 %v398
      %v484 = vpop.f32.mrf.mxu0
      %v485 = vadd.f32 %v299, %v484
      %v486 = vpop.f32.mrf.mxu0
      %v487 = vpop.f32.mrf.mxu0
      %v488 = vadd.f32 %v299, %v487
      %v489 = vpop.f32.mrf.mxu0
      %490 = vmatprep.mubr.bf16.mxu0 0
      %491 = vmatmul.mubr.bf16.gmra.mxu0 %v401
      %v492 = vpop.f32.mrf.mxu0
      %v493 = vadd.f32 %v299, %v492
      %v494 = vpop.f32.mrf.mxu0
      %v495 = vpop.f32.mrf.mxu0
      %v496 = vadd.f32 %v299, %v495
      %v497 = vpop.f32.mrf.mxu0
      %498 = vmatprep.mubr.bf16.mxu0 0
      %499 = vmatmul.mubr.bf16.gmra.mxu0 %v404
      %v500 = vpop.f32.mrf.mxu0
      %v501 = vadd.f32 %v299, %v500
      %v502 = vpop.f32.mrf.mxu0
      %v503 = vpop.f32.mrf.mxu0
      %v504 = vadd.f32 %v299, %v503
      %v505 = vpop.f32.mrf.mxu0
      %506 = vmatprep.mubr.bf16.mxu0 0
      %507 = vmatmul.mubr.bf16.gmra.mxu0 %v407
      %v508 = vpop.f32.mrf.mxu0
      %v509 = vadd.f32 %v299, %v508
      %v510 = vpop.f32.mrf.mxu0
      %v511 = vpop.f32.mrf.mxu0
      %v512 = vadd.f32 %v299, %v511
      %v513 = vpop.f32.mrf.mxu0
      %514 = vmatprep.mubr.bf16.mxu0 0
      %515 = vmatmul.mubr.bf16.gmra.mxu0 %v410
      %v516 = vpop.f32.mrf.mxu0
      %v517 = vadd.f32 %v299, %v516
      %v518 = vpop.f32.mrf.mxu0
      %v519 = vpop.f32.mrf.mxu0
      %v520 = vadd.f32 %v299, %v519
      %v521 = vpop.f32.mrf.mxu0
      %522 = vmatprep.mubr.bf16.mxu0 0
      %523 = vmatmul.mubr.bf16.gmra.mxu0 %v413
      %v524 = vpop.f32.mrf.mxu0
      %v525 = vadd.f32 %v299, %v524
      %v526 = vpop.f32.mrf.mxu0
      %v527 = vpop.f32.mrf.mxu0
      %v528 = vadd.f32 %v299, %v527
      %v529 = vpop.f32.mrf.mxu0
      %530 = vmatprep.mubr.bf16.mxu0 0
      %531 = vmatmul.mubr.bf16.gmra.mxu0 %v416
      %v532 = vpop.f32.mrf.mxu0
      %v533 = vadd.f32 %v299, %v532
      %v534 = vpop.f32.mrf.mxu0
      %v535 = vpop.f32.mrf.mxu0
      %v536 = vadd.f32 %v299, %v535
      %v537 = vpop.f32.mrf.mxu0
      %538 = vmatprep.mubr.bf16.mxu0 0
      %539 = vmatmul.mubr.bf16.gmra.mxu0 %v419
      %v540 = vpop.f32.mrf.mxu0
      %v541 = vadd.f32 %v299, %v540
      %v542 = vpop.f32.mrf.mxu0
      %v543 = vpop.f32.mrf.mxu0
      %v544 = vadd.f32 %v299, %v543
      %v545 = vpop.f32.mrf.mxu0
      %546 = vmatprep.mubr.bf16.mxu0 0
      %547 = vmatmul.mubr.bf16.gmra.mxu0 %v422
      %v548 = vpop.f32.mrf.mxu0
      %v549 = vadd.f32 %v299, %v548
      %v550 = vpop.f32.mrf.mxu0
      %v551 = vpop.f32.mrf.mxu0
      %v552 = vadd.f32 %v299, %v551
      %v553 = vpop.f32.mrf.mxu0
      %554 = vmatprep.mubr.bf16.mxu0 0
      %555 = vmatmul.mubr.bf16.gmra.mxu0 %v425
      %v556 = vpop.f32.mrf.mxu0
      %v557 = vadd.f32 %v299, %v556
      %v558 = vpop.f32.mrf.mxu0
      %v559 = vpop.f32.mrf.mxu0
      %v560 = vadd.f32 %v299, %v559
      %v561 = vpop.f32.mrf.mxu0
      %562 = vmatprep.mubr.bf16.mxu0 0
      %563 = vmatmul.mubr.bf16.gmra.mxu0 %v428
      %v564 = vpop.f32.mrf.mxu0
      %v565 = vadd.f32 %v299, %v564
      %v566 = vpop.f32.mrf.mxu0
      %v567 = vpop.f32.mrf.mxu0
      %v568 = vadd.f32 %v299, %v567
      %v569 = vpop.f32.mrf.mxu0
      %570 = vmatprep.mubr.bf16.mxu0 0
      %571 = vmatmul.mubr.bf16.gmra.mxu0 %v431
      %v572 = vpop.f32.mrf.mxu0
      %v573 = vadd.f32 %v299, %v572
      %v574 = vpop.f32.mrf.mxu0
      %v575 = vpop.f32.mrf.mxu0
      %v576 = vadd.f32 %v299, %v575
      %v577 = vpop.f32.mrf.mxu0
      %578 = vmatprep.mubr.bf16.mxu0 0
      %579 = vmatmul.mubr.bf16.gmra.mxu0 %v434
      %v580 = vpop.f32.mrf.mxu0
      %v581 = vadd.f32 %v299, %v580
      %v582 = vpop.f32.mrf.mxu0
      %v583 = vpop.f32.mrf.mxu0
      %v584 = vadd.f32 %v299, %v583
      %v585 = vpop.f32.mrf.mxu0
      %586 = vmatprep.mubr.bf16.mxu0 0
      %587 = vmatmul.mubr.bf16.gmra.mxu0 %v437
      %v588 = vpop.f32.mrf.mxu0
      %v589 = vadd.f32 %v299, %v588
      %v590 = vpop.f32.mrf.mxu0
      %v591 = vpop.f32.mrf.mxu0
      %v592 = vadd.f32 %v299, %v591
      %v593 = vpop.f32.mrf.mxu0
      %594 = vmatprep.mubr.bf16.mxu0 0
      %595 = vmatmul.mubr.bf16.gmra.mxu0 %v440
      %v596 = vpop.f32.mrf.mxu0
      %v597 = vadd.f32 %v299, %v596
      %v598 = vpop.f32.mrf.mxu0
      %v599 = vpop.f32.mrf.mxu0
      %v600 = vadd.f32 %v299, %v599
      %v601 = vpop.f32.mrf.mxu0
      %602 = vdwg.mxu0
      %v603 = vsub.f32 0.0, %v477
      %v604 = vsub.f32 0.0, %v480
      %v605 = vsub.f32 0.0, %v485
      %v606 = vsub.f32 0.0, %v488
      %v607 = vsub.f32 0.0, %v493
      %v608 = vsub.f32 0.0, %v496
      %v609 = vsub.f32 0.0, %v501
      %v610 = vsub.f32 0.0, %v504
      %v611 = vsub.f32 0.0, %v509
      %v612 = vsub.f32 0.0, %v512
      %v613 = vsub.f32 0.0, %v517
      %v614 = vsub.f32 0.0, %v520
      %v615 = vsub.f32 0.0, %v525
      %v616 = vsub.f32 0.0, %v528
      %v617 = vsub.f32 0.0, %v533
      %v618 = vsub.f32 0.0, %v536
      %v619 = vsub.f32 0.0, %v541
      %v620 = vsub.f32 0.0, %v544
      %v621 = vsub.f32 0.0, %v549
      %v622 = vsub.f32 0.0, %v552
      %v623 = vsub.f32 0.0, %v557
      %v624 = vsub.f32 0.0, %v560
      %v625 = vsub.f32 0.0, %v565
      %v626 = vsub.f32 0.0, %v568
      %v627 = vsub.f32 0.0, %v573
      %v628 = vsub.f32 0.0, %v576
      %v629 = vsub.f32 0.0, %v581
      %v630 = vsub.f32 0.0, %v584
      %v631 = vsub.f32 0.0, %v589
      %v632 = vsub.f32 0.0, %v592
      %v633 = vsub.f32 0.0, %v597
      %v634 = vsub.f32 0.0, %v600
      %v635 = vmul.f32 %v603, 1.442695
      %v636 = vpow.pop %v635
      %v637 = vmul.f32 %v604, 1.442695
      %v638 = vpow.pop %v637
      %v639 = vmul.f32 %v605, 1.442695
      %v640 = vpow.pop %v639
      %v641 = vmul.f32 %v606, 1.442695
      %v642 = vpow.pop %v641
      %v643 = vmul.f32 %v607, 1.442695
      %v644 = vpow.pop %v643
      %v645 = vmul.f32 %v608, 1.442695
      %v646 = vpow.pop %v645
      %v647 = vmul.f32 %v609, 1.442695
      %v648 = vpow.pop %v647
      %v649 = vmul.f32 %v610, 1.442695
      %v650 = vpow.pop %v649
      %v651 = vmul.f32 %v611, 1.442695
      %v652 = vpow.pop %v651
      %v653 = vmul.f32 %v612, 1.442695
      %v654 = vpow.pop %v653
      %v655 = vmul.f32 %v613, 1.442695
      %v656 = vpow.pop %v655
      %v657 = vmul.f32 %v614, 1.442695
      %v658 = vpow.pop %v657
      %v659 = vmul.f32 %v615, 1.442695
      %v660 = vpow.pop %v659
      %v661 = vmul.f32 %v616, 1.442695
      %v662 = vpow.pop %v661
      %v663 = vmul.f32 %v617, 1.442695
      %v664 = vpow.pop %v663
      %v665 = vmul.f32 %v618, 1.442695
      %v666 = vpow.pop %v665
      %v667 = vmul.f32 %v619, 1.442695
      %v668 = vpow.pop %v667
      %v669 = vmul.f32 %v620, 1.442695
      %v670 = vpow.pop %v669
      %v671 = vmul.f32 %v621, 1.442695
      %v672 = vpow.pop %v671
      %v673 = vmul.f32 %v622, 1.442695
      %v674 = vpow.pop %v673
      %v675 = vmul.f32 %v623, 1.442695
      %v676 = vpow.pop %v675
      %v677 = vmul.f32 %v624, 1.442695
      %v678 = vpow.pop %v677
      %v679 = vmul.f32 %v625, 1.442695
      %v680 = vpow.pop %v679
      %v681 = vmul.f32 %v626, 1.442695
      %v682 = vpow.pop %v681
      %v683 = vmul.f32 %v627, 1.442695
      %v684 = vpow.pop %v683
      %v685 = vmul.f32 %v628, 1.442695
      %v686 = vpow.pop %v685
      %v687 = vmul.f32 %v629, 1.442695
      %v688 = vpow.pop %v687
      %v689 = vmul.f32 %v630, 1.442695
      %v690 = vpow.pop %v689
      %v691 = vmul.f32 %v631, 1.442695
      %v692 = vpow.pop %v691
      %v693 = vmul.f32 %v632, 1.442695
      %v694 = vpow.pop %v693
      %v695 = vmul.f32 %v633, 1.442695
      %v696 = vpow.pop %v695
      %v697 = vmul.f32 %v634, 1.442695
      %v698 = vpow.pop %v697
      %v699 = vadd.f32 %v636, 1.0
      %v700 = vadd.f32 %v638, 1.0
      %v701 = vadd.f32 %v640, 1.0
      %v702 = vadd.f32 %v642, 1.0
      %v703 = vadd.f32 %v644, 1.0
      %v704 = vadd.f32 %v646, 1.0
      %v705 = vadd.f32 %v648, 1.0
      %v706 = vadd.f32 %v650, 1.0
      %v707 = vadd.f32 %v652, 1.0
      %v708 = vadd.f32 %v654, 1.0
      %v709 = vadd.f32 %v656, 1.0
      %v710 = vadd.f32 %v658, 1.0
      %v711 = vadd.f32 %v660, 1.0
      %v712 = vadd.f32 %v662, 1.0
      %v713 = vadd.f32 %v664, 1.0
      %v714 = vadd.f32 %v666, 1.0
      %v715 = vadd.f32 %v668, 1.0
      %v716 = vadd.f32 %v670, 1.0
      %v717 = vadd.f32 %v672, 1.0
      %v718 = vadd.f32 %v674, 1.0
      %v719 = vadd.f32 %v676, 1.0
      %v720 = vadd.f32 %v678, 1.0
      %v721 = vadd.f32 %v680, 1.0
      %v722 = vadd.f32 %v682, 1.0
      %v723 = vadd.f32 %v684, 1.0
      %v724 = vadd.f32 %v686, 1.0
      %v725 = vadd.f32 %v688, 1.0
      %v726 = vadd.f32 %v690, 1.0
      %v727 = vadd.f32 %v692, 1.0
      %v728 = vadd.f32 %v694, 1.0
      %v729 = vadd.f32 %v696, 1.0
      %v730 = vadd.f32 %v698, 1.0
      %v731 = vrcp.pop %v699
      %v732 = vrcp.pop %v700
      %v733 = vrcp.pop %v701
      %v734 = vrcp.pop %v702
      %v735 = vrcp.pop %v703
      %v736 = vrcp.pop %v704
      %v737 = vrcp.pop %v705
      %v738 = vrcp.pop %v706
      %v739 = vrcp.pop %v707
      %v740 = vrcp.pop %v708
      %v741 = vrcp.pop %v709
      %v742 = vrcp.pop %v710
      %v743 = vrcp.pop %v711
      %v744 = vrcp.pop %v712
      %v745 = vrcp.pop %v713
      %v746 = vrcp.pop %v714
      %v747 = vrcp.pop %v715
      %v748 = vrcp.pop %v716
      %v749 = vrcp.pop %v717
      %v750 = vrcp.pop %v718
      %v751 = vrcp.pop %v719
      %v752 = vrcp.pop %v720
      %v753 = vrcp.pop %v721
      %v754 = vrcp.pop %v722
      %v755 = vrcp.pop %v723
      %v756 = vrcp.pop %v724
      %v757 = vrcp.pop %v725
      %v758 = vrcp.pop %v726
      %v759 = vrcp.pop %v727
      %v760 = vrcp.pop %v728
      %v761 = vrcp.pop %v729
      %v762 = vrcp.pop %v730
      %v763 = vmul.f32 %v477, %v731
      %v764 = vmul.f32 %v480, %v732
      %v765 = vmul.f32 %v485, %v733
      %v766 = vmul.f32 %v488, %v734
      %v767 = vmul.f32 %v493, %v735
      %v768 = vmul.f32 %v496, %v736
      %v769 = vmul.f32 %v501, %v737
      %v770 = vmul.f32 %v504, %v738
      %v771 = vmul.f32 %v509, %v739
      %v772 = vmul.f32 %v512, %v740
      %v773 = vmul.f32 %v517, %v741
      %v774 = vmul.f32 %v520, %v742
      %v775 = vmul.f32 %v525, %v743
      %v776 = vmul.f32 %v528, %v744
      %v777 = vmul.f32 %v533, %v745
      %v778 = vmul.f32 %v536, %v746
      %v779 = vmul.f32 %v541, %v747
      %v780 = vmul.f32 %v544, %v748
      %v781 = vmul.f32 %v549, %v749
      %v782 = vmul.f32 %v552, %v750
      %v783 = vmul.f32 %v557, %v751
      %v784 = vmul.f32 %v560, %v752
      %v785 = vmul.f32 %v565, %v753
      %v786 = vmul.f32 %v568, %v754
      %v787 = vmul.f32 %v573, %v755
      %v788 = vmul.f32 %v576, %v756
      %v789 = vmul.f32 %v581, %v757
      %v790 = vmul.f32 %v584, %v758
      %v791 = vmul.f32 %v589, %v759
      %v792 = vmul.f32 %v592, %v760
      %v793 = vmul.f32 %v597, %v761
      %v794 = vmul.f32 %v600, %v762
      %v795 = vpack.c.bf16 %v764, %v763
      %v796 = vpack.c.bf16 %v766, %v765
      %v797 = vpack.c.bf16 %v768, %v767
      %v798 = vpack.c.bf16 %v770, %v769
      %v799 = vpack.c.bf16 %v772, %v771
      %v800 = vpack.c.bf16 %v774, %v773
      %v801 = vpack.c.bf16 %v776, %v775
      %v802 = vpack.c.bf16 %v778, %v777
      %v803 = vpack.c.bf16 %v780, %v779
      %v804 = vpack.c.bf16 %v782, %v781
      %v805 = vpack.c.bf16 %v784, %v783
      %v806 = vpack.c.bf16 %v786, %v785
      %v807 = vpack.c.bf16 %v788, %v787
      %v808 = vpack.c.bf16 %v790, %v789
      %v809 = vpack.c.bf16 %v792, %v791
      %v810 = vpack.c.bf16 %v794, %v793
      %s811 = smul.u32 %s21, 256
      %s812 = ssub.s32 256, %s811
      %v813 = vlaneseq
      %v814 = vand.u32 %v813, 127
      %v815 = vadd.s32 %v814, 128
      %v816 = vstv %s812
      %vm817 = vcmp.lt.s32.totalorder %v814, %v816
      %vm818 = vcmp.lt.s32.totalorder %v815, %v816
      %v819 = vsel %vm817, 1.0, 0.0
      %v820 = vsel %vm818, 1.0, 0.0
      %v821 = vld [vmem:[%s3] sm:$0xff]
      %v822 = vld [vmem:[%s3 + $0x8] sm:$0xff]
      %v823 = vld [vmem:[%s3 + $0x40] sm:$0xff]
      %v824 = vld [vmem:[%s3 + $0x48] sm:$0xff]
      %v825 = vld [vmem:[%s3 + $0x80] sm:$0xff]
      %v826 = vld [vmem:[%s3 + $0x88] sm:$0xff]
      %v827 = vld [vmem:[%s3 + $0xc0] sm:$0xff]
      %v828 = vld [vmem:[%s3 + $0xc8] sm:$0xff]
      %v829 = vld [vmem:[%s3 + $0x100] sm:$0xff]
      %v830 = vld [vmem:[%s3 + $0x108] sm:$0xff]
      %v831 = vld [vmem:[%s3 + $0x140] sm:$0xff]
      %v832 = vld [vmem:[%s3 + $0x148] sm:$0xff]
      %v833 = vld [vmem:[%s3 + $0x180] sm:$0xff]
      %v834 = vld [vmem:[%s3 + $0x188] sm:$0xff]
      %v835 = vld [vmem:[%s3 + $0x1c0] sm:$0xff]
      %v836 = vld [vmem:[%s3 + $0x1c8] sm:$0xff]
      %v837 = vld [vmem:[%s4] sm:$0xf]
      %v839 = vlaneseq
      %v840 = vshrl.u32 %v839, 7
      %v841 = vsub.s32 0, %v840
      %v842 = vrot.slane %v837, %v841
      %v843 = vlaneseq
      %v844 = vshrl.u32 %v843, 7
      %v845 = vsub.s32 1, %v844
      %v846 = vrot.slane %v837, %v845
      %v847 = vlaneseq
      %v848 = vshrl.u32 %v847, 7
      %v849 = vsub.s32 2, %v848
      %v850 = vrot.slane %v837, %v849
      %v851 = vlaneseq
      %v852 = vshrl.u32 %v851, 7
      %v853 = vsub.s32 3, %v852
      %v854 = vrot.slane %v837, %v853
      %v875 = vunpack.c.l.b16 %v821
      %v876 = vunpack.c.h.b16 %v821
      %v877 = vunpack.c.l.b16 %v822
      %v878 = vunpack.c.h.b16 %v822
      %v879 = vunpack.c.l.b16 %v823
      %v880 = vunpack.c.h.b16 %v823
      %v881 = vunpack.c.l.b16 %v824
      %v882 = vunpack.c.h.b16 %v824
      %v883 = vunpack.c.l.b16 %v825
      %v884 = vunpack.c.h.b16 %v825
      %v885 = vunpack.c.l.b16 %v826
      %v886 = vunpack.c.h.b16 %v826
      %v887 = vunpack.c.l.b16 %v827
      %v888 = vunpack.c.h.b16 %v827
      %v889 = vunpack.c.l.b16 %v828
      %v890 = vunpack.c.h.b16 %v828
      %v891 = vunpack.c.l.b16 %v829
      %v892 = vunpack.c.h.b16 %v829
      %v893 = vunpack.c.l.b16 %v830
      %v894 = vunpack.c.h.b16 %v830
      %v895 = vunpack.c.l.b16 %v831
      %v896 = vunpack.c.h.b16 %v831
      %v897 = vunpack.c.l.b16 %v832
      %v898 = vunpack.c.h.b16 %v832
      %v899 = vunpack.c.l.b16 %v833
      %v900 = vunpack.c.h.b16 %v833
      %v901 = vunpack.c.l.b16 %v834
      %v902 = vunpack.c.h.b16 %v834
      %v903 = vunpack.c.l.b16 %v835
      %v904 = vunpack.c.h.b16 %v835
      %v905 = vunpack.c.l.b16 %v836
      %v906 = vunpack.c.h.b16 %v836
      %v907 = vpack.c.b16 %v879, %v875
      %v908 = vpack.c.b16 %v880, %v876
      %v909 = vpack.c.b16 %v881, %v877
      %v910 = vpack.c.b16 %v882, %v878
      %v911 = vpack.c.b16 %v887, %v883
      %v912 = vpack.c.b16 %v888, %v884
      %v913 = vpack.c.b16 %v889, %v885
      %v914 = vpack.c.b16 %v890, %v886
      %v915 = vpack.c.b16 %v895, %v891
      %v916 = vpack.c.b16 %v896, %v892
      %v917 = vpack.c.b16 %v897, %v893
      %v918 = vpack.c.b16 %v898, %v894
      %v919 = vpack.c.b16 %v903, %v899
      %v920 = vpack.c.b16 %v904, %v900
      %v921 = vpack.c.b16 %v905, %v901
      %v922 = vpack.c.b16 %v906, %v902
      %vm939 = vcmask 523264
      %v941 = vsel %vm939, %v795, 0
      %v944 = vsel %vm939, %v796, 0
      %v947 = vsel %vm939, %v797, 0
      %v950 = vsel %vm939, %v798, 0
      %v953 = vsel %vm939, %v799, 0
      %v956 = vsel %vm939, %v800, 0
      %v959 = vsel %vm939, %v801, 0
      %v962 = vsel %vm939, %v802, 0
      %v965 = vsel %vm939, %v803, 0
      %v968 = vsel %vm939, %v804, 0
      %v971 = vsel %vm939, %v805, 0
      %v974 = vsel %vm939, %v806, 0
      %v977 = vsel %vm939, %v807, 0
      %v980 = vsel %vm939, %v808, 0
      %v983 = vsel %vm939, %v809, 0
      %v986 = vsel %vm939, %v810, 0
      %988 = vmatprep.subr.bf16.mxu0 0
      %989 = vmatpush1.bf16.msra.mxu0 0
      %990 = vmatprep.subr.bf16.mxu0 0
      %991 = vmatpush1.bf16.msra.mxu0 0
      %992 = vmatprep.subr.bf16.mxu0 0
      %993 = vmatpush1.bf16.msra.mxu0 0
      %994 = vmatprep.subr.bf16.mxu0 0
      %995 = vmatpush1.bf16.msra.mxu0 0
      %996 = vmatprep.subr.bf16.mxu0 %v920
      %997 = vmatpush1.bf16.msra.mxu0 %v919
      %998 = vmatprep.subr.bf16.mxu0 %v916
      %999 = vmatpush1.bf16.msra.mxu0 %v915
      %1000 = vmatprep.subr.bf16.mxu0 %v912
      %1001 = vmatpush1.bf16.msra.mxu0 %v911
      %1002 = vmatprep.subr.bf16.mxu0 %v908
      %1003 = vmatpush1.bf16.msra.mxu0 %v907
      %1004 = vmatprep.subr.bf16.mxu0 0
      %1005 = vmatpush2.bf16.msra.mxu0 0
      %1006 = vmatprep.subr.bf16.mxu0 0
      %1007 = vmatpush2.bf16.msra.mxu0 0
      %1008 = vmatprep.subr.bf16.mxu0 0
      %1009 = vmatpush2.bf16.msra.mxu0 0
      %1010 = vmatprep.subr.bf16.mxu0 0
      %1011 = vmatpush2.bf16.msra.mxu0 0
      %1012 = vmatprep.subr.bf16.mxu0 0
      %1013 = vmatpush2.bf16.msra.mxu0 0
      %1014 = vmatprep.subr.bf16.mxu0 0
      %1015 = vmatpush2.bf16.msra.mxu0 0
      %1016 = vmatprep.subr.bf16.mxu0 0
      %1017 = vmatpush2.bf16.msra.mxu0 0
      %1018 = vmatprep.subr.bf16.mxu0 0
      %1019 = vmatpush2.bf16.msra.mxu0 0
      %1020 = vmatprep.mubr.bf16.mxu0 0
      %1021 = vmatmul.mubr.bf16.gmra.mxu0 %v941
      %v1022 = vpop.f32.mrf.mxu0
      %v1023 = vadd.f32 %v842, %v1022
      %v1024 = vpop.f32.mrf.mxu0
      %v1025 = vadd.f32 %v846, %v1024
      %v1026 = vpop.f32.mrf.mxu0
      %v1027 = vadd.f32 %v842, %v1026
      %v1028 = vpop.f32.mrf.mxu0
      %v1029 = vadd.f32 %v846, %v1028
      %1030 = vmatprep.mubr.bf16.mxu0 0
      %1031 = vmatmul.mubr.bf16.gmra.mxu0 %v944
      %v1032 = vpop.f32.mrf.mxu0
      %v1033 = vadd.f32 %v842, %v1032
      %v1034 = vpop.f32.mrf.mxu0
      %v1035 = vadd.f32 %v846, %v1034
      %v1036 = vpop.f32.mrf.mxu0
      %v1037 = vadd.f32 %v842, %v1036
      %v1038 = vpop.f32.mrf.mxu0
      %v1039 = vadd.f32 %v846, %v1038
      %1040 = vmatprep.mubr.bf16.mxu0 0
      %1041 = vmatmul.mubr.bf16.gmra.mxu0 %v947
      %v1042 = vpop.f32.mrf.mxu0
      %v1043 = vadd.f32 %v842, %v1042
      %v1044 = vpop.f32.mrf.mxu0
      %v1045 = vadd.f32 %v846, %v1044
      %v1046 = vpop.f32.mrf.mxu0
      %v1047 = vadd.f32 %v842, %v1046
      %v1048 = vpop.f32.mrf.mxu0
      %v1049 = vadd.f32 %v846, %v1048
      %1050 = vmatprep.mubr.bf16.mxu0 0
      %1051 = vmatmul.mubr.bf16.gmra.mxu0 %v950
      %v1052 = vpop.f32.mrf.mxu0
      %v1053 = vadd.f32 %v842, %v1052
      %v1054 = vpop.f32.mrf.mxu0
      %v1055 = vadd.f32 %v846, %v1054
      %v1056 = vpop.f32.mrf.mxu0
      %v1057 = vadd.f32 %v842, %v1056
      %v1058 = vpop.f32.mrf.mxu0
      %v1059 = vadd.f32 %v846, %v1058
      %1060 = vmatprep.mubr.bf16.mxu0 0
      %1061 = vmatmul.mubr.bf16.gmra.mxu0 %v953
      %v1062 = vpop.f32.mrf.mxu0
      %v1063 = vadd.f32 %v842, %v1062
      %v1064 = vpop.f32.mrf.mxu0
      %v1065 = vadd.f32 %v846, %v1064
      %v1066 = vpop.f32.mrf.mxu0
      %v1067 = vadd.f32 %v842, %v1066
      %v1068 = vpop.f32.mrf.mxu0
      %v1069 = vadd.f32 %v846, %v1068
      %1070 = vmatprep.mubr.bf16.mxu0 0
      %1071 = vmatmul.mubr.bf16.gmra.mxu0 %v956
      %v1072 = vpop.f32.mrf.mxu0
      %v1073 = vadd.f32 %v842, %v1072
      %v1074 = vpop.f32.mrf.mxu0
      %v1075 = vadd.f32 %v846, %v1074
      %v1076 = vpop.f32.mrf.mxu0
      %v1077 = vadd.f32 %v842, %v1076
      %v1078 = vpop.f32.mrf.mxu0
      %v1079 = vadd.f32 %v846, %v1078
      %1080 = vmatprep.mubr.bf16.mxu0 0
      %1081 = vmatmul.mubr.bf16.gmra.mxu0 %v959
      %v1082 = vpop.f32.mrf.mxu0
      %v1083 = vadd.f32 %v842, %v1082
      %v1084 = vpop.f32.mrf.mxu0
      %v1085 = vadd.f32 %v846, %v1084
      %v1086 = vpop.f32.mrf.mxu0
      %v1087 = vadd.f32 %v842, %v1086
      %v1088 = vpop.f32.mrf.mxu0
      %v1089 = vadd.f32 %v846, %v1088
      %1090 = vmatprep.mubr.bf16.mxu0 0
      %1091 = vmatmul.mubr.bf16.gmra.mxu0 %v962
      %v1092 = vpop.f32.mrf.mxu0
      %v1093 = vadd.f32 %v842, %v1092
      %v1094 = vpop.f32.mrf.mxu0
      %v1095 = vadd.f32 %v846, %v1094
      %v1096 = vpop.f32.mrf.mxu0
      %v1097 = vadd.f32 %v842, %v1096
      %v1098 = vpop.f32.mrf.mxu0
      %v1099 = vadd.f32 %v846, %v1098
      %1100 = vmatprep.mubr.bf16.mxu0 0
      %1101 = vmatmul.mubr.bf16.gmra.mxu0 %v965
      %v1102 = vpop.f32.mrf.mxu0
      %v1103 = vadd.f32 %v842, %v1102
      %v1104 = vpop.f32.mrf.mxu0
      %v1105 = vadd.f32 %v846, %v1104
      %v1106 = vpop.f32.mrf.mxu0
      %v1107 = vadd.f32 %v842, %v1106
      %v1108 = vpop.f32.mrf.mxu0
      %v1109 = vadd.f32 %v846, %v1108
      %1110 = vmatprep.mubr.bf16.mxu0 0
      %1111 = vmatmul.mubr.bf16.gmra.mxu0 %v968
      %v1112 = vpop.f32.mrf.mxu0
      %v1113 = vadd.f32 %v842, %v1112
      %v1114 = vpop.f32.mrf.mxu0
      %v1115 = vadd.f32 %v846, %v1114
      %v1116 = vpop.f32.mrf.mxu0
      %v1117 = vadd.f32 %v842, %v1116
      %v1118 = vpop.f32.mrf.mxu0
      %v1119 = vadd.f32 %v846, %v1118
      %1120 = vmatprep.mubr.bf16.mxu0 0
      %1121 = vmatmul.mubr.bf16.gmra.mxu0 %v971
      %v1122 = vpop.f32.mrf.mxu0
      %v1123 = vadd.f32 %v842, %v1122
      %v1124 = vpop.f32.mrf.mxu0
      %v1125 = vadd.f32 %v846, %v1124
      %v1126 = vpop.f32.mrf.mxu0
      %v1127 = vadd.f32 %v842, %v1126
      %v1128 = vpop.f32.mrf.mxu0
      %v1129 = vadd.f32 %v846, %v1128
      %1130 = vmatprep.mubr.bf16.mxu0 0
      %1131 = vmatmul.mubr.bf16.gmra.mxu0 %v974
      %v1132 = vpop.f32.mrf.mxu0
      %v1133 = vadd.f32 %v842, %v1132
      %v1134 = vpop.f32.mrf.mxu0
      %v1135 = vadd.f32 %v846, %v1134
      %v1136 = vpop.f32.mrf.mxu0
      %v1137 = vadd.f32 %v842, %v1136
      %v1138 = vpop.f32.mrf.mxu0
      %v1139 = vadd.f32 %v846, %v1138
      %1140 = vmatprep.mubr.bf16.mxu0 0
      %1141 = vmatmul.mubr.bf16.gmra.mxu0 %v977
      %v1142 = vpop.f32.mrf.mxu0
      %v1143 = vadd.f32 %v842, %v1142
      %v1144 = vpop.f32.mrf.mxu0
      %v1145 = vadd.f32 %v846, %v1144
      %v1146 = vpop.f32.mrf.mxu0
      %v1147 = vadd.f32 %v842, %v1146
      %v1148 = vpop.f32.mrf.mxu0
      %v1149 = vadd.f32 %v846, %v1148
      %1150 = vmatprep.mubr.bf16.mxu0 0
      %1151 = vmatmul.mubr.bf16.gmra.mxu0 %v980
      %v1152 = vpop.f32.mrf.mxu0
      %v1153 = vadd.f32 %v842, %v1152
      %v1154 = vpop.f32.mrf.mxu0
      %v1155 = vadd.f32 %v846, %v1154
      %v1156 = vpop.f32.mrf.mxu0
      %v1157 = vadd.f32 %v842, %v1156
      %v1158 = vpop.f32.mrf.mxu0
      %v1159 = vadd.f32 %v846, %v1158
      %1160 = vmatprep.mubr.bf16.mxu0 0
      %1161 = vmatmul.mubr.bf16.gmra.mxu0 %v983
      %v1162 = vpop.f32.mrf.mxu0
      %v1163 = vadd.f32 %v842, %v1162
      %v1164 = vpop.f32.mrf.mxu0
      %v1165 = vadd.f32 %v846, %v1164
      %v1166 = vpop.f32.mrf.mxu0
      %v1167 = vadd.f32 %v842, %v1166
      %v1168 = vpop.f32.mrf.mxu0
      %v1169 = vadd.f32 %v846, %v1168
      %1170 = vmatprep.mubr.bf16.mxu0 0
      %1171 = vmatmul.mubr.bf16.gmra.mxu0 %v986
      %v1172 = vpop.f32.mrf.mxu0
      %v1173 = vadd.f32 %v842, %v1172
      %v1174 = vpop.f32.mrf.mxu0
      %v1175 = vadd.f32 %v846, %v1174
      %v1176 = vpop.f32.mrf.mxu0
      %v1177 = vadd.f32 %v842, %v1176
      %v1178 = vpop.f32.mrf.mxu0
      %v1179 = vadd.f32 %v846, %v1178
      %1180 = vdwg.mxu0
      %1181 = vmatprep.subr.bf16.mxu0 0
      %1182 = vmatpush1.bf16.msra.mxu0 0
      %1183 = vmatprep.subr.bf16.mxu0 0
      %1184 = vmatpush1.bf16.msra.mxu0 0
      %1185 = vmatprep.subr.bf16.mxu0 0
      %1186 = vmatpush1.bf16.msra.mxu0 0
      %1187 = vmatprep.subr.bf16.mxu0 0
      %1188 = vmatpush1.bf16.msra.mxu0 0
      %1189 = vmatprep.subr.bf16.mxu0 %v922
      %1190 = vmatpush1.bf16.msra.mxu0 %v921
      %1191 = vmatprep.subr.bf16.mxu0 %v918
      %1192 = vmatpush1.bf16.msra.mxu0 %v917
      %1193 = vmatprep.subr.bf16.mxu0 %v914
      %1194 = vmatpush1.bf16.msra.mxu0 %v913
      %1195 = vmatprep.subr.bf16.mxu0 %v910
      %1196 = vmatpush1.bf16.msra.mxu0 %v909
      %1197 = vmatprep.subr.bf16.mxu0 0
      %1198 = vmatpush2.bf16.msra.mxu0 0
      %1199 = vmatprep.subr.bf16.mxu0 0
      %1200 = vmatpush2.bf16.msra.mxu0 0
      %1201 = vmatprep.subr.bf16.mxu0 0
      %1202 = vmatpush2.bf16.msra.mxu0 0
      %1203 = vmatprep.subr.bf16.mxu0 0
      %1204 = vmatpush2.bf16.msra.mxu0 0
      %1205 = vmatprep.subr.bf16.mxu0 0
      %1206 = vmatpush2.bf16.msra.mxu0 0
      %1207 = vmatprep.subr.bf16.mxu0 0
      %1208 = vmatpush2.bf16.msra.mxu0 0
      %1209 = vmatprep.subr.bf16.mxu0 0
      %1210 = vmatpush2.bf16.msra.mxu0 0
      %1211 = vmatprep.subr.bf16.mxu0 0
      %1212 = vmatpush2.bf16.msra.mxu0 0
      %1213 = vmatprep.mubr.bf16.mxu0 0
      %1214 = vmatmul.mubr.bf16.gmra.mxu0 %v941
      %v1215 = vpop.f32.mrf.mxu0
      %v1216 = vadd.f32 %v850, %v1215
      %v1217 = vpop.f32.mrf.mxu0
      %v1218 = vadd.f32 %v854, %v1217
      %v1219 = vpop.f32.mrf.mxu0
      %v1220 = vadd.f32 %v850, %v1219
      %v1221 = vpop.f32.mrf.mxu0
      %v1222 = vadd.f32 %v854, %v1221
      %1223 = vmatprep.mubr.bf16.mxu0 0
      %1224 = vmatmul.mubr.bf16.gmra.mxu0 %v944
      %v1225 = vpop.f32.mrf.mxu0
      %v1226 = vadd.f32 %v850, %v1225
      %v1227 = vpop.f32.mrf.mxu0
      %v1228 = vadd.f32 %v854, %v1227
      %v1229 = vpop.f32.mrf.mxu0
      %v1230 = vadd.f32 %v850, %v1229
      %v1231 = vpop.f32.mrf.mxu0
      %v1232 = vadd.f32 %v854, %v1231
      %1233 = vmatprep.mubr.bf16.mxu0 0
      %1234 = vmatmul.mubr.bf16.gmra.mxu0 %v947
      %v1235 = vpop.f32.mrf.mxu0
      %v1236 = vadd.f32 %v850, %v1235
      %v1237 = vpop.f32.mrf.mxu0
      %v1238 = vadd.f32 %v854, %v1237
      %v1239 = vpop.f32.mrf.mxu0
      %v1240 = vadd.f32 %v850, %v1239
      %v1241 = vpop.f32.mrf.mxu0
      %v1242 = vadd.f32 %v854, %v1241
      %1243 = vmatprep.mubr.bf16.mxu0 0
      %1244 = vmatmul.mubr.bf16.gmra.mxu0 %v950
      %v1245 = vpop.f32.mrf.mxu0
      %v1246 = vadd.f32 %v850, %v1245
      %v1247 = vpop.f32.mrf.mxu0
      %v1248 = vadd.f32 %v854, %v1247
      %v1249 = vpop.f32.mrf.mxu0
      %v1250 = vadd.f32 %v850, %v1249
      %v1251 = vpop.f32.mrf.mxu0
      %v1252 = vadd.f32 %v854, %v1251
      %1253 = vmatprep.mubr.bf16.mxu0 0
      %1254 = vmatmul.mubr.bf16.gmra.mxu0 %v953
      %v1255 = vpop.f32.mrf.mxu0
      %v1256 = vadd.f32 %v850, %v1255
      %v1257 = vpop.f32.mrf.mxu0
      %v1258 = vadd.f32 %v854, %v1257
      %v1259 = vpop.f32.mrf.mxu0
      %v1260 = vadd.f32 %v850, %v1259
      %v1261 = vpop.f32.mrf.mxu0
      %v1262 = vadd.f32 %v854, %v1261
      %1263 = vmatprep.mubr.bf16.mxu0 0
      %1264 = vmatmul.mubr.bf16.gmra.mxu0 %v956
      %v1265 = vpop.f32.mrf.mxu0
      %v1266 = vadd.f32 %v850, %v1265
      %v1267 = vpop.f32.mrf.mxu0
      %v1268 = vadd.f32 %v854, %v1267
      %v1269 = vpop.f32.mrf.mxu0
      %v1270 = vadd.f32 %v850, %v1269
      %v1271 = vpop.f32.mrf.mxu0
      %v1272 = vadd.f32 %v854, %v1271
      %1273 = vmatprep.mubr.bf16.mxu0 0
      %1274 = vmatmul.mubr.bf16.gmra.mxu0 %v959
      %v1275 = vpop.f32.mrf.mxu0
      %v1276 = vadd.f32 %v850, %v1275
      %v1277 = vpop.f32.mrf.mxu0
      %v1278 = vadd.f32 %v854, %v1277
      %v1279 = vpop.f32.mrf.mxu0
      %v1280 = vadd.f32 %v850, %v1279
      %v1281 = vpop.f32.mrf.mxu0
      %v1282 = vadd.f32 %v854, %v1281
      %1283 = vmatprep.mubr.bf16.mxu0 0
      %1284 = vmatmul.mubr.bf16.gmra.mxu0 %v962
      %v1285 = vpop.f32.mrf.mxu0
      %v1286 = vadd.f32 %v850, %v1285
      %v1287 = vpop.f32.mrf.mxu0
      %v1288 = vadd.f32 %v854, %v1287
      %v1289 = vpop.f32.mrf.mxu0
      %v1290 = vadd.f32 %v850, %v1289
      %v1291 = vpop.f32.mrf.mxu0
      %v1292 = vadd.f32 %v854, %v1291
      %1293 = vmatprep.mubr.bf16.mxu0 0
      %1294 = vmatmul.mubr.bf16.gmra.mxu0 %v965
      %v1295 = vpop.f32.mrf.mxu0
      %v1296 = vadd.f32 %v850, %v1295
      %v1297 = vpop.f32.mrf.mxu0
      %v1298 = vadd.f32 %v854, %v1297
      %v1299 = vpop.f32.mrf.mxu0
      %v1300 = vadd.f32 %v850, %v1299
      %v1301 = vpop.f32.mrf.mxu0
      %v1302 = vadd.f32 %v854, %v1301
      %1303 = vmatprep.mubr.bf16.mxu0 0
      %1304 = vmatmul.mubr.bf16.gmra.mxu0 %v968
      %v1305 = vpop.f32.mrf.mxu0
      %v1306 = vadd.f32 %v850, %v1305
      %v1307 = vpop.f32.mrf.mxu0
      %v1308 = vadd.f32 %v854, %v1307
      %v1309 = vpop.f32.mrf.mxu0
      %v1310 = vadd.f32 %v850, %v1309
      %v1311 = vpop.f32.mrf.mxu0
      %v1312 = vadd.f32 %v854, %v1311
      %1313 = vmatprep.mubr.bf16.mxu0 0
      %1314 = vmatmul.mubr.bf16.gmra.mxu0 %v971
      %v1315 = vpop.f32.mrf.mxu0
      %v1316 = vadd.f32 %v850, %v1315
      %v1317 = vpop.f32.mrf.mxu0
      %v1318 = vadd.f32 %v854, %v1317
      %v1319 = vpop.f32.mrf.mxu0
      %v1320 = vadd.f32 %v850, %v1319
      %v1321 = vpop.f32.mrf.mxu0
      %v1322 = vadd.f32 %v854, %v1321
      %1323 = vmatprep.mubr.bf16.mxu0 0
      %1324 = vmatmul.mubr.bf16.gmra.mxu0 %v974
      %v1325 = vpop.f32.mrf.mxu0
      %v1326 = vadd.f32 %v850, %v1325
      %v1327 = vpop.f32.mrf.mxu0
      %v1328 = vadd.f32 %v854, %v1327
      %v1329 = vpop.f32.mrf.mxu0
      %v1330 = vadd.f32 %v850, %v1329
      %v1331 = vpop.f32.mrf.mxu0
      %v1332 = vadd.f32 %v854, %v1331
      %1333 = vmatprep.mubr.bf16.mxu0 0
      %1334 = vmatmul.mubr.bf16.gmra.mxu0 %v977
      %v1335 = vpop.f32.mrf.mxu0
      %v1336 = vadd.f32 %v850, %v1335
      %v1337 = vpop.f32.mrf.mxu0
      %v1338 = vadd.f32 %v854, %v1337
      %v1339 = vpop.f32.mrf.mxu0
      %v1340 = vadd.f32 %v850, %v1339
      %v1341 = vpop.f32.mrf.mxu0
      %v1342 = vadd.f32 %v854, %v1341
      %1343 = vmatprep.mubr.bf16.mxu0 0
      %1344 = vmatmul.mubr.bf16.gmra.mxu0 %v980
      %v1345 = vpop.f32.mrf.mxu0
      %v1346 = vadd.f32 %v850, %v1345
      %v1347 = vpop.f32.mrf.mxu0
      %v1348 = vadd.f32 %v854, %v1347
      %v1349 = vpop.f32.mrf.mxu0
      %v1350 = vadd.f32 %v850, %v1349
      %v1351 = vpop.f32.mrf.mxu0
      %v1352 = vadd.f32 %v854, %v1351
      %1353 = vmatprep.mubr.bf16.mxu0 0
      %1354 = vmatmul.mubr.bf16.gmra.mxu0 %v983
      %v1355 = vpop.f32.mrf.mxu0
      %v1356 = vadd.f32 %v850, %v1355
      %v1357 = vpop.f32.mrf.mxu0
      %v1358 = vadd.f32 %v854, %v1357
      %v1359 = vpop.f32.mrf.mxu0
      %v1360 = vadd.f32 %v850, %v1359
      %v1361 = vpop.f32.mrf.mxu0
      %v1362 = vadd.f32 %v854, %v1361
      %1363 = vmatprep.mubr.bf16.mxu0 0
      %1364 = vmatmul.mubr.bf16.gmra.mxu0 %v986
      %v1365 = vpop.f32.mrf.mxu0
      %v1366 = vadd.f32 %v850, %v1365
      %v1367 = vpop.f32.mrf.mxu0
      %v1368 = vadd.f32 %v854, %v1367
      %v1369 = vpop.f32.mrf.mxu0
      %v1370 = vadd.f32 %v850, %v1369
      %v1371 = vpop.f32.mrf.mxu0
      %v1372 = vadd.f32 %v854, %v1371
      %1373 = vdwg.mxu0
      %v1374 = vsub.f32 0.0, %v1023
      %v1375 = vsub.f32 0.0, %v1025
      %v1376 = vsub.f32 0.0, %v1216
      %v1377 = vsub.f32 0.0, %v1218
      %v1378 = vsub.f32 0.0, %v1027
      %v1379 = vsub.f32 0.0, %v1029
      %v1380 = vsub.f32 0.0, %v1220
      %v1381 = vsub.f32 0.0, %v1222
      %v1382 = vsub.f32 0.0, %v1033
      %v1383 = vsub.f32 0.0, %v1035
      %v1384 = vsub.f32 0.0, %v1226
      %v1385 = vsub.f32 0.0, %v1228
      %v1386 = vsub.f32 0.0, %v1037
      %v1387 = vsub.f32 0.0, %v1039
      %v1388 = vsub.f32 0.0, %v1230
      %v1389 = vsub.f32 0.0, %v1232
      %v1390 = vsub.f32 0.0, %v1043
      %v1391 = vsub.f32 0.0, %v1045
      %v1392 = vsub.f32 0.0, %v1236
      %v1393 = vsub.f32 0.0, %v1238
      %v1394 = vsub.f32 0.0, %v1047
      %v1395 = vsub.f32 0.0, %v1049
      %v1396 = vsub.f32 0.0, %v1240
      %v1397 = vsub.f32 0.0, %v1242
      %v1398 = vsub.f32 0.0, %v1053
      %v1399 = vsub.f32 0.0, %v1055
      %v1400 = vsub.f32 0.0, %v1246
      %v1401 = vsub.f32 0.0, %v1248
      %v1402 = vsub.f32 0.0, %v1057
      %v1403 = vsub.f32 0.0, %v1059
      %v1404 = vsub.f32 0.0, %v1250
      %v1405 = vsub.f32 0.0, %v1252
      %v1406 = vsub.f32 0.0, %v1063
      %v1407 = vsub.f32 0.0, %v1065
      %v1408 = vsub.f32 0.0, %v1256
      %v1409 = vsub.f32 0.0, %v1258
      %v1410 = vsub.f32 0.0, %v1067
      %v1411 = vsub.f32 0.0, %v1069
      %v1412 = vsub.f32 0.0, %v1260
      %v1413 = vsub.f32 0.0, %v1262
      %v1414 = vsub.f32 0.0, %v1073
      %v1415 = vsub.f32 0.0, %v1075
      %v1416 = vsub.f32 0.0, %v1266
      %v1417 = vsub.f32 0.0, %v1268
      %v1418 = vsub.f32 0.0, %v1077
      %v1419 = vsub.f32 0.0, %v1079
      %v1420 = vsub.f32 0.0, %v1270
      %v1421 = vsub.f32 0.0, %v1272
      %v1422 = vsub.f32 0.0, %v1083
      %v1423 = vsub.f32 0.0, %v1085
      %v1424 = vsub.f32 0.0, %v1276
      %v1425 = vsub.f32 0.0, %v1278
      %v1426 = vsub.f32 0.0, %v1087
      %v1427 = vsub.f32 0.0, %v1089
      %v1428 = vsub.f32 0.0, %v1280
      %v1429 = vsub.f32 0.0, %v1282
      %v1430 = vsub.f32 0.0, %v1093
      %v1431 = vsub.f32 0.0, %v1095
      %v1432 = vsub.f32 0.0, %v1286
      %v1433 = vsub.f32 0.0, %v1288
      %v1434 = vsub.f32 0.0, %v1097
      %v1435 = vsub.f32 0.0, %v1099
      %v1436 = vsub.f32 0.0, %v1290
      %v1437 = vsub.f32 0.0, %v1292
      %v1438 = vsub.f32 0.0, %v1103
      %v1439 = vsub.f32 0.0, %v1105
      %v1440 = vsub.f32 0.0, %v1296
      %v1441 = vsub.f32 0.0, %v1298
      %v1442 = vsub.f32 0.0, %v1107
      %v1443 = vsub.f32 0.0, %v1109
      %v1444 = vsub.f32 0.0, %v1300
      %v1445 = vsub.f32 0.0, %v1302
      %v1446 = vsub.f32 0.0, %v1113
      %v1447 = vsub.f32 0.0, %v1115
      %v1448 = vsub.f32 0.0, %v1306
      %v1449 = vsub.f32 0.0, %v1308
      %v1450 = vsub.f32 0.0, %v1117
      %v1451 = vsub.f32 0.0, %v1119
      %v1452 = vsub.f32 0.0, %v1310
      %v1453 = vsub.f32 0.0, %v1312
      %v1454 = vsub.f32 0.0, %v1123
      %v1455 = vsub.f32 0.0, %v1125
      %v1456 = vsub.f32 0.0, %v1316
      %v1457 = vsub.f32 0.0, %v1318
      %v1458 = vsub.f32 0.0, %v1127
      %v1459 = vsub.f32 0.0, %v1129
      %v1460 = vsub.f32 0.0, %v1320
      %v1461 = vsub.f32 0.0, %v1322
      %v1462 = vsub.f32 0.0, %v1133
      %v1463 = vsub.f32 0.0, %v1135
      %v1464 = vsub.f32 0.0, %v1326
      %v1465 = vsub.f32 0.0, %v1328
      %v1466 = vsub.f32 0.0, %v1137
      %v1467 = vsub.f32 0.0, %v1139
      %v1468 = vsub.f32 0.0, %v1330
      %v1469 = vsub.f32 0.0, %v1332
      %v1470 = vsub.f32 0.0, %v1143
      %v1471 = vsub.f32 0.0, %v1145
      %v1472 = vsub.f32 0.0, %v1336
      %v1473 = vsub.f32 0.0, %v1338
      %v1474 = vsub.f32 0.0, %v1147
      %v1475 = vsub.f32 0.0, %v1149
      %v1476 = vsub.f32 0.0, %v1340
      %v1477 = vsub.f32 0.0, %v1342
      %v1478 = vsub.f32 0.0, %v1153
      %v1479 = vsub.f32 0.0, %v1155
      %v1480 = vsub.f32 0.0, %v1346
      %v1481 = vsub.f32 0.0, %v1348
      %v1482 = vsub.f32 0.0, %v1157
      %v1483 = vsub.f32 0.0, %v1159
      %v1484 = vsub.f32 0.0, %v1350
      %v1485 = vsub.f32 0.0, %v1352
      %v1486 = vsub.f32 0.0, %v1163
      %v1487 = vsub.f32 0.0, %v1165
      %v1488 = vsub.f32 0.0, %v1356
      %v1489 = vsub.f32 0.0, %v1358
      %v1490 = vsub.f32 0.0, %v1167
      %v1491 = vsub.f32 0.0, %v1169
      %v1492 = vsub.f32 0.0, %v1360
      %v1493 = vsub.f32 0.0, %v1362
      %v1494 = vsub.f32 0.0, %v1173
      %v1495 = vsub.f32 0.0, %v1175
      %v1496 = vsub.f32 0.0, %v1366
      %v1497 = vsub.f32 0.0, %v1368
      %v1498 = vsub.f32 0.0, %v1177
      %v1499 = vsub.f32 0.0, %v1179
      %v1500 = vsub.f32 0.0, %v1370
      %v1501 = vsub.f32 0.0, %v1372
      %v1502 = vmul.f32 %v1374, 1.442695
      %v1503 = vpow.pop %v1502
      %v1504 = vmul.f32 %v1375, 1.442695
      %v1505 = vpow.pop %v1504
      %v1506 = vmul.f32 %v1376, 1.442695
      %v1507 = vpow.pop %v1506
      %v1508 = vmul.f32 %v1377, 1.442695
      %v1509 = vpow.pop %v1508
      %v1510 = vmul.f32 %v1378, 1.442695
      %v1511 = vpow.pop %v1510
      %v1512 = vmul.f32 %v1379, 1.442695
      %v1513 = vpow.pop %v1512
      %v1514 = vmul.f32 %v1380, 1.442695
      %v1515 = vpow.pop %v1514
      %v1516 = vmul.f32 %v1381, 1.442695
      %v1517 = vpow.pop %v1516
      %v1518 = vmul.f32 %v1382, 1.442695
      %v1519 = vpow.pop %v1518
      %v1520 = vmul.f32 %v1383, 1.442695
      %v1521 = vpow.pop %v1520
      %v1522 = vmul.f32 %v1384, 1.442695
      %v1523 = vpow.pop %v1522
      %v1524 = vmul.f32 %v1385, 1.442695
      %v1525 = vpow.pop %v1524
      %v1526 = vmul.f32 %v1386, 1.442695
      %v1527 = vpow.pop %v1526
      %v1528 = vmul.f32 %v1387, 1.442695
      %v1529 = vpow.pop %v1528
      %v1530 = vmul.f32 %v1388, 1.442695
      %v1531 = vpow.pop %v1530
      %v1532 = vmul.f32 %v1389, 1.442695
      %v1533 = vpow.pop %v1532
      %v1534 = vmul.f32 %v1390, 1.442695
      %v1535 = vpow.pop %v1534
      %v1536 = vmul.f32 %v1391, 1.442695
      %v1537 = vpow.pop %v1536
      %v1538 = vmul.f32 %v1392, 1.442695
      %v1539 = vpow.pop %v1538
      %v1540 = vmul.f32 %v1393, 1.442695
      %v1541 = vpow.pop %v1540
      %v1542 = vmul.f32 %v1394, 1.442695
      %v1543 = vpow.pop %v1542
      %v1544 = vmul.f32 %v1395, 1.442695
      %v1545 = vpow.pop %v1544
      %v1546 = vmul.f32 %v1396, 1.442695
      %v1547 = vpow.pop %v1546
      %v1548 = vmul.f32 %v1397, 1.442695
      %v1549 = vpow.pop %v1548
      %v1550 = vmul.f32 %v1398, 1.442695
      %v1551 = vpow.pop %v1550
      %v1552 = vmul.f32 %v1399, 1.442695
      %v1553 = vpow.pop %v1552
      %v1554 = vmul.f32 %v1400, 1.442695
      %v1555 = vpow.pop %v1554
      %v1556 = vmul.f32 %v1401, 1.442695
      %v1557 = vpow.pop %v1556
      %v1558 = vmul.f32 %v1402, 1.442695
      %v1559 = vpow.pop %v1558
      %v1560 = vmul.f32 %v1403, 1.442695
      %v1561 = vpow.pop %v1560
      %v1562 = vmul.f32 %v1404, 1.442695
      %v1563 = vpow.pop %v1562
      %v1564 = vmul.f32 %v1405, 1.442695
      %v1565 = vpow.pop %v1564
      %v1566 = vmul.f32 %v1406, 1.442695
      %v1567 = vpow.pop %v1566
      %v1568 = vmul.f32 %v1407, 1.442695
      %v1569 = vpow.pop %v1568
      %v1570 = vmul.f32 %v1408, 1.442695
      %v1571 = vpow.pop %v1570
      %v1572 = vmul.f32 %v1409, 1.442695
      %v1573 = vpow.pop %v1572
      %v1574 = vmul.f32 %v1410, 1.442695
      %v1575 = vpow.pop %v1574
      %v1576 = vmul.f32 %v1411, 1.442695
      %v1577 = vpow.pop %v1576
      %v1578 = vmul.f32 %v1412, 1.442695
      %v1579 = vpow.pop %v1578
      %v1580 = vmul.f32 %v1413, 1.442695
      %v1581 = vpow.pop %v1580
      %v1582 = vmul.f32 %v1414, 1.442695
      %v1583 = vpow.pop %v1582
      %v1584 = vmul.f32 %v1415, 1.442695
      %v1585 = vpow.pop %v1584
      %v1586 = vmul.f32 %v1416, 1.442695
      %v1587 = vpow.pop %v1586
      %v1588 = vmul.f32 %v1417, 1.442695
      %v1589 = vpow.pop %v1588
      %v1590 = vmul.f32 %v1418, 1.442695
      %v1591 = vpow.pop %v1590
      %v1592 = vmul.f32 %v1419, 1.442695
      %v1593 = vpow.pop %v1592
      %v1594 = vmul.f32 %v1420, 1.442695
      %v1595 = vpow.pop %v1594
      %v1596 = vmul.f32 %v1421, 1.442695
      %v1597 = vpow.pop %v1596
      %v1598 = vmul.f32 %v1422, 1.442695
      %v1599 = vpow.pop %v1598
      %v1600 = vmul.f32 %v1423, 1.442695
      %v1601 = vpow.pop %v1600
      %v1602 = vmul.f32 %v1424, 1.442695
      %v1603 = vpow.pop %v1602
      %v1604 = vmul.f32 %v1425, 1.442695
      %v1605 = vpow.pop %v1604
      %v1606 = vmul.f32 %v1426, 1.442695
      %v1607 = vpow.pop %v1606
      %v1608 = vmul.f32 %v1427, 1.442695
      %v1609 = vpow.pop %v1608
      %v1610 = vmul.f32 %v1428, 1.442695
      %v1611 = vpow.pop %v1610
      %v1612 = vmul.f32 %v1429, 1.442695
      %v1613 = vpow.pop %v1612
      %v1614 = vmul.f32 %v1430, 1.442695
      %v1615 = vpow.pop %v1614
      %v1616 = vmul.f32 %v1431, 1.442695
      %v1617 = vpow.pop %v1616
      %v1618 = vmul.f32 %v1432, 1.442695
      %v1619 = vpow.pop %v1618
      %v1620 = vmul.f32 %v1433, 1.442695
      %v1621 = vpow.pop %v1620
      %v1622 = vmul.f32 %v1434, 1.442695
      %v1623 = vpow.pop %v1622
      %v1624 = vmul.f32 %v1435, 1.442695
      %v1625 = vpow.pop %v1624
      %v1626 = vmul.f32 %v1436, 1.442695
      %v1627 = vpow.pop %v1626
      %v1628 = vmul.f32 %v1437, 1.442695
      %v1629 = vpow.pop %v1628
      %v1630 = vmul.f32 %v1438, 1.442695
      %v1631 = vpow.pop %v1630
      %v1632 = vmul.f32 %v1439, 1.442695
      %v1633 = vpow.pop %v1632
      %v1634 = vmul.f32 %v1440, 1.442695
      %v1635 = vpow.pop %v1634
      %v1636 = vmul.f32 %v1441, 1.442695
      %v1637 = vpow.pop %v1636
      %v1638 = vmul.f32 %v1442, 1.442695
      %v1639 = vpow.pop %v1638
      %v1640 = vmul.f32 %v1443, 1.442695
      %v1641 = vpow.pop %v1640
      %v1642 = vmul.f32 %v1444, 1.442695
      %v1643 = vpow.pop %v1642
      %v1644 = vmul.f32 %v1445, 1.442695
      %v1645 = vpow.pop %v1644
      %v1646 = vmul.f32 %v1446, 1.442695
      %v1647 = vpow.pop %v1646
      %v1648 = vmul.f32 %v1447, 1.442695
      %v1649 = vpow.pop %v1648
      %v1650 = vmul.f32 %v1448, 1.442695
      %v1651 = vpow.pop %v1650
      %v1652 = vmul.f32 %v1449, 1.442695
      %v1653 = vpow.pop %v1652
      %v1654 = vmul.f32 %v1450, 1.442695
      %v1655 = vpow.pop %v1654
      %v1656 = vmul.f32 %v1451, 1.442695
      %v1657 = vpow.pop %v1656
      %v1658 = vmul.f32 %v1452, 1.442695
      %v1659 = vpow.pop %v1658
      %v1660 = vmul.f32 %v1453, 1.442695
      %v1661 = vpow.pop %v1660
      %v1662 = vmul.f32 %v1454, 1.442695
      %v1663 = vpow.pop %v1662
      %v1664 = vmul.f32 %v1455, 1.442695
      %v1665 = vpow.pop %v1664
      %v1666 = vmul.f32 %v1456, 1.442695
      %v1667 = vpow.pop %v1666
      %v1668 = vmul.f32 %v1457, 1.442695
      %v1669 = vpow.pop %v1668
      %v1670 = vmul.f32 %v1458, 1.442695
      %v1671 = vpow.pop %v1670
      %v1672 = vmul.f32 %v1459, 1.442695
      %v1673 = vpow.pop %v1672
      %v1674 = vmul.f32 %v1460, 1.442695
      %v1675 = vpow.pop %v1674
      %v1676 = vmul.f32 %v1461, 1.442695
      %v1677 = vpow.pop %v1676
      %v1678 = vmul.f32 %v1462, 1.442695
      %v1679 = vpow.pop %v1678
      %v1680 = vmul.f32 %v1463, 1.442695
      %v1681 = vpow.pop %v1680
      %v1682 = vmul.f32 %v1464, 1.442695
      %v1683 = vpow.pop %v1682
      %v1684 = vmul.f32 %v1465, 1.442695
      %v1685 = vpow.pop %v1684
      %v1686 = vmul.f32 %v1466, 1.442695
      %v1687 = vpow.pop %v1686
      %v1688 = vmul.f32 %v1467, 1.442695
      %v1689 = vpow.pop %v1688
      %v1690 = vmul.f32 %v1468, 1.442695
      %v1691 = vpow.pop %v1690
      %v1692 = vmul.f32 %v1469, 1.442695
      %v1693 = vpow.pop %v1692
      %v1694 = vmul.f32 %v1470, 1.442695
      %v1695 = vpow.pop %v1694
      %v1696 = vmul.f32 %v1471, 1.442695
      %v1697 = vpow.pop %v1696
      %v1698 = vmul.f32 %v1472, 1.442695
      %v1699 = vpow.pop %v1698
      %v1700 = vmul.f32 %v1473, 1.442695
      %v1701 = vpow.pop %v1700
      %v1702 = vmul.f32 %v1474, 1.442695
      %v1703 = vpow.pop %v1702
      %v1704 = vmul.f32 %v1475, 1.442695
      %v1705 = vpow.pop %v1704
      %v1706 = vmul.f32 %v1476, 1.442695
      %v1707 = vpow.pop %v1706
      %v1708 = vmul.f32 %v1477, 1.442695
      %v1709 = vpow.pop %v1708
      %v1710 = vmul.f32 %v1478, 1.442695
      %v1711 = vpow.pop %v1710
      %v1712 = vmul.f32 %v1479, 1.442695
      %v1713 = vpow.pop %v1712
      %v1714 = vmul.f32 %v1480, 1.442695
      %v1715 = vpow.pop %v1714
      %v1716 = vmul.f32 %v1481, 1.442695
      %v1717 = vpow.pop %v1716
      %v1718 = vmul.f32 %v1482, 1.442695
      %v1719 = vpow.pop %v1718
      %v1720 = vmul.f32 %v1483, 1.442695
      %v1721 = vpow.pop %v1720
      %v1722 = vmul.f32 %v1484, 1.442695
      %v1723 = vpow.pop %v1722
      %v1724 = vmul.f32 %v1485, 1.442695
      %v1725 = vpow.pop %v1724
      %v1726 = vmul.f32 %v1486, 1.442695
      %v1727 = vpow.pop %v1726
      %v1728 = vmul.f32 %v1487, 1.442695
      %v1729 = vpow.pop %v1728
      %v1730 = vmul.f32 %v1488, 1.442695
      %v1731 = vpow.pop %v1730
      %v1732 = vmul.f32 %v1489, 1.442695
      %v1733 = vpow.pop %v1732
      %v1734 = vmul.f32 %v1490, 1.442695
      %v1735 = vpow.pop %v1734
      %v1736 = vmul.f32 %v1491, 1.442695
      %v1737 = vpow.pop %v1736
      %v1738 = vmul.f32 %v1492, 1.442695
      %v1739 = vpow.pop %v1738
      %v1740 = vmul.f32 %v1493, 1.442695
      %v1741 = vpow.pop %v1740
      %v1742 = vmul.f32 %v1494, 1.442695
      %v1743 = vpow.pop %v1742
      %v1744 = vmul.f32 %v1495, 1.442695
      %v1745 = vpow.pop %v1744
      %v1746 = vmul.f32 %v1496, 1.442695
      %v1747 = vpow.pop %v1746
      %v1748 = vmul.f32 %v1497, 1.442695
      %v1749 = vpow.pop %v1748
      %v1750 = vmul.f32 %v1498, 1.442695
      %v1751 = vpow.pop %v1750
      %v1752 = vmul.f32 %v1499, 1.442695
      %v1753 = vpow.pop %v1752
      %v1754 = vmul.f32 %v1500, 1.442695
      %v1755 = vpow.pop %v1754
      %v1756 = vmul.f32 %v1501, 1.442695
      %v1757 = vpow.pop %v1756
      %v1758 = vadd.f32 %v1503, 1.0
      %v1759 = vadd.f32 %v1505, 1.0
      %v1760 = vadd.f32 %v1507, 1.0
      %v1761 = vadd.f32 %v1509, 1.0
      %v1762 = vadd.f32 %v1511, 1.0
      %v1763 = vadd.f32 %v1513, 1.0
      %v1764 = vadd.f32 %v1515, 1.0
      %v1765 = vadd.f32 %v1517, 1.0
      %v1766 = vadd.f32 %v1519, 1.0
      %v1767 = vadd.f32 %v1521, 1.0
      %v1768 = vadd.f32 %v1523, 1.0
      %v1769 = vadd.f32 %v1525, 1.0
      %v1770 = vadd.f32 %v1527, 1.0
      %v1771 = vadd.f32 %v1529, 1.0
      %v1772 = vadd.f32 %v1531, 1.0
      %v1773 = vadd.f32 %v1533, 1.0
      %v1774 = vadd.f32 %v1535, 1.0
      %v1775 = vadd.f32 %v1537, 1.0
      %v1776 = vadd.f32 %v1539, 1.0
      %v1777 = vadd.f32 %v1541, 1.0
      %v1778 = vadd.f32 %v1543, 1.0
      %v1779 = vadd.f32 %v1545, 1.0
      %v1780 = vadd.f32 %v1547, 1.0
      %v1781 = vadd.f32 %v1549, 1.0
      %v1782 = vadd.f32 %v1551, 1.0
      %v1783 = vadd.f32 %v1553, 1.0
      %v1784 = vadd.f32 %v1555, 1.0
      %v1785 = vadd.f32 %v1557, 1.0
      %v1786 = vadd.f32 %v1559, 1.0
      %v1787 = vadd.f32 %v1561, 1.0
      %v1788 = vadd.f32 %v1563, 1.0
      %v1789 = vadd.f32 %v1565, 1.0
      %v1790 = vadd.f32 %v1567, 1.0
      %v1791 = vadd.f32 %v1569, 1.0
      %v1792 = vadd.f32 %v1571, 1.0
      %v1793 = vadd.f32 %v1573, 1.0
      %v1794 = vadd.f32 %v1575, 1.0
      %v1795 = vadd.f32 %v1577, 1.0
      %v1796 = vadd.f32 %v1579, 1.0
      %v1797 = vadd.f32 %v1581, 1.0
      %v1798 = vadd.f32 %v1583, 1.0
      %v1799 = vadd.f32 %v1585, 1.0
      %v1800 = vadd.f32 %v1587, 1.0
      %v1801 = vadd.f32 %v1589, 1.0
      %v1802 = vadd.f32 %v1591, 1.0
      %v1803 = vadd.f32 %v1593, 1.0
      %v1804 = vadd.f32 %v1595, 1.0
      %v1805 = vadd.f32 %v1597, 1.0
      %v1806 = vadd.f32 %v1599, 1.0
      %v1807 = vadd.f32 %v1601, 1.0
      %v1808 = vadd.f32 %v1603, 1.0
      %v1809 = vadd.f32 %v1605, 1.0
      %v1810 = vadd.f32 %v1607, 1.0
      %v1811 = vadd.f32 %v1609, 1.0
      %v1812 = vadd.f32 %v1611, 1.0
      %v1813 = vadd.f32 %v1613, 1.0
      %v1814 = vadd.f32 %v1615, 1.0
      %v1815 = vadd.f32 %v1617, 1.0
      %v1816 = vadd.f32 %v1619, 1.0
      %v1817 = vadd.f32 %v1621, 1.0
      %v1818 = vadd.f32 %v1623, 1.0
      %v1819 = vadd.f32 %v1625, 1.0
      %v1820 = vadd.f32 %v1627, 1.0
      %v1821 = vadd.f32 %v1629, 1.0
      %v1822 = vadd.f32 %v1631, 1.0
      %v1823 = vadd.f32 %v1633, 1.0
      %v1824 = vadd.f32 %v1635, 1.0
      %v1825 = vadd.f32 %v1637, 1.0
      %v1826 = vadd.f32 %v1639, 1.0
      %v1827 = vadd.f32 %v1641, 1.0
      %v1828 = vadd.f32 %v1643, 1.0
      %v1829 = vadd.f32 %v1645, 1.0
      %v1830 = vadd.f32 %v1647, 1.0
      %v1831 = vadd.f32 %v1649, 1.0
      %v1832 = vadd.f32 %v1651, 1.0
      %v1833 = vadd.f32 %v1653, 1.0
      %v1834 = vadd.f32 %v1655, 1.0
      %v1835 = vadd.f32 %v1657, 1.0
      %v1836 = vadd.f32 %v1659, 1.0
      %v1837 = vadd.f32 %v1661, 1.0
      %v1838 = vadd.f32 %v1663, 1.0
      %v1839 = vadd.f32 %v1665, 1.0
      %v1840 = vadd.f32 %v1667, 1.0
      %v1841 = vadd.f32 %v1669, 1.0
      %v1842 = vadd.f32 %v1671, 1.0
      %v1843 = vadd.f32 %v1673, 1.0
      %v1844 = vadd.f32 %v1675, 1.0
      %v1845 = vadd.f32 %v1677, 1.0
      %v1846 = vadd.f32 %v1679, 1.0
      %v1847 = vadd.f32 %v1681, 1.0
      %v1848 = vadd.f32 %v1683, 1.0
      %v1849 = vadd.f32 %v1685, 1.0
      %v1850 = vadd.f32 %v1687, 1.0
      %v1851 = vadd.f32 %v1689, 1.0
      %v1852 = vadd.f32 %v1691, 1.0
      %v1853 = vadd.f32 %v1693, 1.0
      %v1854 = vadd.f32 %v1695, 1.0
      %v1855 = vadd.f32 %v1697, 1.0
      %v1856 = vadd.f32 %v1699, 1.0
      %v1857 = vadd.f32 %v1701, 1.0
      %v1858 = vadd.f32 %v1703, 1.0
      %v1859 = vadd.f32 %v1705, 1.0
      %v1860 = vadd.f32 %v1707, 1.0
      %v1861 = vadd.f32 %v1709, 1.0
      %v1862 = vadd.f32 %v1711, 1.0
      %v1863 = vadd.f32 %v1713, 1.0
      %v1864 = vadd.f32 %v1715, 1.0
      %v1865 = vadd.f32 %v1717, 1.0
      %v1866 = vadd.f32 %v1719, 1.0
      %v1867 = vadd.f32 %v1721, 1.0
      %v1868 = vadd.f32 %v1723, 1.0
      %v1869 = vadd.f32 %v1725, 1.0
      %v1870 = vadd.f32 %v1727, 1.0
      %v1871 = vadd.f32 %v1729, 1.0
      %v1872 = vadd.f32 %v1731, 1.0
      %v1873 = vadd.f32 %v1733, 1.0
      %v1874 = vadd.f32 %v1735, 1.0
      %v1875 = vadd.f32 %v1737, 1.0
      %v1876 = vadd.f32 %v1739, 1.0
      %v1877 = vadd.f32 %v1741, 1.0
      %v1878 = vadd.f32 %v1743, 1.0
      %v1879 = vadd.f32 %v1745, 1.0
      %v1880 = vadd.f32 %v1747, 1.0
      %v1881 = vadd.f32 %v1749, 1.0
      %v1882 = vadd.f32 %v1751, 1.0
      %v1883 = vadd.f32 %v1753, 1.0
      %v1884 = vadd.f32 %v1755, 1.0
      %v1885 = vadd.f32 %v1757, 1.0
      %v1886 = vrcp.pop %v1758
      %v1887 = vrcp.pop %v1759
      %v1888 = vrcp.pop %v1760
      %v1889 = vrcp.pop %v1761
      %v1890 = vrcp.pop %v1762
      %v1891 = vrcp.pop %v1763
      %v1892 = vrcp.pop %v1764
      %v1893 = vrcp.pop %v1765
      %v1894 = vrcp.pop %v1766
      %v1895 = vrcp.pop %v1767
      %v1896 = vrcp.pop %v1768
      %v1897 = vrcp.pop %v1769
      %v1898 = vrcp.pop %v1770
      %v1899 = vrcp.pop %v1771
      %v1900 = vrcp.pop %v1772
      %v1901 = vrcp.pop %v1773
      %v1902 = vrcp.pop %v1774
      %v1903 = vrcp.pop %v1775
      %v1904 = vrcp.pop %v1776
      %v1905 = vrcp.pop %v1777
      %v1906 = vrcp.pop %v1778
      %v1907 = vrcp.pop %v1779
      %v1908 = vrcp.pop %v1780
      %v1909 = vrcp.pop %v1781
      %v1910 = vrcp.pop %v1782
      %v1911 = vrcp.pop %v1783
      %v1912 = vrcp.pop %v1784
      %v1913 = vrcp.pop %v1785
      %v1914 = vrcp.pop %v1786
      %v1915 = vrcp.pop %v1787
      %v1916 = vrcp.pop %v1788
      %v1917 = vrcp.pop %v1789
      %v1918 = vrcp.pop %v1790
      %v1919 = vrcp.pop %v1791
      %v1920 = vrcp.pop %v1792
      %v1921 = vrcp.pop %v1793
      %v1922 = vrcp.pop %v1794
      %v1923 = vrcp.pop %v1795
      %v1924 = vrcp.pop %v1796
      %v1925 = vrcp.pop %v1797
      %v1926 = vrcp.pop %v1798
      %v1927 = vrcp.pop %v1799
      %v1928 = vrcp.pop %v1800
      %v1929 = vrcp.pop %v1801
      %v1930 = vrcp.pop %v1802
      %v1931 = vrcp.pop %v1803
      %v1932 = vrcp.pop %v1804
      %v1933 = vrcp.pop %v1805
      %v1934 = vrcp.pop %v1806
      %v1935 = vrcp.pop %v1807
      %v1936 = vrcp.pop %v1808
      %v1937 = vrcp.pop %v1809
      %v1938 = vrcp.pop %v1810
      %v1939 = vrcp.pop %v1811
      %v1940 = vrcp.pop %v1812
      %v1941 = vrcp.pop %v1813
      %v1942 = vrcp.pop %v1814
      %v1943 = vrcp.pop %v1815
      %v1944 = vrcp.pop %v1816
      %v1945 = vrcp.pop %v1817
      %v1946 = vrcp.pop %v1818
      %v1947 = vrcp.pop %v1819
      %v1948 = vrcp.pop %v1820
      %v1949 = vrcp.pop %v1821
      %v1950 = vrcp.pop %v1822
      %v1951 = vrcp.pop %v1823
      %v1952 = vrcp.pop %v1824
      %v1953 = vrcp.pop %v1825
      %v1954 = vrcp.pop %v1826
      %v1955 = vrcp.pop %v1827
      %v1956 = vrcp.pop %v1828
      %v1957 = vrcp.pop %v1829
      %v1958 = vrcp.pop %v1830
      %v1959 = vrcp.pop %v1831
      %v1960 = vrcp.pop %v1832
      %v1961 = vrcp.pop %v1833
      %v1962 = vrcp.pop %v1834
      %v1963 = vrcp.pop %v1835
      %v1964 = vrcp.pop %v1836
      %v1965 = vrcp.pop %v1837
      %v1966 = vrcp.pop %v1838
      %v1967 = vrcp.pop %v1839
      %v1968 = vrcp.pop %v1840
      %v1969 = vrcp.pop %v1841
      %v1970 = vrcp.pop %v1842
      %v1971 = vrcp.pop %v1843
      %v1972 = vrcp.pop %v1844
      %v1973 = vrcp.pop %v1845
      %v1974 = vrcp.pop %v1846
      %v1975 = vrcp.pop %v1847
      %v1976 = vrcp.pop %v1848
      %v1977 = vrcp.pop %v1849
      %v1978 = vrcp.pop %v1850
      %v1979 = vrcp.pop %v1851
      %v1980 = vrcp.pop %v1852
      %v1981 = vrcp.pop %v1853
      %v1982 = vrcp.pop %v1854
      %v1983 = vrcp.pop %v1855
      %v1984 = vrcp.pop %v1856
      %v1985 = vrcp.pop %v1857
      %v1986 = vrcp.pop %v1858
      %v1987 = vrcp.pop %v1859
      %v1988 = vrcp.pop %v1860
      %v1989 = vrcp.pop %v1861
      %v1990 = vrcp.pop %v1862
      %v1991 = vrcp.pop %v1863
      %v1992 = vrcp.pop %v1864
      %v1993 = vrcp.pop %v1865
      %v1994 = vrcp.pop %v1866
      %v1995 = vrcp.pop %v1867
      %v1996 = vrcp.pop %v1868
      %v1997 = vrcp.pop %v1869
      %v1998 = vrcp.pop %v1870
      %v1999 = vrcp.pop %v1871
      %v2000 = vrcp.pop %v1872
      %v2001 = vrcp.pop %v1873
      %v2002 = vrcp.pop %v1874
      %v2003 = vrcp.pop %v1875
      %v2004 = vrcp.pop %v1876
      %v2005 = vrcp.pop %v1877
      %v2006 = vrcp.pop %v1878
      %v2007 = vrcp.pop %v1879
      %v2008 = vrcp.pop %v1880
      %v2009 = vrcp.pop %v1881
      %v2010 = vrcp.pop %v1882
      %v2011 = vrcp.pop %v1883
      %v2012 = vrcp.pop %v1884
      %v2013 = vrcp.pop %v1885
      %v2014 = vmul.f32 %v1023, %v1886
      %v2015 = vmul.f32 %v1025, %v1887
      %v2016 = vmul.f32 %v1216, %v1888
      %v2017 = vmul.f32 %v1218, %v1889
      %v2018 = vmul.f32 %v1027, %v1890
      %v2019 = vmul.f32 %v1029, %v1891
      %v2020 = vmul.f32 %v1220, %v1892
      %v2021 = vmul.f32 %v1222, %v1893
      %v2022 = vmul.f32 %v1033, %v1894
      %v2023 = vmul.f32 %v1035, %v1895
      %v2024 = vmul.f32 %v1226, %v1896
      %v2025 = vmul.f32 %v1228, %v1897
      %v2026 = vmul.f32 %v1037, %v1898
      %v2027 = vmul.f32 %v1039, %v1899
      %v2028 = vmul.f32 %v1230, %v1900
      %v2029 = vmul.f32 %v1232, %v1901
      %v2030 = vmul.f32 %v1043, %v1902
      %v2031 = vmul.f32 %v1045, %v1903
      %v2032 = vmul.f32 %v1236, %v1904
      %v2033 = vmul.f32 %v1238, %v1905
      %v2034 = vmul.f32 %v1047, %v1906
      %v2035 = vmul.f32 %v1049, %v1907
      %v2036 = vmul.f32 %v1240, %v1908
      %v2037 = vmul.f32 %v1242, %v1909
      %v2038 = vmul.f32 %v1053, %v1910
      %v2039 = vmul.f32 %v1055, %v1911
      %v2040 = vmul.f32 %v1246, %v1912
      %v2041 = vmul.f32 %v1248, %v1913
      %v2042 = vmul.f32 %v1057, %v1914
      %v2043 = vmul.f32 %v1059, %v1915
      %v2044 = vmul.f32 %v1250, %v1916
      %v2045 = vmul.f32 %v1252, %v1917
      %v2046 = vmul.f32 %v1063, %v1918
      %v2047 = vmul.f32 %v1065, %v1919
      %v2048 = vmul.f32 %v1256, %v1920
      %v2049 = vmul.f32 %v1258, %v1921
      %v2050 = vmul.f32 %v1067, %v1922
      %v2051 = vmul.f32 %v1069, %v1923
      %v2052 = vmul.f32 %v1260, %v1924
      %v2053 = vmul.f32 %v1262, %v1925
      %v2054 = vmul.f32 %v1073, %v1926
      %v2055 = vmul.f32 %v1075, %v1927
      %v2056 = vmul.f32 %v1266, %v1928
      %v2057 = vmul.f32 %v1268, %v1929
      %v2058 = vmul.f32 %v1077, %v1930
      %v2059 = vmul.f32 %v1079, %v1931
      %v2060 = vmul.f32 %v1270, %v1932
      %v2061 = vmul.f32 %v1272, %v1933
      %v2062 = vmul.f32 %v1083, %v1934
      %v2063 = vmul.f32 %v1085, %v1935
      %v2064 = vmul.f32 %v1276, %v1936
      %v2065 = vmul.f32 %v1278, %v1937
      %v2066 = vmul.f32 %v1087, %v1938
      %v2067 = vmul.f32 %v1089, %v1939
      %v2068 = vmul.f32 %v1280, %v1940
      %v2069 = vmul.f32 %v1282, %v1941
      %v2070 = vmul.f32 %v1093, %v1942
      %v2071 = vmul.f32 %v1095, %v1943
      %v2072 = vmul.f32 %v1286, %v1944
      %v2073 = vmul.f32 %v1288, %v1945
      %v2074 = vmul.f32 %v1097, %v1946
      %v2075 = vmul.f32 %v1099, %v1947
      %v2076 = vmul.f32 %v1290, %v1948
      %v2077 = vmul.f32 %v1292, %v1949
      %v2078 = vmul.f32 %v1103, %v1950
      %v2079 = vmul.f32 %v1105, %v1951
      %v2080 = vmul.f32 %v1296, %v1952
      %v2081 = vmul.f32 %v1298, %v1953
      %v2082 = vmul.f32 %v1107, %v1954
      %v2083 = vmul.f32 %v1109, %v1955
      %v2084 = vmul.f32 %v1300, %v1956
      %v2085 = vmul.f32 %v1302, %v1957
      %v2086 = vmul.f32 %v1113, %v1958
      %v2087 = vmul.f32 %v1115, %v1959
      %v2088 = vmul.f32 %v1306, %v1960
      %v2089 = vmul.f32 %v1308, %v1961
      %v2090 = vmul.f32 %v1117, %v1962
      %v2091 = vmul.f32 %v1119, %v1963
      %v2092 = vmul.f32 %v1310, %v1964
      %v2093 = vmul.f32 %v1312, %v1965
      %v2094 = vmul.f32 %v1123, %v1966
      %v2095 = vmul.f32 %v1125, %v1967
      %v2096 = vmul.f32 %v1316, %v1968
      %v2097 = vmul.f32 %v1318, %v1969
      %v2098 = vmul.f32 %v1127, %v1970
      %v2099 = vmul.f32 %v1129, %v1971
      %v2100 = vmul.f32 %v1320, %v1972
      %v2101 = vmul.f32 %v1322, %v1973
      %v2102 = vmul.f32 %v1133, %v1974
      %v2103 = vmul.f32 %v1135, %v1975
      %v2104 = vmul.f32 %v1326, %v1976
      %v2105 = vmul.f32 %v1328, %v1977
      %v2106 = vmul.f32 %v1137, %v1978
      %v2107 = vmul.f32 %v1139, %v1979
      %v2108 = vmul.f32 %v1330, %v1980
      %v2109 = vmul.f32 %v1332, %v1981
      %v2110 = vmul.f32 %v1143, %v1982
      %v2111 = vmul.f32 %v1145, %v1983
      %v2112 = vmul.f32 %v1336, %v1984
      %v2113 = vmul.f32 %v1338, %v1985
      %v2114 = vmul.f32 %v1147, %v1986
      %v2115 = vmul.f32 %v1149, %v1987
      %v2116 = vmul.f32 %v1340, %v1988
      %v2117 = vmul.f32 %v1342, %v1989
      %v2118 = vmul.f32 %v1153, %v1990
      %v2119 = vmul.f32 %v1155, %v1991
      %v2120 = vmul.f32 %v1346, %v1992
      %v2121 = vmul.f32 %v1348, %v1993
      %v2122 = vmul.f32 %v1157, %v1994
      %v2123 = vmul.f32 %v1159, %v1995
      %v2124 = vmul.f32 %v1350, %v1996
      %v2125 = vmul.f32 %v1352, %v1997
      %v2126 = vmul.f32 %v1163, %v1998
      %v2127 = vmul.f32 %v1165, %v1999
      %v2128 = vmul.f32 %v1356, %v2000
      %v2129 = vmul.f32 %v1358, %v2001
      %v2130 = vmul.f32 %v1167, %v2002
      %v2131 = vmul.f32 %v1169, %v2003
      %v2132 = vmul.f32 %v1360, %v2004
      %v2133 = vmul.f32 %v1362, %v2005
      %v2134 = vmul.f32 %v1173, %v2006
      %v2135 = vmul.f32 %v1175, %v2007
      %v2136 = vmul.f32 %v1366, %v2008
      %v2137 = vmul.f32 %v1368, %v2009
      %v2138 = vmul.f32 %v1177, %v2010
      %v2139 = vmul.f32 %v1179, %v2011
      %v2140 = vmul.f32 %v1370, %v2012
      %v2141 = vmul.f32 %v1372, %v2013
      %2142 = vmatprep.subr.mxu0 %v2075
      %2143 = vmatpush1.msra.mxu0 %v2074
      %2144 = vmatprep.subr.mxu0 %v2071
      %2145 = vmatpush1.msra.mxu0 %v2070
      %2146 = vmatprep.subr.mxu0 %v2067
      %2147 = vmatpush1.msra.mxu0 %v2066
      %2148 = vmatprep.subr.mxu0 %v2063
      %2149 = vmatpush1.msra.mxu0 %v2062
      %2150 = vmatprep.subr.mxu0 %v2059
      %2151 = vmatpush1.msra.mxu0 %v2058
      %2152 = vmatprep.subr.mxu0 %v2055
      %2153 = vmatpush1.msra.mxu0 %v2054
      %2154 = vmatprep.subr.mxu0 %v2051
      %2155 = vmatpush1.msra.mxu0 %v2050
      %2156 = vmatprep.subr.mxu0 %v2047
      %2157 = vmatpush1.msra.mxu0 %v2046
      %2158 = vmatprep.subr.mxu0 %v2043
      %2159 = vmatpush1.msra.mxu0 %v2042
      %2160 = vmatprep.subr.mxu0 %v2039
      %2161 = vmatpush1.msra.mxu0 %v2038
      %2162 = vmatprep.subr.mxu0 %v2035
      %2163 = vmatpush1.msra.mxu0 %v2034
      %2164 = vmatprep.subr.mxu0 %v2031
      %2165 = vmatpush1.msra.mxu0 %v2030
      %2166 = vmatprep.subr.mxu0 %v2027
      %2167 = vmatpush1.msra.mxu0 %v2026
      %2168 = vmatprep.subr.mxu0 %v2023
      %2169 = vmatpush1.msra.mxu0 %v2022
      %2170 = vmatprep.subr.mxu0 %v2019
      %2171 = vmatpush1.msra.mxu0 %v2018
      %2172 = vmatprep.subr.mxu0 %v2015
      %2173 = vmatpush1.msra.mxu0 %v2014
      %2174 = vmatprep.subr.mxu0 %v2139
      %2175 = vmatpush2.msra.mxu0 %v2138
      %2176 = vmatprep.subr.mxu0 %v2135
      %2177 = vmatpush2.msra.mxu0 %v2134
      %2178 = vmatprep.subr.mxu0 %v2131
      %2179 = vmatpush2.msra.mxu0 %v2130
      %2180 = vmatprep.subr.mxu0 %v2127
      %2181 = vmatpush2.msra.mxu0 %v2126
      %2182 = vmatprep.subr.mxu0 %v2123
      %2183 = vmatpush2.msra.mxu0 %v2122
      %2184 = vmatprep.subr.mxu0 %v2119
      %2185 = vmatpush2.msra.mxu0 %v2118
      %2186 = vmatprep.subr.mxu0 %v2115
      %2187 = vmatpush2.msra.mxu0 %v2114
      %2188 = vmatprep.subr.mxu0 %v2111
      %2189 = vmatpush2.msra.mxu0 %v2110
      %2190 = vmatprep.subr.mxu0 %v2107
      %2191 = vmatpush2.msra.mxu0 %v2106
      %2192 = vmatprep.subr.mxu0 %v2103
      %2193 = vmatpush2.msra.mxu0 %v2102
      %2194 = vmatprep.subr.mxu0 %v2099
      %2195 = vmatpush2.msra.mxu0 %v2098
      %2196 = vmatprep.subr.mxu0 %v2095
      %2197 = vmatpush2.msra.mxu0 %v2094
      %2198 = vmatprep.subr.mxu0 %v2091
      %2199 = vmatpush2.msra.mxu0 %v2090
      %2200 = vmatprep.subr.mxu0 %v2087
      %2201 = vmatpush2.msra.mxu0 %v2086
      %2202 = vmatprep.subr.mxu0 %v2083
      %2203 = vmatpush2.msra.mxu0 %v2082
      %2204 = vmatprep.subr.mxu0 %v2079
      %2205 = vmatpush2.msra.mxu0 %v2078
      %2206 = vmatprep.mubr.f32.mxu0 %v820
      %2207 = vmatmul.mubr.f32.gmra.mxu0 %v819
      %v2208 = vpop.f32.mrf.mxu0
      %v2209 = vadd.f32 0.0, %v2208
      %v2210 = vpop.f32.mrf.mxu0
      %v2211 = vadd.f32 0.0, %v2210
      %2212 = vdwg.mxu0
      %2213 = vmatprep.subr.mxu0 %v2077
      %2214 = vmatpush1.msra.mxu0 %v2076
      %2215 = vmatprep.subr.mxu0 %v2073
      %2216 = vmatpush1.msra.mxu0 %v2072
      %2217 = vmatprep.subr.mxu0 %v2069
      %2218 = vmatpush1.msra.mxu0 %v2068
      %2219 = vmatprep.subr.mxu0 %v2065
      %2220 = vmatpush1.msra.mxu0 %v2064
      %2221 = vmatprep.subr.mxu0 %v2061
      %2222 = vmatpush1.msra.mxu0 %v2060
      %2223 = vmatprep.subr.mxu0 %v2057
      %2224 = vmatpush1.msra.mxu0 %v2056
      %2225 = vmatprep.subr.mxu0 %v2053
      %2226 = vmatpush1.msra.mxu0 %v2052
      %2227 = vmatprep.subr.mxu0 %v2049
      %2228 = vmatpush1.msra.mxu0 %v2048
      %2229 = vmatprep.subr.mxu0 %v2045
      %2230 = vmatpush1.msra.mxu0 %v2044
      %2231 = vmatprep.subr.mxu0 %v2041
      %2232 = vmatpush1.msra.mxu0 %v2040
      %2233 = vmatprep.subr.mxu0 %v2037
      %2234 = vmatpush1.msra.mxu0 %v2036
      %2235 = vmatprep.subr.mxu0 %v2033
      %2236 = vmatpush1.msra.mxu0 %v2032
      %2237 = vmatprep.subr.mxu0 %v2029
      %2238 = vmatpush1.msra.mxu0 %v2028
      %2239 = vmatprep.subr.mxu0 %v2025
      %2240 = vmatpush1.msra.mxu0 %v2024
      %2241 = vmatprep.subr.mxu0 %v2021
      %2242 = vmatpush1.msra.mxu0 %v2020
      %2243 = vmatprep.subr.mxu0 %v2017
      %2244 = vmatpush1.msra.mxu0 %v2016
      %2245 = vmatprep.subr.mxu0 %v2141
      %2246 = vmatpush2.msra.mxu0 %v2140
      %2247 = vmatprep.subr.mxu0 %v2137
      %2248 = vmatpush2.msra.mxu0 %v2136
      %2249 = vmatprep.subr.mxu0 %v2133
      %2250 = vmatpush2.msra.mxu0 %v2132
      %2251 = vmatprep.subr.mxu0 %v2129
      %2252 = vmatpush2.msra.mxu0 %v2128
      %2253 = vmatprep.subr.mxu0 %v2125
      %2254 = vmatpush2.msra.mxu0 %v2124
      %2255 = vmatprep.subr.mxu0 %v2121
      %2256 = vmatpush2.msra.mxu0 %v2120
      %2257 = vmatprep.subr.mxu0 %v2117
      %2258 = vmatpush2.msra.mxu0 %v2116
      %2259 = vmatprep.subr.mxu0 %v2113
      %2260 = vmatpush2.msra.mxu0 %v2112
      %2261 = vmatprep.subr.mxu0 %v2109
      %2262 = vmatpush2.msra.mxu0 %v2108
      %2263 = vmatprep.subr.mxu0 %v2105
      %2264 = vmatpush2.msra.mxu0 %v2104
      %2265 = vmatprep.subr.mxu0 %v2101
      %2266 = vmatpush2.msra.mxu0 %v2100
      %2267 = vmatprep.subr.mxu0 %v2097
      %2268 = vmatpush2.msra.mxu0 %v2096
      %2269 = vmatprep.subr.mxu0 %v2093
      %2270 = vmatpush2.msra.mxu0 %v2092
      %2271 = vmatprep.subr.mxu0 %v2089
      %2272 = vmatpush2.msra.mxu0 %v2088
      %2273 = vmatprep.subr.mxu0 %v2085
      %2274 = vmatpush2.msra.mxu0 %v2084
      %2275 = vmatprep.subr.mxu0 %v2081
      %2276 = vmatpush2.msra.mxu0 %v2080
      %2277 = vmatprep.mubr.f32.mxu0 %v820
      %2278 = vmatmul.mubr.f32.gmra.mxu0 %v819
      %v2279 = vpop.f32.mrf.mxu0
      %v2280 = vadd.f32 0.0, %v2279
      %v2281 = vpop.f32.mrf.mxu0
      %v2282 = vadd.f32 0.0, %v2281
      %2283 = vdwg.mxu0
      %v2284 = vld [vmem:[%s3 + $0x10] sm:$0xff]
      %v2285 = vld [vmem:[%s3 + $0x18] sm:$0xff]
      %v2286 = vld [vmem:[%s3 + $0x50] sm:$0xff]
      %v2287 = vld [vmem:[%s3 + $0x58] sm:$0xff]
      %v2288 = vld [vmem:[%s3 + $0x90] sm:$0xff]
      %v2289 = vld [vmem:[%s3 + $0x98] sm:$0xff]
      %v2290 = vld [vmem:[%s3 + $0xd0] sm:$0xff]
      %v2291 = vld [vmem:[%s3 + $0xd8] sm:$0xff]
      %v2292 = vld [vmem:[%s3 + $0x110] sm:$0xff]
      %v2293 = vld [vmem:[%s3 + $0x118] sm:$0xff]
      %v2294 = vld [vmem:[%s3 + $0x150] sm:$0xff]
      %v2295 = vld [vmem:[%s3 + $0x158] sm:$0xff]
      %v2296 = vld [vmem:[%s3 + $0x190] sm:$0xff]
      %v2297 = vld [vmem:[%s3 + $0x198] sm:$0xff]
      %v2298 = vld [vmem:[%s3 + $0x1d0] sm:$0xff]
      %v2299 = vld [vmem:[%s3 + $0x1d8] sm:$0xff]
      %v2300 = vld [vmem:[%s4 + $0x4] sm:$0xf]
      %v2302 = vlaneseq
      %v2303 = vshrl.u32 %v2302, 7
      %v2304 = vsub.s32 0, %v2303
      %v2305 = vrot.slane %v2300, %v2304
      %v2306 = vlaneseq
      %v2307 = vshrl.u32 %v2306, 7
      %v2308 = vsub.s32 1, %v2307
      %v2309 = vrot.slane %v2300, %v2308
      %v2310 = vlaneseq
      %v2311 = vshrl.u32 %v2310, 7
      %v2312 = vsub.s32 2, %v2311
      %v2313 = vrot.slane %v2300, %v2312
      %v2314 = vlaneseq
      %v2315 = vshrl.u32 %v2314, 7
      %v2316 = vsub.s32 3, %v2315
      %v2317 = vrot.slane %v2300, %v2316
      %v2338 = vunpack.c.l.b16 %v2284
      %v2339 = vunpack.c.h.b16 %v2284
      %v2340 = vunpack.c.l.b16 %v2285
      %v2341 = vunpack.c.h.b16 %v2285
      %v2342 = vunpack.c.l.b16 %v2286
      %v2343 = vunpack.c.h.b16 %v2286
      %v2344 = vunpack.c.l.b16 %v2287
      %v2345 = vunpack.c.h.b16 %v2287
      %v2346 = vunpack.c.l.b16 %v2288
      %v2347 = vunpack.c.h.b16 %v2288
      %v2348 = vunpack.c.l.b16 %v2289
      %v2349 = vunpack.c.h.b16 %v2289
      %v2350 = vunpack.c.l.b16 %v2290
      %v2351 = vunpack.c.h.b16 %v2290
      %v2352 = vunpack.c.l.b16 %v2291
      %v2353 = vunpack.c.h.b16 %v2291
      %v2354 = vunpack.c.l.b16 %v2292
      %v2355 = vunpack.c.h.b16 %v2292
      %v2356 = vunpack.c.l.b16 %v2293
      %v2357 = vunpack.c.h.b16 %v2293
      %v2358 = vunpack.c.l.b16 %v2294
      %v2359 = vunpack.c.h.b16 %v2294
      %v2360 = vunpack.c.l.b16 %v2295
      %v2361 = vunpack.c.h.b16 %v2295
      %v2362 = vunpack.c.l.b16 %v2296
      %v2363 = vunpack.c.h.b16 %v2296
      %v2364 = vunpack.c.l.b16 %v2297
      %v2365 = vunpack.c.h.b16 %v2297
      %v2366 = vunpack.c.l.b16 %v2298
      %v2367 = vunpack.c.h.b16 %v2298
      %v2368 = vunpack.c.l.b16 %v2299
      %v2369 = vunpack.c.h.b16 %v2299
      %v2370 = vpack.c.b16 %v2342, %v2338
      %v2371 = vpack.c.b16 %v2343, %v2339
      %v2372 = vpack.c.b16 %v2344, %v2340
      %v2373 = vpack.c.b16 %v2345, %v2341
      %v2374 = vpack.c.b16 %v2350, %v2346
      %v2375 = vpack.c.b16 %v2351, %v2347
      %v2376 = vpack.c.b16 %v2352, %v2348
      %v2377 = vpack.c.b16 %v2353, %v2349
      %v2378 = vpack.c.b16 %v2358, %v2354
      %v2379 = vpack.c.b16 %v2359, %v2355
      %v2380 = vpack.c.b16 %v2360, %v2356
      %v2381 = vpack.c.b16 %v2361, %v2357
      %v2382 = vpack.c.b16 %v2366, %v2362
      %v2383 = vpack.c.b16 %v2367, %v2363
      %v2384 = vpack.c.b16 %v2368, %v2364
      %v2385 = vpack.c.b16 %v2369, %v2365
      %2402 = vmatprep.subr.bf16.mxu0 0
      %2403 = vmatpush1.bf16.msra.mxu0 0
      %2404 = vmatprep.subr.bf16.mxu0 0
      %2405 = vmatpush1.bf16.msra.mxu0 0
      %2406 = vmatprep.subr.bf16.mxu0 0
      %2407 = vmatpush1.bf16.msra.mxu0 0
      %2408 = vmatprep.subr.bf16.mxu0 0
      %2409 = vmatpush1.bf16.msra.mxu0 0
      %2410 = vmatprep.subr.bf16.mxu0 %v2383
      %2411 = vmatpush1.bf16.msra.mxu0 %v2382
      %2412 = vmatprep.subr.bf16.mxu0 %v2379
      %2413 = vmatpush1.bf16.msra.mxu0 %v2378
      %2414 = vmatprep.subr.bf16.mxu0 %v2375
      %2415 = vmatpush1.bf16.msra.mxu0 %v2374
      %2416 = vmatprep.subr.bf16.mxu0 %v2371
      %2417 = vmatpush1.bf16.msra.mxu0 %v2370
      %2418 = vmatprep.subr.bf16.mxu0 0
      %2419 = vmatpush2.bf16.msra.mxu0 0
      %2420 = vmatprep.subr.bf16.mxu0 0
      %2421 = vmatpush2.bf16.msra.mxu0 0
      %2422 = vmatprep.subr.bf16.mxu0 0
      %2423 = vmatpush2.bf16.msra.mxu0 0
      %2424 = vmatprep.subr.bf16.mxu0 0
      %2425 = vmatpush2.bf16.msra.mxu0 0
      %2426 = vmatprep.subr.bf16.mxu0 0
      %2427 = vmatpush2.bf16.msra.mxu0 0
      %2428 = vmatprep.subr.bf16.mxu0 0
      %2429 = vmatpush2.bf16.msra.mxu0 0
      %2430 = vmatprep.subr.bf16.mxu0 0
      %2431 = vmatpush2.bf16.msra.mxu0 0
      %2432 = vmatprep.subr.bf16.mxu0 0
      %2433 = vmatpush2.bf16.msra.mxu0 0
      %2434 = vmatprep.mubr.bf16.mxu0 0
      %2435 = vmatmul.mubr.bf16.gmra.mxu0 %v941
      %v2436 = vpop.f32.mrf.mxu0
      %v2437 = vadd.f32 %v2305, %v2436
      %v2438 = vpop.f32.mrf.mxu0
      %v2439 = vadd.f32 %v2309, %v2438
      %v2440 = vpop.f32.mrf.mxu0
      %v2441 = vadd.f32 %v2305, %v2440
      %v2442 = vpop.f32.mrf.mxu0
      %v2443 = vadd.f32 %v2309, %v2442
      %2444 = vmatprep.mubr.bf16.mxu0 0
      %2445 = vmatmul.mubr.bf16.gmra.mxu0 %v944
      %v2446 = vpop.f32.mrf.mxu0
      %v2447 = vadd.f32 %v2305, %v2446
      %v2448 = vpop.f32.mrf.mxu0
      %v2449 = vadd.f32 %v2309, %v2448
      %v2450 = vpop.f32.mrf.mxu0
      %v2451 = vadd.f32 %v2305, %v2450
      %v2452 = vpop.f32.mrf.mxu0
      %v2453 = vadd.f32 %v2309, %v2452
      %2454 = vmatprep.mubr.bf16.mxu0 0
      %2455 = vmatmul.mubr.bf16.gmra.mxu0 %v947
      %v2456 = vpop.f32.mrf.mxu0
      %v2457 = vadd.f32 %v2305, %v2456
      %v2458 = vpop.f32.mrf.mxu0
      %v2459 = vadd.f32 %v2309, %v2458
      %v2460 = vpop.f32.mrf.mxu0
      %v2461 = vadd.f32 %v2305, %v2460
      %v2462 = vpop.f32.mrf.mxu0
      %v2463 = vadd.f32 %v2309, %v2462
      %2464 = vmatprep.mubr.bf16.mxu0 0
      %2465 = vmatmul.mubr.bf16.gmra.mxu0 %v950
      %v2466 = vpop.f32.mrf.mxu0
      %v2467 = vadd.f32 %v2305, %v2466
      %v2468 = vpop.f32.mrf.mxu0
      %v2469 = vadd.f32 %v2309, %v2468
      %v2470 = vpop.f32.mrf.mxu0
      %v2471 = vadd.f32 %v2305, %v2470
      %v2472 = vpop.f32.mrf.mxu0
      %v2473 = vadd.f32 %v2309, %v2472
      %2474 = vmatprep.mubr.bf16.mxu0 0
      %2475 = vmatmul.mubr.bf16.gmra.mxu0 %v953
      %v2476 = vpop.f32.mrf.mxu0
      %v2477 = vadd.f32 %v2305, %v2476
      %v2478 = vpop.f32.mrf.mxu0
      %v2479 = vadd.f32 %v2309, %v2478
      %v2480 = vpop.f32.mrf.mxu0
      %v2481 = vadd.f32 %v2305, %v2480
      %v2482 = vpop.f32.mrf.mxu0
      %v2483 = vadd.f32 %v2309, %v2482
      %2484 = vmatprep.mubr.bf16.mxu0 0
      %2485 = vmatmul.mubr.bf16.gmra.mxu0 %v956
      %v2486 = vpop.f32.mrf.mxu0
      %v2487 = vadd.f32 %v2305, %v2486
      %v2488 = vpop.f32.mrf.mxu0
      %v2489 = vadd.f32 %v2309, %v2488
      %v2490 = vpop.f32.mrf.mxu0
      %v2491 = vadd.f32 %v2305, %v2490
      %v2492 = vpop.f32.mrf.mxu0
      %v2493 = vadd.f32 %v2309, %v2492
      %2494 = vmatprep.mubr.bf16.mxu0 0
      %2495 = vmatmul.mubr.bf16.gmra.mxu0 %v959
      %v2496 = vpop.f32.mrf.mxu0
      %v2497 = vadd.f32 %v2305, %v2496
      %v2498 = vpop.f32.mrf.mxu0
      %v2499 = vadd.f32 %v2309, %v2498
      %v2500 = vpop.f32.mrf.mxu0
      %v2501 = vadd.f32 %v2305, %v2500
      %v2502 = vpop.f32.mrf.mxu0
      %v2503 = vadd.f32 %v2309, %v2502
      %2504 = vmatprep.mubr.bf16.mxu0 0
      %2505 = vmatmul.mubr.bf16.gmra.mxu0 %v962
      %v2506 = vpop.f32.mrf.mxu0
      %v2507 = vadd.f32 %v2305, %v2506
      %v2508 = vpop.f32.mrf.mxu0
      %v2509 = vadd.f32 %v2309, %v2508
      %v2510 = vpop.f32.mrf.mxu0
      %v2511 = vadd.f32 %v2305, %v2510
      %v2512 = vpop.f32.mrf.mxu0
      %v2513 = vadd.f32 %v2309, %v2512
      %2514 = vmatprep.mubr.bf16.mxu0 0
      %2515 = vmatmul.mubr.bf16.gmra.mxu0 %v965
      %v2516 = vpop.f32.mrf.mxu0
      %v2517 = vadd.f32 %v2305, %v2516
      %v2518 = vpop.f32.mrf.mxu0
      %v2519 = vadd.f32 %v2309, %v2518
      %v2520 = vpop.f32.mrf.mxu0
      %v2521 = vadd.f32 %v2305, %v2520
      %v2522 = vpop.f32.mrf.mxu0
      %v2523 = vadd.f32 %v2309, %v2522
      %2524 = vmatprep.mubr.bf16.mxu0 0
      %2525 = vmatmul.mubr.bf16.gmra.mxu0 %v968
      %v2526 = vpop.f32.mrf.mxu0
      %v2527 = vadd.f32 %v2305, %v2526
      %v2528 = vpop.f32.mrf.mxu0
      %v2529 = vadd.f32 %v2309, %v2528
      %v2530 = vpop.f32.mrf.mxu0
      %v2531 = vadd.f32 %v2305, %v2530
      %v2532 = vpop.f32.mrf.mxu0
      %v2533 = vadd.f32 %v2309, %v2532
      %2534 = vmatprep.mubr.bf16.mxu0 0
      %2535 = vmatmul.mubr.bf16.gmra.mxu0 %v971
      %v2536 = vpop.f32.mrf.mxu0
      %v2537 = vadd.f32 %v2305, %v2536
      %v2538 = vpop.f32.mrf.mxu0
      %v2539 = vadd.f32 %v2309, %v2538
      %v2540 = vpop.f32.mrf.mxu0
      %v2541 = vadd.f32 %v2305, %v2540
      %v2542 = vpop.f32.mrf.mxu0
      %v2543 = vadd.f32 %v2309, %v2542
      %2544 = vmatprep.mubr.bf16.mxu0 0
      %2545 = vmatmul.mubr.bf16.gmra.mxu0 %v974
      %v2546 = vpop.f32.mrf.mxu0
      %v2547 = vadd.f32 %v2305, %v2546
      %v2548 = vpop.f32.mrf.mxu0
      %v2549 = vadd.f32 %v2309, %v2548
      %v2550 = vpop.f32.mrf.mxu0
      %v2551 = vadd.f32 %v2305, %v2550
      %v2552 = vpop.f32.mrf.mxu0
      %v2553 = vadd.f32 %v2309, %v2552
      %2554 = vmatprep.mubr.bf16.mxu0 0
      %2555 = vmatmul.mubr.bf16.gmra.mxu0 %v977
      %v2556 = vpop.f32.mrf.mxu0
      %v2557 = vadd.f32 %v2305, %v2556
      %v2558 = vpop.f32.mrf.mxu0
      %v2559 = vadd.f32 %v2309, %v2558
      %v2560 = vpop.f32.mrf.mxu0
      %v2561 = vadd.f32 %v2305, %v2560
      %v2562 = vpop.f32.mrf.mxu0
      %v2563 = vadd.f32 %v2309, %v2562
      %2564 = vmatprep.mubr.bf16.mxu0 0
      %2565 = vmatmul.mubr.bf16.gmra.mxu0 %v980
      %v2566 = vpop.f32.mrf.mxu0
      %v2567 = vadd.f32 %v2305, %v2566
      %v2568 = vpop.f32.mrf.mxu0
      %v2569 = vadd.f32 %v2309, %v2568
      %v2570 = vpop.f32.mrf.mxu0
      %v2571 = vadd.f32 %v2305, %v2570
      %v2572 = vpop.f32.mrf.mxu0
      %v2573 = vadd.f32 %v2309, %v2572
      %2574 = vmatprep.mubr.bf16.mxu0 0
      %2575 = vmatmul.mubr.bf16.gmra.mxu0 %v983
      %v2576 = vpop.f32.mrf.mxu0
      %v2577 = vadd.f32 %v2305, %v2576
      %v2578 = vpop.f32.mrf.mxu0
      %v2579 = vadd.f32 %v2309, %v2578
      %v2580 = vpop.f32.mrf.mxu0
      %v2581 = vadd.f32 %v2305, %v2580
      %v2582 = vpop.f32.mrf.mxu0
      %v2583 = vadd.f32 %v2309, %v2582
      %2584 = vmatprep.mubr.bf16.mxu0 0
      %2585 = vmatmul.mubr.bf16.gmra.mxu0 %v986
      %v2586 = vpop.f32.mrf.mxu0
      %v2587 = vadd.f32 %v2305, %v2586
      %v2588 = vpop.f32.mrf.mxu0
      %v2589 = vadd.f32 %v2309, %v2588
      %v2590 = vpop.f32.mrf.mxu0
      %v2591 = vadd.f32 %v2305, %v2590
      %v2592 = vpop.f32.mrf.mxu0
      %v2593 = vadd.f32 %v2309, %v2592
      %2594 = vdwg.mxu0
      %2595 = vmatprep.subr.bf16.mxu0 0
      %2596 = vmatpush1.bf16.msra.mxu0 0
      %2597 = vmatprep.subr.bf16.mxu0 0
      %2598 = vmatpush1.bf16.msra.mxu0 0
      %2599 = vmatprep.subr.bf16.mxu0 0
      %2600 = vmatpush1.bf16.msra.mxu0 0
      %2601 = vmatprep.subr.bf16.mxu0 0
      %2602 = vmatpush1.bf16.msra.mxu0 0
      %2603 = vmatprep.subr.bf16.mxu0 %v2385
      %2604 = vmatpush1.bf16.msra.mxu0 %v2384
      %2605 = vmatprep.subr.bf16.mxu0 %v2381
      %2606 = vmatpush1.bf16.msra.mxu0 %v2380
      %2607 = vmatprep.subr.bf16.mxu0 %v2377
      %2608 = vmatpush1.bf16.msra.mxu0 %v2376
      %2609 = vmatprep.subr.bf16.mxu0 %v2373
      %2610 = vmatpush1.bf16.msra.mxu0 %v2372
      %2611 = vmatprep.subr.bf16.mxu0 0
      %2612 = vmatpush2.bf16.msra.mxu0 0
      %2613 = vmatprep.subr.bf16.mxu0 0
      %2614 = vmatpush2.bf16.msra.mxu0 0
      %2615 = vmatprep.subr.bf16.mxu0 0
      %2616 = vmatpush2.bf16.msra.mxu0 0
      %2617 = vmatprep.subr.bf16.mxu0 0
      %2618 = vmatpush2.bf16.msra.mxu0 0
      %2619 = vmatprep.subr.bf16.mxu0 0
      %2620 = vmatpush2.bf16.msra.mxu0 0
      %2621 = vmatprep.subr.bf16.mxu0 0
      %2622 = vmatpush2.bf16.msra.mxu0 0
      %2623 = vmatprep.subr.bf16.mxu0 0
      %2624 = vmatpush2.bf16.msra.mxu0 0
      %2625 = vmatprep.subr.bf16.mxu0 0
      %2626 = vmatpush2.bf16.msra.mxu0 0
      %2627 = vmatprep.mubr.bf16.mxu0 0
      %2628 = vmatmul.mubr.bf16.gmra.mxu0 %v941
      %v2629 = vpop.f32.mrf.mxu0
      %v2630 = vadd.f32 %v2313, %v2629
      %v2631 = vpop.f32.mrf.mxu0
      %v2632 = vadd.f32 %v2317, %v2631
      %v2633 = vpop.f32.mrf.mxu0
      %v2634 = vadd.f32 %v2313, %v2633
      %v2635 = vpop.f32.mrf.mxu0
      %v2636 = vadd.f32 %v2317, %v2635
      %2637 = vmatprep.mubr.bf16.mxu0 0
      %2638 = vmatmul.mubr.bf16.gmra.mxu0 %v944
      %v2639 = vpop.f32.mrf.mxu0
      %v2640 = vadd.f32 %v2313, %v2639
      %v2641 = vpop.f32.mrf.mxu0
      %v2642 = vadd.f32 %v2317, %v2641
      %v2643 = vpop.f32.mrf.mxu0
      %v2644 = vadd.f32 %v2313, %v2643
      %v2645 = vpop.f32.mrf.mxu0
      %v2646 = vadd.f32 %v2317, %v2645
      %2647 = vmatprep.mubr.bf16.mxu0 0
      %2648 = vmatmul.mubr.bf16.gmra.mxu0 %v947
      %v2649 = vpop.f32.mrf.mxu0
      %v2650 = vadd.f32 %v2313, %v2649
      %v2651 = vpop.f32.mrf.mxu0
      %v2652 = vadd.f32 %v2317, %v2651
      %v2653 = vpop.f32.mrf.mxu0
      %v2654 = vadd.f32 %v2313, %v2653
      %v2655 = vpop.f32.mrf.mxu0
      %v2656 = vadd.f32 %v2317, %v2655
      %2657 = vmatprep.mubr.bf16.mxu0 0
      %2658 = vmatmul.mubr.bf16.gmra.mxu0 %v950
      %v2659 = vpop.f32.mrf.mxu0
      %v2660 = vadd.f32 %v2313, %v2659
      %v2661 = vpop.f32.mrf.mxu0
      %v2662 = vadd.f32 %v2317, %v2661
      %v2663 = vpop.f32.mrf.mxu0
      %v2664 = vadd.f32 %v2313, %v2663
      %v2665 = vpop.f32.mrf.mxu0
      %v2666 = vadd.f32 %v2317, %v2665
      %2667 = vmatprep.mubr.bf16.mxu0 0
      %2668 = vmatmul.mubr.bf16.gmra.mxu0 %v953
      %v2669 = vpop.f32.mrf.mxu0
      %v2670 = vadd.f32 %v2313, %v2669
      %v2671 = vpop.f32.mrf.mxu0
      %v2672 = vadd.f32 %v2317, %v2671
      %v2673 = vpop.f32.mrf.mxu0
      %v2674 = vadd.f32 %v2313, %v2673
      %v2675 = vpop.f32.mrf.mxu0
      %v2676 = vadd.f32 %v2317, %v2675
      %2677 = vmatprep.mubr.bf16.mxu0 0
      %2678 = vmatmul.mubr.bf16.gmra.mxu0 %v956
      %v2679 = vpop.f32.mrf.mxu0
      %v2680 = vadd.f32 %v2313, %v2679
      %v2681 = vpop.f32.mrf.mxu0
      %v2682 = vadd.f32 %v2317, %v2681
      %v2683 = vpop.f32.mrf.mxu0
      %v2684 = vadd.f32 %v2313, %v2683
      %v2685 = vpop.f32.mrf.mxu0
      %v2686 = vadd.f32 %v2317, %v2685
      %2687 = vmatprep.mubr.bf16.mxu0 0
      %2688 = vmatmul.mubr.bf16.gmra.mxu0 %v959
      %v2689 = vpop.f32.mrf.mxu0
      %v2690 = vadd.f32 %v2313, %v2689
      %v2691 = vpop.f32.mrf.mxu0
      %v2692 = vadd.f32 %v2317, %v2691
      %v2693 = vpop.f32.mrf.mxu0
      %v2694 = vadd.f32 %v2313, %v2693
      %v2695 = vpop.f32.mrf.mxu0
      %v2696 = vadd.f32 %v2317, %v2695
      %2697 = vmatprep.mubr.bf16.mxu0 0
      %2698 = vmatmul.mubr.bf16.gmra.mxu0 %v962
      %v2699 = vpop.f32.mrf.mxu0
      %v2700 = vadd.f32 %v2313, %v2699
      %v2701 = vpop.f32.mrf.mxu0
      %v2702 = vadd.f32 %v2317, %v2701
      %v2703 = vpop.f32.mrf.mxu0
      %v2704 = vadd.f32 %v2313, %v2703
      %v2705 = vpop.f32.mrf.mxu0
      %v2706 = vadd.f32 %v2317, %v2705
      %2707 = vmatprep.mubr.bf16.mxu0 0
      %2708 = vmatmul.mubr.bf16.gmra.mxu0 %v965
      %v2709 = vpop.f32.mrf.mxu0
      %v2710 = vadd.f32 %v2313, %v2709
      %v2711 = vpop.f32.mrf.mxu0
      %v2712 = vadd.f32 %v2317, %v2711
      %v2713 = vpop.f32.mrf.mxu0
      %v2714 = vadd.f32 %v2313, %v2713
      %v2715 = vpop.f32.mrf.mxu0
      %v2716 = vadd.f32 %v2317, %v2715
      %2717 = vmatprep.mubr.bf16.mxu0 0
      %2718 = vmatmul.mubr.bf16.gmra.mxu0 %v968
      %v2719 = vpop.f32.mrf.mxu0
      %v2720 = vadd.f32 %v2313, %v2719
      %v2721 = vpop.f32.mrf.mxu0
      %v2722 = vadd.f32 %v2317, %v2721
      %v2723 = vpop.f32.mrf.mxu0
      %v2724 = vadd.f32 %v2313, %v2723
      %v2725 = vpop.f32.mrf.mxu0
      %v2726 = vadd.f32 %v2317, %v2725
      %2727 = vmatprep.mubr.bf16.mxu0 0
      %2728 = vmatmul.mubr.bf16.gmra.mxu0 %v971
      %v2729 = vpop.f32.mrf.mxu0
      %v2730 = vadd.f32 %v2313, %v2729
      %v2731 = vpop.f32.mrf.mxu0
      %v2732 = vadd.f32 %v2317, %v2731
      %v2733 = vpop.f32.mrf.mxu0
      %v2734 = vadd.f32 %v2313, %v2733
      %v2735 = vpop.f32.mrf.mxu0
      %v2736 = vadd.f32 %v2317, %v2735
      %2737 = vmatprep.mubr.bf16.mxu0 0
      %2738 = vmatmul.mubr.bf16.gmra.mxu0 %v974
      %v2739 = vpop.f32.mrf.mxu0
      %v2740 = vadd.f32 %v2313, %v2739
      %v2741 = vpop.f32.mrf.mxu0
      %v2742 = vadd.f32 %v2317, %v2741
      %v2743 = vpop.f32.mrf.mxu0
      %v2744 = vadd.f32 %v2313, %v2743
      %v2745 = vpop.f32.mrf.mxu0
      %v2746 = vadd.f32 %v2317, %v2745
      %2747 = vmatprep.mubr.bf16.mxu0 0
      %2748 = vmatmul.mubr.bf16.gmra.mxu0 %v977
      %v2749 = vpop.f32.mrf.mxu0
      %v2750 = vadd.f32 %v2313, %v2749
      %v2751 = vpop.f32.mrf.mxu0
      %v2752 = vadd.f32 %v2317, %v2751
      %v2753 = vpop.f32.mrf.mxu0
      %v2754 = vadd.f32 %v2313, %v2753
      %v2755 = vpop.f32.mrf.mxu0
      %v2756 = vadd.f32 %v2317, %v2755
      %2757 = vmatprep.mubr.bf16.mxu0 0
      %2758 = vmatmul.mubr.bf16.gmra.mxu0 %v980
      %v2759 = vpop.f32.mrf.mxu0
      %v2760 = vadd.f32 %v2313, %v2759
      %v2761 = vpop.f32.mrf.mxu0
      %v2762 = vadd.f32 %v2317, %v2761
      %v2763 = vpop.f32.mrf.mxu0
      %v2764 = vadd.f32 %v2313, %v2763
      %v2765 = vpop.f32.mrf.mxu0
      %v2766 = vadd.f32 %v2317, %v2765
      %2767 = vmatprep.mubr.bf16.mxu0 0
      %2768 = vmatmul.mubr.bf16.gmra.mxu0 %v983
      %v2769 = vpop.f32.mrf.mxu0
      %v2770 = vadd.f32 %v2313, %v2769
      %v2771 = vpop.f32.mrf.mxu0
      %v2772 = vadd.f32 %v2317, %v2771
      %v2773 = vpop.f32.mrf.mxu0
      %v2774 = vadd.f32 %v2313, %v2773
      %v2775 = vpop.f32.mrf.mxu0
      %v2776 = vadd.f32 %v2317, %v2775
      %2777 = vmatprep.mubr.bf16.mxu0 0
      %2778 = vmatmul.mubr.bf16.gmra.mxu0 %v986
      %v2779 = vpop.f32.mrf.mxu0
      %v2780 = vadd.f32 %v2313, %v2779
      %v2781 = vpop.f32.mrf.mxu0
      %v2782 = vadd.f32 %v2317, %v2781
      %v2783 = vpop.f32.mrf.mxu0
      %v2784 = vadd.f32 %v2313, %v2783
      %v2785 = vpop.f32.mrf.mxu0
      %v2786 = vadd.f32 %v2317, %v2785
      %2787 = vdwg.mxu0
      %v2788 = vsub.f32 0.0, %v2437
      %v2789 = vsub.f32 0.0, %v2439
      %v2790 = vsub.f32 0.0, %v2630
      %v2791 = vsub.f32 0.0, %v2632
      %v2792 = vsub.f32 0.0, %v2441
      %v2793 = vsub.f32 0.0, %v2443
      %v2794 = vsub.f32 0.0, %v2634
      %v2795 = vsub.f32 0.0, %v2636
      %v2796 = vsub.f32 0.0, %v2447
      %v2797 = vsub.f32 0.0, %v2449
      %v2798 = vsub.f32 0.0, %v2640
      %v2799 = vsub.f32 0.0, %v2642
      %v2800 = vsub.f32 0.0, %v2451
      %v2801 = vsub.f32 0.0, %v2453
      %v2802 = vsub.f32 0.0, %v2644
      %v2803 = vsub.f32 0.0, %v2646
      %v2804 = vsub.f32 0.0, %v2457
      %v2805 = vsub.f32 0.0, %v2459
      %v2806 = vsub.f32 0.0, %v2650
      %v2807 = vsub.f32 0.0, %v2652
      %v2808 = vsub.f32 0.0, %v2461
      %v2809 = vsub.f32 0.0, %v2463
      %v2810 = vsub.f32 0.0, %v2654
      %v2811 = vsub.f32 0.0, %v2656
      %v2812 = vsub.f32 0.0, %v2467
      %v2813 = vsub.f32 0.0, %v2469
      %v2814 = vsub.f32 0.0, %v2660
      %v2815 = vsub.f32 0.0, %v2662
      %v2816 = vsub.f32 0.0, %v2471
      %v2817 = vsub.f32 0.0, %v2473
      %v2818 = vsub.f32 0.0, %v2664
      %v2819 = vsub.f32 0.0, %v2666
      %v2820 = vsub.f32 0.0, %v2477
      %v2821 = vsub.f32 0.0, %v2479
      %v2822 = vsub.f32 0.0, %v2670
      %v2823 = vsub.f32 0.0, %v2672
      %v2824 = vsub.f32 0.0, %v2481
      %v2825 = vsub.f32 0.0, %v2483
      %v2826 = vsub.f32 0.0, %v2674
      %v2827 = vsub.f32 0.0, %v2676
      %v2828 = vsub.f32 0.0, %v2487
      %v2829 = vsub.f32 0.0, %v2489
      %v2830 = vsub.f32 0.0, %v2680
      %v2831 = vsub.f32 0.0, %v2682
      %v2832 = vsub.f32 0.0, %v2491
      %v2833 = vsub.f32 0.0, %v2493
      %v2834 = vsub.f32 0.0, %v2684
      %v2835 = vsub.f32 0.0, %v2686
      %v2836 = vsub.f32 0.0, %v2497
      %v2837 = vsub.f32 0.0, %v2499
      %v2838 = vsub.f32 0.0, %v2690
      %v2839 = vsub.f32 0.0, %v2692
      %v2840 = vsub.f32 0.0, %v2501
      %v2841 = vsub.f32 0.0, %v2503
      %v2842 = vsub.f32 0.0, %v2694
      %v2843 = vsub.f32 0.0, %v2696
      %v2844 = vsub.f32 0.0, %v2507
      %v2845 = vsub.f32 0.0, %v2509
      %v2846 = vsub.f32 0.0, %v2700
      %v2847 = vsub.f32 0.0, %v2702
      %v2848 = vsub.f32 0.0, %v2511
      %v2849 = vsub.f32 0.0, %v2513
      %v2850 = vsub.f32 0.0, %v2704
      %v2851 = vsub.f32 0.0, %v2706
      %v2852 = vsub.f32 0.0, %v2517
      %v2853 = vsub.f32 0.0, %v2519
      %v2854 = vsub.f32 0.0, %v2710
      %v2855 = vsub.f32 0.0, %v2712
      %v2856 = vsub.f32 0.0, %v2521
      %v2857 = vsub.f32 0.0, %v2523
      %v2858 = vsub.f32 0.0, %v2714
      %v2859 = vsub.f32 0.0, %v2716
      %v2860 = vsub.f32 0.0, %v2527
      %v2861 = vsub.f32 0.0, %v2529
      %v2862 = vsub.f32 0.0, %v2720
      %v2863 = vsub.f32 0.0, %v2722
      %v2864 = vsub.f32 0.0, %v2531
      %v2865 = vsub.f32 0.0, %v2533
      %v2866 = vsub.f32 0.0, %v2724
      %v2867 = vsub.f32 0.0, %v2726
      %v2868 = vsub.f32 0.0, %v2537
      %v2869 = vsub.f32 0.0, %v2539
      %v2870 = vsub.f32 0.0, %v2730
      %v2871 = vsub.f32 0.0, %v2732
      %v2872 = vsub.f32 0.0, %v2541
      %v2873 = vsub.f32 0.0, %v2543
      %v2874 = vsub.f32 0.0, %v2734
      %v2875 = vsub.f32 0.0, %v2736
      %v2876 = vsub.f32 0.0, %v2547
      %v2877 = vsub.f32 0.0, %v2549
      %v2878 = vsub.f32 0.0, %v2740
      %v2879 = vsub.f32 0.0, %v2742
      %v2880 = vsub.f32 0.0, %v2551
      %v2881 = vsub.f32 0.0, %v2553
      %v2882 = vsub.f32 0.0, %v2744
      %v2883 = vsub.f32 0.0, %v2746
      %v2884 = vsub.f32 0.0, %v2557
      %v2885 = vsub.f32 0.0, %v2559
      %v2886 = vsub.f32 0.0, %v2750
      %v2887 = vsub.f32 0.0, %v2752
      %v2888 = vsub.f32 0.0, %v2561
      %v2889 = vsub.f32 0.0, %v2563
      %v2890 = vsub.f32 0.0, %v2754
      %v2891 = vsub.f32 0.0, %v2756
      %v2892 = vsub.f32 0.0, %v2567
      %v2893 = vsub.f32 0.0, %v2569
      %v2894 = vsub.f32 0.0, %v2760
      %v2895 = vsub.f32 0.0, %v2762
      %v2896 = vsub.f32 0.0, %v2571
      %v2897 = vsub.f32 0.0, %v2573
      %v2898 = vsub.f32 0.0, %v2764
      %v2899 = vsub.f32 0.0, %v2766
      %v2900 = vsub.f32 0.0, %v2577
      %v2901 = vsub.f32 0.0, %v2579
      %v2902 = vsub.f32 0.0, %v2770
      %v2903 = vsub.f32 0.0, %v2772
      %v2904 = vsub.f32 0.0, %v2581
      %v2905 = vsub.f32 0.0, %v2583
      %v2906 = vsub.f32 0.0, %v2774
      %v2907 = vsub.f32 0.0, %v2776
      %v2908 = vsub.f32 0.0, %v2587
      %v2909 = vsub.f32 0.0, %v2589
      %v2910 = vsub.f32 0.0, %v2780
      %v2911 = vsub.f32 0.0, %v2782
      %v2912 = vsub.f32 0.0, %v2591
      %v2913 = vsub.f32 0.0, %v2593
      %v2914 = vsub.f32 0.0, %v2784
      %v2915 = vsub.f32 0.0, %v2786
      %v2916 = vmul.f32 %v2788, 1.442695
      %v2917 = vpow.pop %v2916
      %v2918 = vmul.f32 %v2789, 1.442695
      %v2919 = vpow.pop %v2918
      %v2920 = vmul.f32 %v2790, 1.442695
      %v2921 = vpow.pop %v2920
      %v2922 = vmul.f32 %v2791, 1.442695
      %v2923 = vpow.pop %v2922
      %v2924 = vmul.f32 %v2792, 1.442695
      %v2925 = vpow.pop %v2924
      %v2926 = vmul.f32 %v2793, 1.442695
      %v2927 = vpow.pop %v2926
      %v2928 = vmul.f32 %v2794, 1.442695
      %v2929 = vpow.pop %v2928
      %v2930 = vmul.f32 %v2795, 1.442695
      %v2931 = vpow.pop %v2930
      %v2932 = vmul.f32 %v2796, 1.442695
      %v2933 = vpow.pop %v2932
      %v2934 = vmul.f32 %v2797, 1.442695
      %v2935 = vpow.pop %v2934
      %v2936 = vmul.f32 %v2798, 1.442695
      %v2937 = vpow.pop %v2936
      %v2938 = vmul.f32 %v2799, 1.442695
      %v2939 = vpow.pop %v2938
      %v2940 = vmul.f32 %v2800, 1.442695
      %v2941 = vpow.pop %v2940
      %v2942 = vmul.f32 %v2801, 1.442695
      %v2943 = vpow.pop %v2942
      %v2944 = vmul.f32 %v2802, 1.442695
      %v2945 = vpow.pop %v2944
      %v2946 = vmul.f32 %v2803, 1.442695
      %v2947 = vpow.pop %v2946
      %v2948 = vmul.f32 %v2804, 1.442695
      %v2949 = vpow.pop %v2948
      %v2950 = vmul.f32 %v2805, 1.442695
      %v2951 = vpow.pop %v2950
      %v2952 = vmul.f32 %v2806, 1.442695
      %v2953 = vpow.pop %v2952
      %v2954 = vmul.f32 %v2807, 1.442695
      %v2955 = vpow.pop %v2954
      %v2956 = vmul.f32 %v2808, 1.442695
      %v2957 = vpow.pop %v2956
      %v2958 = vmul.f32 %v2809, 1.442695
      %v2959 = vpow.pop %v2958
      %v2960 = vmul.f32 %v2810, 1.442695
      %v2961 = vpow.pop %v2960
      %v2962 = vmul.f32 %v2811, 1.442695
      %v2963 = vpow.pop %v2962
      %v2964 = vmul.f32 %v2812, 1.442695
      %v2965 = vpow.pop %v2964
      %v2966 = vmul.f32 %v2813, 1.442695
      %v2967 = vpow.pop %v2966
      %v2968 = vmul.f32 %v2814, 1.442695
      %v2969 = vpow.pop %v2968
      %v2970 = vmul.f32 %v2815, 1.442695
      %v2971 = vpow.pop %v2970
      %v2972 = vmul.f32 %v2816, 1.442695
      %v2973 = vpow.pop %v2972
      %v2974 = vmul.f32 %v2817, 1.442695
      %v2975 = vpow.pop %v2974
      %v2976 = vmul.f32 %v2818, 1.442695
      %v2977 = vpow.pop %v2976
      %v2978 = vmul.f32 %v2819, 1.442695
      %v2979 = vpow.pop %v2978
      %v2980 = vmul.f32 %v2820, 1.442695
      %v2981 = vpow.pop %v2980
      %v2982 = vmul.f32 %v2821, 1.442695
      %v2983 = vpow.pop %v2982
      %v2984 = vmul.f32 %v2822, 1.442695
      %v2985 = vpow.pop %v2984
      %v2986 = vmul.f32 %v2823, 1.442695
      %v2987 = vpow.pop %v2986
      %v2988 = vmul.f32 %v2824, 1.442695
      %v2989 = vpow.pop %v2988
      %v2990 = vmul.f32 %v2825, 1.442695
      %v2991 = vpow.pop %v2990
      %v2992 = vmul.f32 %v2826, 1.442695
      %v2993 = vpow.pop %v2992
      %v2994 = vmul.f32 %v2827, 1.442695
      %v2995 = vpow.pop %v2994
      %v2996 = vmul.f32 %v2828, 1.442695
      %v2997 = vpow.pop %v2996
      %v2998 = vmul.f32 %v2829, 1.442695
      %v2999 = vpow.pop %v2998
      %v3000 = vmul.f32 %v2830, 1.442695
      %v3001 = vpow.pop %v3000
      %v3002 = vmul.f32 %v2831, 1.442695
      %v3003 = vpow.pop %v3002
      %v3004 = vmul.f32 %v2832, 1.442695
      %v3005 = vpow.pop %v3004
      %v3006 = vmul.f32 %v2833, 1.442695
      %v3007 = vpow.pop %v3006
      %v3008 = vmul.f32 %v2834, 1.442695
      %v3009 = vpow.pop %v3008
      %v3010 = vmul.f32 %v2835, 1.442695
      %v3011 = vpow.pop %v3010
      %v3012 = vmul.f32 %v2836, 1.442695
      %v3013 = vpow.pop %v3012
      %v3014 = vmul.f32 %v2837, 1.442695
      %v3015 = vpow.pop %v3014
      %v3016 = vmul.f32 %v2838, 1.442695
      %v3017 = vpow.pop %v3016
      %v3018 = vmul.f32 %v2839, 1.442695
      %v3019 = vpow.pop %v3018
      %v3020 = vmul.f32 %v2840, 1.442695
      %v3021 = vpow.pop %v3020
      %v3022 = vmul.f32 %v2841, 1.442695
      %v3023 = vpow.pop %v3022
      %v3024 = vmul.f32 %v2842, 1.442695
      %v3025 = vpow.pop %v3024
      %v3026 = vmul.f32 %v2843, 1.442695
      %v3027 = vpow.pop %v3026
      %v3028 = vmul.f32 %v2844, 1.442695
      %v3029 = vpow.pop %v3028
      %v3030 = vmul.f32 %v2845, 1.442695
      %v3031 = vpow.pop %v3030
      %v3032 = vmul.f32 %v2846, 1.442695
      %v3033 = vpow.pop %v3032
      %v3034 = vmul.f32 %v2847, 1.442695
      %v3035 = vpow.pop %v3034
      %v3036 = vmul.f32 %v2848, 1.442695
      %v3037 = vpow.pop %v3036
      %v3038 = vmul.f32 %v2849, 1.442695
      %v3039 = vpow.pop %v3038
      %v3040 = vmul.f32 %v2850, 1.442695
      %v3041 = vpow.pop %v3040
      %v3042 = vmul.f32 %v2851, 1.442695
      %v3043 = vpow.pop %v3042
      %v3044 = vmul.f32 %v2852, 1.442695
      %v3045 = vpow.pop %v3044
      %v3046 = vmul.f32 %v2853, 1.442695
      %v3047 = vpow.pop %v3046
      %v3048 = vmul.f32 %v2854, 1.442695
      %v3049 = vpow.pop %v3048
      %v3050 = vmul.f32 %v2855, 1.442695
      %v3051 = vpow.pop %v3050
      %v3052 = vmul.f32 %v2856, 1.442695
      %v3053 = vpow.pop %v3052
      %v3054 = vmul.f32 %v2857, 1.442695
      %v3055 = vpow.pop %v3054
      %v3056 = vmul.f32 %v2858, 1.442695
      %v3057 = vpow.pop %v3056
      %v3058 = vmul.f32 %v2859, 1.442695
      %v3059 = vpow.pop %v3058
      %v3060 = vmul.f32 %v2860, 1.442695
      %v3061 = vpow.pop %v3060
      %v3062 = vmul.f32 %v2861, 1.442695
      %v3063 = vpow.pop %v3062
      %v3064 = vmul.f32 %v2862, 1.442695
      %v3065 = vpow.pop %v3064
      %v3066 = vmul.f32 %v2863, 1.442695
      %v3067 = vpow.pop %v3066
      %v3068 = vmul.f32 %v2864, 1.442695
      %v3069 = vpow.pop %v3068
      %v3070 = vmul.f32 %v2865, 1.442695
      %v3071 = vpow.pop %v3070
      %v3072 = vmul.f32 %v2866, 1.442695
      %v3073 = vpow.pop %v3072
      %v3074 = vmul.f32 %v2867, 1.442695
      %v3075 = vpow.pop %v3074
      %v3076 = vmul.f32 %v2868, 1.442695
      %v3077 = vpow.pop %v3076
      %v3078 = vmul.f32 %v2869, 1.442695
      %v3079 = vpow.pop %v3078
      %v3080 = vmul.f32 %v2870, 1.442695
      %v3081 = vpow.pop %v3080
      %v3082 = vmul.f32 %v2871, 1.442695
      %v3083 = vpow.pop %v3082
      %v3084 = vmul.f32 %v2872, 1.442695
      %v3085 = vpow.pop %v3084
      %v3086 = vmul.f32 %v2873, 1.442695
      %v3087 = vpow.pop %v3086
      %v3088 = vmul.f32 %v2874, 1.442695
      %v3089 = vpow.pop %v3088
      %v3090 = vmul.f32 %v2875, 1.442695
      %v3091 = vpow.pop %v3090
      %v3092 = vmul.f32 %v2876, 1.442695
      %v3093 = vpow.pop %v3092
      %v3094 = vmul.f32 %v2877, 1.442695
      %v3095 = vpow.pop %v3094
      %v3096 = vmul.f32 %v2878, 1.442695
      %v3097 = vpow.pop %v3096
      %v3098 = vmul.f32 %v2879, 1.442695
      %v3099 = vpow.pop %v3098
      %v3100 = vmul.f32 %v2880, 1.442695
      %v3101 = vpow.pop %v3100
      %v3102 = vmul.f32 %v2881, 1.442695
      %v3103 = vpow.pop %v3102
      %v3104 = vmul.f32 %v2882, 1.442695
      %v3105 = vpow.pop %v3104
      %v3106 = vmul.f32 %v2883, 1.442695
      %v3107 = vpow.pop %v3106
      %v3108 = vmul.f32 %v2884, 1.442695
      %v3109 = vpow.pop %v3108
      %v3110 = vmul.f32 %v2885, 1.442695
      %v3111 = vpow.pop %v3110
      %v3112 = vmul.f32 %v2886, 1.442695
      %v3113 = vpow.pop %v3112
      %v3114 = vmul.f32 %v2887, 1.442695
      %v3115 = vpow.pop %v3114
      %v3116 = vmul.f32 %v2888, 1.442695
      %v3117 = vpow.pop %v3116
      %v3118 = vmul.f32 %v2889, 1.442695
      %v3119 = vpow.pop %v3118
      %v3120 = vmul.f32 %v2890, 1.442695
      %v3121 = vpow.pop %v3120
      %v3122 = vmul.f32 %v2891, 1.442695
      %v3123 = vpow.pop %v3122
      %v3124 = vmul.f32 %v2892, 1.442695
      %v3125 = vpow.pop %v3124
      %v3126 = vmul.f32 %v2893, 1.442695
      %v3127 = vpow.pop %v3126
      %v3128 = vmul.f32 %v2894, 1.442695
      %v3129 = vpow.pop %v3128
      %v3130 = vmul.f32 %v2895, 1.442695
      %v3131 = vpow.pop %v3130
      %v3132 = vmul.f32 %v2896, 1.442695
      %v3133 = vpow.pop %v3132
      %v3134 = vmul.f32 %v2897, 1.442695
      %v3135 = vpow.pop %v3134
      %v3136 = vmul.f32 %v2898, 1.442695
      %v3137 = vpow.pop %v3136
      %v3138 = vmul.f32 %v2899, 1.442695
      %v3139 = vpow.pop %v3138
      %v3140 = vmul.f32 %v2900, 1.442695
      %v3141 = vpow.pop %v3140
      %v3142 = vmul.f32 %v2901, 1.442695
      %v3143 = vpow.pop %v3142
      %v3144 = vmul.f32 %v2902, 1.442695
      %v3145 = vpow.pop %v3144
      %v3146 = vmul.f32 %v2903, 1.442695
      %v3147 = vpow.pop %v3146
      %v3148 = vmul.f32 %v2904, 1.442695
      %v3149 = vpow.pop %v3148
      %v3150 = vmul.f32 %v2905, 1.442695
      %v3151 = vpow.pop %v3150
      %v3152 = vmul.f32 %v2906, 1.442695
      %v3153 = vpow.pop %v3152
      %v3154 = vmul.f32 %v2907, 1.442695
      %v3155 = vpow.pop %v3154
      %v3156 = vmul.f32 %v2908, 1.442695
      %v3157 = vpow.pop %v3156
      %v3158 = vmul.f32 %v2909, 1.442695
      %v3159 = vpow.pop %v3158
      %v3160 = vmul.f32 %v2910, 1.442695
      %v3161 = vpow.pop %v3160
      %v3162 = vmul.f32 %v2911, 1.442695
      %v3163 = vpow.pop %v3162
      %v3164 = vmul.f32 %v2912, 1.442695
      %v3165 = vpow.pop %v3164
      %v3166 = vmul.f32 %v2913, 1.442695
      %v3167 = vpow.pop %v3166
      %v3168 = vmul.f32 %v2914, 1.442695
      %v3169 = vpow.pop %v3168
      %v3170 = vmul.f32 %v2915, 1.442695
      %v3171 = vpow.pop %v3170
      %v3172 = vadd.f32 %v2917, 1.0
      %v3173 = vadd.f32 %v2919, 1.0
      %v3174 = vadd.f32 %v2921, 1.0
      %v3175 = vadd.f32 %v2923, 1.0
      %v3176 = vadd.f32 %v2925, 1.0
      %v3177 = vadd.f32 %v2927, 1.0
      %v3178 = vadd.f32 %v2929, 1.0
      %v3179 = vadd.f32 %v2931, 1.0
      %v3180 = vadd.f32 %v2933, 1.0
      %v3181 = vadd.f32 %v2935, 1.0
      %v3182 = vadd.f32 %v2937, 1.0
      %v3183 = vadd.f32 %v2939, 1.0
      %v3184 = vadd.f32 %v2941, 1.0
      %v3185 = vadd.f32 %v2943, 1.0
      %v3186 = vadd.f32 %v2945, 1.0
      %v3187 = vadd.f32 %v2947, 1.0
      %v3188 = vadd.f32 %v2949, 1.0
      %v3189 = vadd.f32 %v2951, 1.0
      %v3190 = vadd.f32 %v2953, 1.0
      %v3191 = vadd.f32 %v2955, 1.0
      %v3192 = vadd.f32 %v2957, 1.0
      %v3193 = vadd.f32 %v2959, 1.0
      %v3194 = vadd.f32 %v2961, 1.0
      %v3195 = vadd.f32 %v2963, 1.0
      %v3196 = vadd.f32 %v2965, 1.0
      %v3197 = vadd.f32 %v2967, 1.0
      %v3198 = vadd.f32 %v2969, 1.0
      %v3199 = vadd.f32 %v2971, 1.0
      %v3200 = vadd.f32 %v2973, 1.0
      %v3201 = vadd.f32 %v2975, 1.0
      %v3202 = vadd.f32 %v2977, 1.0
      %v3203 = vadd.f32 %v2979, 1.0
      %v3204 = vadd.f32 %v2981, 1.0
      %v3205 = vadd.f32 %v2983, 1.0
      %v3206 = vadd.f32 %v2985, 1.0
      %v3207 = vadd.f32 %v2987, 1.0
      %v3208 = vadd.f32 %v2989, 1.0
      %v3209 = vadd.f32 %v2991, 1.0
      %v3210 = vadd.f32 %v2993, 1.0
      %v3211 = vadd.f32 %v2995, 1.0
      %v3212 = vadd.f32 %v2997, 1.0
      %v3213 = vadd.f32 %v2999, 1.0
      %v3214 = vadd.f32 %v3001, 1.0
      %v3215 = vadd.f32 %v3003, 1.0
      %v3216 = vadd.f32 %v3005, 1.0
      %v3217 = vadd.f32 %v3007, 1.0
      %v3218 = vadd.f32 %v3009, 1.0
      %v3219 = vadd.f32 %v3011, 1.0
      %v3220 = vadd.f32 %v3013, 1.0
      %v3221 = vadd.f32 %v3015, 1.0
      %v3222 = vadd.f32 %v3017, 1.0
      %v3223 = vadd.f32 %v3019, 1.0
      %v3224 = vadd.f32 %v3021, 1.0
      %v3225 = vadd.f32 %v3023, 1.0
      %v3226 = vadd.f32 %v3025, 1.0
      %v3227 = vadd.f32 %v3027, 1.0
      %v3228 = vadd.f32 %v3029, 1.0
      %v3229 = vadd.f32 %v3031, 1.0
      %v3230 = vadd.f32 %v3033, 1.0
      %v3231 = vadd.f32 %v3035, 1.0
      %v3232 = vadd.f32 %v3037, 1.0
      %v3233 = vadd.f32 %v3039, 1.0
      %v3234 = vadd.f32 %v3041, 1.0
      %v3235 = vadd.f32 %v3043, 1.0
      %v3236 = vadd.f32 %v3045, 1.0
      %v3237 = vadd.f32 %v3047, 1.0
      %v3238 = vadd.f32 %v3049, 1.0
      %v3239 = vadd.f32 %v3051, 1.0
      %v3240 = vadd.f32 %v3053, 1.0
      %v3241 = vadd.f32 %v3055, 1.0
      %v3242 = vadd.f32 %v3057, 1.0
      %v3243 = vadd.f32 %v3059, 1.0
      %v3244 = vadd.f32 %v3061, 1.0
      %v3245 = vadd.f32 %v3063, 1.0
      %v3246 = vadd.f32 %v3065, 1.0
      %v3247 = vadd.f32 %v3067, 1.0
      %v3248 = vadd.f32 %v3069, 1.0
      %v3249 = vadd.f32 %v3071, 1.0
      %v3250 = vadd.f32 %v3073, 1.0
      %v3251 = vadd.f32 %v3075, 1.0
      %v3252 = vadd.f32 %v3077, 1.0
      %v3253 = vadd.f32 %v3079, 1.0
      %v3254 = vadd.f32 %v3081, 1.0
      %v3255 = vadd.f32 %v3083, 1.0
      %v3256 = vadd.f32 %v3085, 1.0
      %v3257 = vadd.f32 %v3087, 1.0
      %v3258 = vadd.f32 %v3089, 1.0
      %v3259 = vadd.f32 %v3091, 1.0
      %v3260 = vadd.f32 %v3093, 1.0
      %v3261 = vadd.f32 %v3095, 1.0
      %v3262 = vadd.f32 %v3097, 1.0
      %v3263 = vadd.f32 %v3099, 1.0
      %v3264 = vadd.f32 %v3101, 1.0
      %v3265 = vadd.f32 %v3103, 1.0
      %v3266 = vadd.f32 %v3105, 1.0
      %v3267 = vadd.f32 %v3107, 1.0
      %v3268 = vadd.f32 %v3109, 1.0
      %v3269 = vadd.f32 %v3111, 1.0
      %v3270 = vadd.f32 %v3113, 1.0
      %v3271 = vadd.f32 %v3115, 1.0
      %v3272 = vadd.f32 %v3117, 1.0
      %v3273 = vadd.f32 %v3119, 1.0
      %v3274 = vadd.f32 %v3121, 1.0
      %v3275 = vadd.f32 %v3123, 1.0
      %v3276 = vadd.f32 %v3125, 1.0
      %v3277 = vadd.f32 %v3127, 1.0
      %v3278 = vadd.f32 %v3129, 1.0
      %v3279 = vadd.f32 %v3131, 1.0
      %v3280 = vadd.f32 %v3133, 1.0
      %v3281 = vadd.f32 %v3135, 1.0
      %v3282 = vadd.f32 %v3137, 1.0
      %v3283 = vadd.f32 %v3139, 1.0
      %v3284 = vadd.f32 %v3141, 1.0
      %v3285 = vadd.f32 %v3143, 1.0
      %v3286 = vadd.f32 %v3145, 1.0
      %v3287 = vadd.f32 %v3147, 1.0
      %v3288 = vadd.f32 %v3149, 1.0
      %v3289 = vadd.f32 %v3151, 1.0
      %v3290 = vadd.f32 %v3153, 1.0
      %v3291 = vadd.f32 %v3155, 1.0
      %v3292 = vadd.f32 %v3157, 1.0
      %v3293 = vadd.f32 %v3159, 1.0
      %v3294 = vadd.f32 %v3161, 1.0
      %v3295 = vadd.f32 %v3163, 1.0
      %v3296 = vadd.f32 %v3165, 1.0
      %v3297 = vadd.f32 %v3167, 1.0
      %v3298 = vadd.f32 %v3169, 1.0
      %v3299 = vadd.f32 %v3171, 1.0
      %v3300 = vrcp.pop %v3172
      %v3301 = vrcp.pop %v3173
      %v3302 = vrcp.pop %v3174
      %v3303 = vrcp.pop %v3175
      %v3304 = vrcp.pop %v3176
      %v3305 = vrcp.pop %v3177
      %v3306 = vrcp.pop %v3178
      %v3307 = vrcp.pop %v3179
      %v3308 = vrcp.pop %v3180
      %v3309 = vrcp.pop %v3181
      %v3310 = vrcp.pop %v3182
      %v3311 = vrcp.pop %v3183
      %v3312 = vrcp.pop %v3184
      %v3313 = vrcp.pop %v3185
      %v3314 = vrcp.pop %v3186
      %v3315 = vrcp.pop %v3187
      %v3316 = vrcp.pop %v3188
      %v3317 = vrcp.pop %v3189
      %v3318 = vrcp.pop %v3190
      %v3319 = vrcp.pop %v3191
      %v3320 = vrcp.pop %v3192
      %v3321 = vrcp.pop %v3193
      %v3322 = vrcp.pop %v3194
      %v3323 = vrcp.pop %v3195
      %v3324 = vrcp.pop %v3196
      %v3325 = vrcp.pop %v3197
      %v3326 = vrcp.pop %v3198
      %v3327 = vrcp.pop %v3199
      %v3328 = vrcp.pop %v3200
      %v3329 = vrcp.pop %v3201
      %v3330 = vrcp.pop %v3202
      %v3331 = vrcp.pop %v3203
      %v3332 = vrcp.pop %v3204
      %v3333 = vrcp.pop %v3205
      %v3334 = vrcp.pop %v3206
      %v3335 = vrcp.pop %v3207
      %v3336 = vrcp.pop %v3208
      %v3337 = vrcp.pop %v3209
      %v3338 = vrcp.pop %v3210
      %v3339 = vrcp.pop %v3211
      %v3340 = vrcp.pop %v3212
      %v3341 = vrcp.pop %v3213
      %v3342 = vrcp.pop %v3214
      %v3343 = vrcp.pop %v3215
      %v3344 = vrcp.pop %v3216
      %v3345 = vrcp.pop %v3217
      %v3346 = vrcp.pop %v3218
      %v3347 = vrcp.pop %v3219
      %v3348 = vrcp.pop %v3220
      %v3349 = vrcp.pop %v3221
      %v3350 = vrcp.pop %v3222
      %v3351 = vrcp.pop %v3223
      %v3352 = vrcp.pop %v3224
      %v3353 = vrcp.pop %v3225
      %v3354 = vrcp.pop %v3226
      %v3355 = vrcp.pop %v3227
      %v3356 = vrcp.pop %v3228
      %v3357 = vrcp.pop %v3229
      %v3358 = vrcp.pop %v3230
      %v3359 = vrcp.pop %v3231
      %v3360 = vrcp.pop %v3232
      %v3361 = vrcp.pop %v3233
      %v3362 = vrcp.pop %v3234
      %v3363 = vrcp.pop %v3235
      %v3364 = vrcp.pop %v3236
      %v3365 = vrcp.pop %v3237
      %v3366 = vrcp.pop %v3238
      %v3367 = vrcp.pop %v3239
      %v3368 = vrcp.pop %v3240
      %v3369 = vrcp.pop %v3241
      %v3370 = vrcp.pop %v3242
      %v3371 = vrcp.pop %v3243
      %v3372 = vrcp.pop %v3244
      %v3373 = vrcp.pop %v3245
      %v3374 = vrcp.pop %v3246
      %v3375 = vrcp.pop %v3247
      %v3376 = vrcp.pop %v3248
      %v3377 = vrcp.pop %v3249
      %v3378 = vrcp.pop %v3250
      %v3379 = vrcp.pop %v3251
      %v3380 = vrcp.pop %v3252
      %v3381 = vrcp.pop %v3253
      %v3382 = vrcp.pop %v3254
      %v3383 = vrcp.pop %v3255
      %v3384 = vrcp.pop %v3256
      %v3385 = vrcp.pop %v3257
      %v3386 = vrcp.pop %v3258
      %v3387 = vrcp.pop %v3259
      %v3388 = vrcp.pop %v3260
      %v3389 = vrcp.pop %v3261
      %v3390 = vrcp.pop %v3262
      %v3391 = vrcp.pop %v3263
      %v3392 = vrcp.pop %v3264
      %v3393 = vrcp.pop %v3265
      %v3394 = vrcp.pop %v3266
      %v3395 = vrcp.pop %v3267
      %v3396 = vrcp.pop %v3268
      %v3397 = vrcp.pop %v3269
      %v3398 = vrcp.pop %v3270
      %v3399 = vrcp.pop %v3271
      %v3400 = vrcp.pop %v3272
      %v3401 = vrcp.pop %v3273
      %v3402 = vrcp.pop %v3274
      %v3403 = vrcp.pop %v3275
      %v3404 = vrcp.pop %v3276
      %v3405 = vrcp.pop %v3277
      %v3406 = vrcp.pop %v3278
      %v3407 = vrcp.pop %v3279
      %v3408 = vrcp.pop %v3280
      %v3409 = vrcp.pop %v3281
      %v3410 = vrcp.pop %v3282
      %v3411 = vrcp.pop %v3283
      %v3412 = vrcp.pop %v3284
      %v3413 = vrcp.pop %v3285
      %v3414 = vrcp.pop %v3286
      %v3415 = vrcp.pop %v3287
      %v3416 = vrcp.pop %v3288
      %v3417 = vrcp.pop %v3289
      %v3418 = vrcp.pop %v3290
      %v3419 = vrcp.pop %v3291
      %v3420 = vrcp.pop %v3292
      %v3421 = vrcp.pop %v3293
      %v3422 = vrcp.pop %v3294
      %v3423 = vrcp.pop %v3295
      %v3424 = vrcp.pop %v3296
      %v3425 = vrcp.pop %v3297
      %v3426 = vrcp.pop %v3298
      %v3427 = vrcp.pop %v3299
      %v3428 = vmul.f32 %v2437, %v3300
      %v3429 = vmul.f32 %v2439, %v3301
      %v3430 = vmul.f32 %v2630, %v3302
      %v3431 = vmul.f32 %v2632, %v3303
      %v3432 = vmul.f32 %v2441, %v3304
      %v3433 = vmul.f32 %v2443, %v3305
      %v3434 = vmul.f32 %v2634, %v3306
      %v3435 = vmul.f32 %v2636, %v3307
      %v3436 = vmul.f32 %v2447, %v3308
      %v3437 = vmul.f32 %v2449, %v3309
      %v3438 = vmul.f32 %v2640, %v3310
      %v3439 = vmul.f32 %v2642, %v3311
      %v3440 = vmul.f32 %v2451, %v3312
      %v3441 = vmul.f32 %v2453, %v3313
      %v3442 = vmul.f32 %v2644, %v3314
      %v3443 = vmul.f32 %v2646, %v3315
      %v3444 = vmul.f32 %v2457, %v3316
      %v3445 = vmul.f32 %v2459, %v3317
      %v3446 = vmul.f32 %v2650, %v3318
      %v3447 = vmul.f32 %v2652, %v3319
      %v3448 = vmul.f32 %v2461, %v3320
      %v3449 = vmul.f32 %v2463, %v3321
      %v3450 = vmul.f32 %v2654, %v3322
      %v3451 = vmul.f32 %v2656, %v3323
      %v3452 = vmul.f32 %v2467, %v3324
      %v3453 = vmul.f32 %v2469, %v3325
      %v3454 = vmul.f32 %v2660, %v3326
      %v3455 = vmul.f32 %v2662, %v3327
      %v3456 = vmul.f32 %v2471, %v3328
      %v3457 = vmul.f32 %v2473, %v3329
      %v3458 = vmul.f32 %v2664, %v3330
      %v3459 = vmul.f32 %v2666, %v3331
      %v3460 = vmul.f32 %v2477, %v3332
      %v3461 = vmul.f32 %v2479, %v3333
      %v3462 = vmul.f32 %v2670, %v3334
      %v3463 = vmul.f32 %v2672, %v3335
      %v3464 = vmul.f32 %v2481, %v3336
      %v3465 = vmul.f32 %v2483, %v3337
      %v3466 = vmul.f32 %v2674, %v3338
      %v3467 = vmul.f32 %v2676, %v3339
      %v3468 = vmul.f32 %v2487, %v3340
      %v3469 = vmul.f32 %v2489, %v3341
      %v3470 = vmul.f32 %v2680, %v3342
      %v3471 = vmul.f32 %v2682, %v3343
      %v3472 = vmul.f32 %v2491, %v3344
      %v3473 = vmul.f32 %v2493, %v3345
      %v3474 = vmul.f32 %v2684, %v3346
      %v3475 = vmul.f32 %v2686, %v3347
      %v3476 = vmul.f32 %v2497, %v3348
      %v3477 = vmul.f32 %v2499, %v3349
      %v3478 = vmul.f32 %v2690, %v3350
      %v3479 = vmul.f32 %v2692, %v3351
      %v3480 = vmul.f32 %v2501, %v3352
      %v3481 = vmul.f32 %v2503, %v3353
      %v3482 = vmul.f32 %v2694, %v3354
      %v3483 = vmul.f32 %v2696, %v3355
      %v3484 = vmul.f32 %v2507, %v3356
      %v3485 = vmul.f32 %v2509, %v3357
      %v3486 = vmul.f32 %v2700, %v3358
      %v3487 = vmul.f32 %v2702, %v3359
      %v3488 = vmul.f32 %v2511, %v3360
      %v3489 = vmul.f32 %v2513, %v3361
      %v3490 = vmul.f32 %v2704, %v3362
      %v3491 = vmul.f32 %v2706, %v3363
      %v3492 = vmul.f32 %v2517, %v3364
      %v3493 = vmul.f32 %v2519, %v3365
      %v3494 = vmul.f32 %v2710, %v3366
      %v3495 = vmul.f32 %v2712, %v3367
      %v3496 = vmul.f32 %v2521, %v3368
      %v3497 = vmul.f32 %v2523, %v3369
      %v3498 = vmul.f32 %v2714, %v3370
      %v3499 = vmul.f32 %v2716, %v3371
      %v3500 = vmul.f32 %v2527, %v3372
      %v3501 = vmul.f32 %v2529, %v3373
      %v3502 = vmul.f32 %v2720, %v3374
      %v3503 = vmul.f32 %v2722, %v3375
      %v3504 = vmul.f32 %v2531, %v3376
      %v3505 = vmul.f32 %v2533, %v3377
      %v3506 = vmul.f32 %v2724, %v3378
      %v3507 = vmul.f32 %v2726, %v3379
      %v3508 = vmul.f32 %v2537, %v3380
      %v3509 = vmul.f32 %v2539, %v3381
      %v3510 = vmul.f32 %v2730, %v3382
      %v3511 = vmul.f32 %v2732, %v3383
      %v3512 = vmul.f32 %v2541, %v3384
      %v3513 = vmul.f32 %v2543, %v3385
      %v3514 = vmul.f32 %v2734, %v3386
      %v3515 = vmul.f32 %v2736, %v3387
      %v3516 = vmul.f32 %v2547, %v3388
      %v3517 = vmul.f32 %v2549, %v3389
      %v3518 = vmul.f32 %v2740, %v3390
      %v3519 = vmul.f32 %v2742, %v3391
      %v3520 = vmul.f32 %v2551, %v3392
      %v3521 = vmul.f32 %v2553, %v3393
      %v3522 = vmul.f32 %v2744, %v3394
      %v3523 = vmul.f32 %v2746, %v3395
      %v3524 = vmul.f32 %v2557, %v3396
      %v3525 = vmul.f32 %v2559, %v3397
      %v3526 = vmul.f32 %v2750, %v3398
      %v3527 = vmul.f32 %v2752, %v3399
      %v3528 = vmul.f32 %v2561, %v3400
      %v3529 = vmul.f32 %v2563, %v3401
      %v3530 = vmul.f32 %v2754, %v3402
      %v3531 = vmul.f32 %v2756, %v3403
      %v3532 = vmul.f32 %v2567, %v3404
      %v3533 = vmul.f32 %v2569, %v3405
      %v3534 = vmul.f32 %v2760, %v3406
      %v3535 = vmul.f32 %v2762, %v3407
      %v3536 = vmul.f32 %v2571, %v3408
      %v3537 = vmul.f32 %v2573, %v3409
      %v3538 = vmul.f32 %v2764, %v3410
      %v3539 = vmul.f32 %v2766, %v3411
      %v3540 = vmul.f32 %v2577, %v3412
      %v3541 = vmul.f32 %v2579, %v3413
      %v3542 = vmul.f32 %v2770, %v3414
      %v3543 = vmul.f32 %v2772, %v3415
      %v3544 = vmul.f32 %v2581, %v3416
      %v3545 = vmul.f32 %v2583, %v3417
      %v3546 = vmul.f32 %v2774, %v3418
      %v3547 = vmul.f32 %v2776, %v3419
      %v3548 = vmul.f32 %v2587, %v3420
      %v3549 = vmul.f32 %v2589, %v3421
      %v3550 = vmul.f32 %v2780, %v3422
      %v3551 = vmul.f32 %v2782, %v3423
      %v3552 = vmul.f32 %v2591, %v3424
      %v3553 = vmul.f32 %v2593, %v3425
      %v3554 = vmul.f32 %v2784, %v3426
      %v3555 = vmul.f32 %v2786, %v3427
      %3556 = vmatprep.subr.mxu0 %v3489
      %3557 = vmatpush1.msra.mxu0 %v3488
      %3558 = vmatprep.subr.mxu0 %v3485
      %3559 = vmatpush1.msra.mxu0 %v3484
      %3560 = vmatprep.subr.mxu0 %v3481
      %3561 = vmatpush1.msra.mxu0 %v3480
      %3562 = vmatprep.subr.mxu0 %v3477
      %3563 = vmatpush1.msra.mxu0 %v3476
      %3564 = vmatprep.subr.mxu0 %v3473
      %3565 = vmatpush1.msra.mxu0 %v3472
      %3566 = vmatprep.subr.mxu0 %v3469
      %3567 = vmatpush1.msra.mxu0 %v3468
      %3568 = vmatprep.subr.mxu0 %v3465
      %3569 = vmatpush1.msra.mxu0 %v3464
      %3570 = vmatprep.subr.mxu0 %v3461
      %3571 = vmatpush1.msra.mxu0 %v3460
      %3572 = vmatprep.subr.mxu0 %v3457
      %3573 = vmatpush1.msra.mxu0 %v3456
      %3574 = vmatprep.subr.mxu0 %v3453
      %3575 = vmatpush1.msra.mxu0 %v3452
      %3576 = vmatprep.subr.mxu0 %v3449
      %3577 = vmatpush1.msra.mxu0 %v3448
      %3578 = vmatprep.subr.mxu0 %v3445
      %3579 = vmatpush1.msra.mxu0 %v3444
      %3580 = vmatprep.subr.mxu0 %v3441
      %3581 = vmatpush1.msra.mxu0 %v3440
      %3582 = vmatprep.subr.mxu0 %v3437
      %3583 = vmatpush1.msra.mxu0 %v3436
      %3584 = vmatprep.subr.mxu0 %v3433
      %3585 = vmatpush1.msra.mxu0 %v3432
      %3586 = vmatprep.subr.mxu0 %v3429
      %3587 = vmatpush1.msra.mxu0 %v3428
      %3588 = vmatprep.subr.mxu0 %v3553
      %3589 = vmatpush2.msra.mxu0 %v3552
      %3590 = vmatprep.subr.mxu0 %v3549
      %3591 = vmatpush2.msra.mxu0 %v3548
      %3592 = vmatprep.subr.mxu0 %v3545
      %3593 = vmatpush2.msra.mxu0 %v3544
      %3594 = vmatprep.subr.mxu0 %v3541
      %3595 = vmatpush2.msra.mxu0 %v3540
      %3596 = vmatprep.subr.mxu0 %v3537
      %3597 = vmatpush2.msra.mxu0 %v3536
      %3598 = vmatprep.subr.mxu0 %v3533
      %3599 = vmatpush2.msra.mxu0 %v3532
      %3600 = vmatprep.subr.mxu0 %v3529
      %3601 = vmatpush2.msra.mxu0 %v3528
      %3602 = vmatprep.subr.mxu0 %v3525
      %3603 = vmatpush2.msra.mxu0 %v3524
      %3604 = vmatprep.subr.mxu0 %v3521
      %3605 = vmatpush2.msra.mxu0 %v3520
      %3606 = vmatprep.subr.mxu0 %v3517
      %3607 = vmatpush2.msra.mxu0 %v3516
      %3608 = vmatprep.subr.mxu0 %v3513
      %3609 = vmatpush2.msra.mxu0 %v3512
      %3610 = vmatprep.subr.mxu0 %v3509
      %3611 = vmatpush2.msra.mxu0 %v3508
      %3612 = vmatprep.subr.mxu0 %v3505
      %3613 = vmatpush2.msra.mxu0 %v3504
      %3614 = vmatprep.subr.mxu0 %v3501
      %3615 = vmatpush2.msra.mxu0 %v3500
      %3616 = vmatprep.subr.mxu0 %v3497
      %3617 = vmatpush2.msra.mxu0 %v3496
      %3618 = vmatprep.subr.mxu0 %v3493
      %3619 = vmatpush2.msra.mxu0 %v3492
      %3620 = vmatprep.mubr.f32.mxu0 %v820
      %3621 = vmatmul.mubr.f32.gmra.mxu0 %v819
      %v3622 = vpop.f32.mrf.mxu0
      %v3623 = vadd.f32 0.0, %v3622
      %v3624 = vpop.f32.mrf.mxu0
      %v3625 = vadd.f32 0.0, %v3624
      %3626 = vdwg.mxu0
      %3627 = vmatprep.subr.mxu0 %v3491
      %3628 = vmatpush1.msra.mxu0 %v3490
      %3629 = vmatprep.subr.mxu0 %v3487
      %3630 = vmatpush1.msra.mxu0 %v3486
      %3631 = vmatprep.subr.mxu0 %v3483
      %3632 = vmatpush1.msra.mxu0 %v3482
      %3633 = vmatprep.subr.mxu0 %v3479
      %3634 = vmatpush1.msra.mxu0 %v3478
      %3635 = vmatprep.subr.mxu0 %v3475
      %3636 = vmatpush1.msra.mxu0 %v3474
      %3637 = vmatprep.subr.mxu0 %v3471
      %3638 = vmatpush1.msra.mxu0 %v3470
      %3639 = vmatprep.subr.mxu0 %v3467
      %3640 = vmatpush1.msra.mxu0 %v3466
      %3641 = vmatprep.subr.mxu0 %v3463
      %3642 = vmatpush1.msra.mxu0 %v3462
      %3643 = vmatprep.subr.mxu0 %v3459
      %3644 = vmatpush1.msra.mxu0 %v3458
      %3645 = vmatprep.subr.mxu0 %v3455
      %3646 = vmatpush1.msra.mxu0 %v3454
      %3647 = vmatprep.subr.mxu0 %v3451
      %3648 = vmatpush1.msra.mxu0 %v3450
      %3649 = vmatprep.subr.mxu0 %v3447
      %3650 = vmatpush1.msra.mxu0 %v3446
      %3651 = vmatprep.subr.mxu0 %v3443
      %3652 = vmatpush1.msra.mxu0 %v3442
      %3653 = vmatprep.subr.mxu0 %v3439
      %3654 = vmatpush1.msra.mxu0 %v3438
      %3655 = vmatprep.subr.mxu0 %v3435
      %3656 = vmatpush1.msra.mxu0 %v3434
      %3657 = vmatprep.subr.mxu0 %v3431
      %3658 = vmatpush1.msra.mxu0 %v3430
      %3659 = vmatprep.subr.mxu0 %v3555
      %3660 = vmatpush2.msra.mxu0 %v3554
      %3661 = vmatprep.subr.mxu0 %v3551
      %3662 = vmatpush2.msra.mxu0 %v3550
      %3663 = vmatprep.subr.mxu0 %v3547
      %3664 = vmatpush2.msra.mxu0 %v3546
      %3665 = vmatprep.subr.mxu0 %v3543
      %3666 = vmatpush2.msra.mxu0 %v3542
      %3667 = vmatprep.subr.mxu0 %v3539
      %3668 = vmatpush2.msra.mxu0 %v3538
      %3669 = vmatprep.subr.mxu0 %v3535
      %3670 = vmatpush2.msra.mxu0 %v3534
      %3671 = vmatprep.subr.mxu0 %v3531
      %3672 = vmatpush2.msra.mxu0 %v3530
      %3673 = vmatprep.subr.mxu0 %v3527
      %3674 = vmatpush2.msra.mxu0 %v3526
      %3675 = vmatprep.subr.mxu0 %v3523
      %3676 = vmatpush2.msra.mxu0 %v3522
      %3677 = vmatprep.subr.mxu0 %v3519
      %3678 = vmatpush2.msra.mxu0 %v3518
      %3679 = vmatprep.subr.mxu0 %v3515
      %3680 = vmatpush2.msra.mxu0 %v3514
      %3681 = vmatprep.subr.mxu0 %v3511
      %3682 = vmatpush2.msra.mxu0 %v3510
      %3683 = vmatprep.subr.mxu0 %v3507
      %3684 = vmatpush2.msra.mxu0 %v3506
      %3685 = vmatprep.subr.mxu0 %v3503
      %3686 = vmatpush2.msra.mxu0 %v3502
      %3687 = vmatprep.subr.mxu0 %v3499
      %3688 = vmatpush2.msra.mxu0 %v3498
      %3689 = vmatprep.subr.mxu0 %v3495
      %3690 = vmatpush2.msra.mxu0 %v3494
      %3691 = vmatprep.mubr.f32.mxu0 %v820
      %3692 = vmatmul.mubr.f32.gmra.mxu0 %v819
      %v3693 = vpop.f32.mrf.mxu0
      %v3694 = vadd.f32 0.0, %v3693
      %v3695 = vpop.f32.mrf.mxu0
      %v3696 = vadd.f32 0.0, %v3695
      %3697 = vdwg.mxu0
      %v3698 = vld [vmem:[%s3 + $0x20] sm:$0xff]
      %v3699 = vld [vmem:[%s3 + $0x28] sm:$0xff]
      %v3700 = vld [vmem:[%s3 + $0x60] sm:$0xff]
      %v3701 = vld [vmem:[%s3 + $0x68] sm:$0xff]
      %v3702 = vld [vmem:[%s3 + $0xa0] sm:$0xff]
      %v3703 = vld [vmem:[%s3 + $0xa8] sm:$0xff]
      %v3704 = vld [vmem:[%s3 + $0xe0] sm:$0xff]
      %v3705 = vld [vmem:[%s3 + $0xe8] sm:$0xff]
      %v3706 = vld [vmem:[%s3 + $0x120] sm:$0xff]
      %v3707 = vld [vmem:[%s3 + $0x128] sm:$0xff]
      %v3708 = vld [vmem:[%s3 + $0x160] sm:$0xff]
      %v3709 = vld [vmem:[%s3 + $0x168] sm:$0xff]
      %v3710 = vld [vmem:[%s3 + $0x1a0] sm:$0xff]
      %v3711 = vld [vmem:[%s3 + $0x1a8] sm:$0xff]
      %v3712 = vld [vmem:[%s3 + $0x1e0] sm:$0xff]
      %v3713 = vld [vmem:[%s3 + $0x1e8] sm:$0xff]
      %v3714 = vld [vmem:[%s4 + $0x8] sm:$0xf]
      %v3716 = vlaneseq
      %v3717 = vshrl.u32 %v3716, 7
      %v3718 = vsub.s32 0, %v3717
      %v3719 = vrot.slane %v3714, %v3718
      %v3720 = vlaneseq
      %v3721 = vshrl.u32 %v3720, 7
      %v3722 = vsub.s32 1, %v3721
      %v3723 = vrot.slane %v3714, %v3722
      %v3724 = vlaneseq
      %v3725 = vshrl.u32 %v3724, 7
      %v3726 = vsub.s32 2, %v3725
      %v3727 = vrot.slane %v3714, %v3726
      %v3728 = vlaneseq
      %v3729 = vshrl.u32 %v3728, 7
      %v3730 = vsub.s32 3, %v3729
      %v3731 = vrot.slane %v3714, %v3730
      %v3752 = vunpack.c.l.b16 %v3698
      %v3753 = vunpack.c.h.b16 %v3698
      %v3754 = vunpack.c.l.b16 %v3699
      %v3755 = vunpack.c.h.b16 %v3699
      %v3756 = vunpack.c.l.b16 %v3700
      %v3757 = vunpack.c.h.b16 %v3700
      %v3758 = vunpack.c.l.b16 %v3701
      %v3759 = vunpack.c.h.b16 %v3701
      %v3760 = vunpack.c.l.b16 %v3702
      %v3761 = vunpack.c.h.b16 %v3702
      %v3762 = vunpack.c.l.b16 %v3703
      %v3763 = vunpack.c.h.b16 %v3703
      %v3764 = vunpack.c.l.b16 %v3704
      %v3765 = vunpack.c.h.b16 %v3704
      %v3766 = vunpack.c.l.b16 %v3705
      %v3767 = vunpack.c.h.b16 %v3705
      %v3768 = vunpack.c.l.b16 %v3706
      %v3769 = vunpack.c.h.b16 %v3706
      %v3770 = vunpack.c.l.b16 %v3707
      %v3771 = vunpack.c.h.b16 %v3707
      %v3772 = vunpack.c.l.b16 %v3708
      %v3773 = vunpack.c.h.b16 %v3708
      %v3774 = vunpack.c.l.b16 %v3709
      %v3775 = vunpack.c.h.b16 %v3709
      %v3776 = vunpack.c.l.b16 %v3710
      %v3777 = vunpack.c.h.b16 %v3710
      %v3778 = vunpack.c.l.b16 %v3711
      %v3779 = vunpack.c.h.b16 %v3711
      %v3780 = vunpack.c.l.b16 %v3712
      %v3781 = vunpack.c.h.b16 %v3712
      %v3782 = vunpack.c.l.b16 %v3713
      %v3783 = vunpack.c.h.b16 %v3713
      %v3784 = vpack.c.b16 %v3756, %v3752
      %v3785 = vpack.c.b16 %v3757, %v3753
      %v3786 = vpack.c.b16 %v3758, %v3754
      %v3787 = vpack.c.b16 %v3759, %v3755
      %v3788 = vpack.c.b16 %v3764, %v3760
      %v3789 = vpack.c.b16 %v3765, %v3761
      %v3790 = vpack.c.b16 %v3766, %v3762
      %v3791 = vpack.c.b16 %v3767, %v3763
      %v3792 = vpack.c.b16 %v3772, %v3768
      %v3793 = vpack.c.b16 %v3773, %v3769
      %v3794 = vpack.c.b16 %v3774, %v3770
      %v3795 = vpack.c.b16 %v3775, %v3771
      %v3796 = vpack.c.b16 %v3780, %v3776
      %v3797 = vpack.c.b16 %v3781, %v3777
      %v3798 = vpack.c.b16 %v3782, %v3778
      %v3799 = vpack.c.b16 %v3783, %v3779
      %3816 = vmatprep.subr.bf16.mxu0 0
      %3817 = vmatpush1.bf16.msra.mxu0 0
      %3818 = vmatprep.subr.bf16.mxu0 0
      %3819 = vmatpush1.bf16.msra.mxu0 0
      %3820 = vmatprep.subr.bf16.mxu0 0
      %3821 = vmatpush1.bf16.msra.mxu0 0
      %3822 = vmatprep.subr.bf16.mxu0 0
      %3823 = vmatpush1.bf16.msra.mxu0 0
      %3824 = vmatprep.subr.bf16.mxu0 %v3797
      %3825 = vmatpush1.bf16.msra.mxu0 %v3796
      %3826 = vmatprep.subr.bf16.mxu0 %v3793
      %3827 = vmatpush1.bf16.msra.mxu0 %v3792
      %3828 = vmatprep.subr.bf16.mxu0 %v3789
      %3829 = vmatpush1.bf16.msra.mxu0 %v3788
      %3830 = vmatprep.subr.bf16.mxu0 %v3785
      %3831 = vmatpush1.bf16.msra.mxu0 %v3784
      %3832 = vmatprep.subr.bf16.mxu0 0
      %3833 = vmatpush2.bf16.msra.mxu0 0
      %3834 = vmatprep.subr.bf16.mxu0 0
      %3835 = vmatpush2.bf16.msra.mxu0 0
      %3836 = vmatprep.subr.bf16.mxu0 0
      %3837 = vmatpush2.bf16.msra.mxu0 0
      %3838 = vmatprep.subr.bf16.mxu0 0
      %3839 = vmatpush2.bf16.msra.mxu0 0
      %3840 = vmatprep.subr.bf16.mxu0 0
      %3841 = vmatpush2.bf16.msra.mxu0 0
      %3842 = vmatprep.subr.bf16.mxu0 0
      %3843 = vmatpush2.bf16.msra.mxu0 0
      %3844 = vmatprep.subr.bf16.mxu0 0
      %3845 = vmatpush2.bf16.msra.mxu0 0
      %3846 = vmatprep.subr.bf16.mxu0 0
      %3847 = vmatpush2.bf16.msra.mxu0 0
      %3848 = vmatprep.mubr.bf16.mxu0 0
      %3849 = vmatmul.mubr.bf16.gmra.mxu0 %v941
      %v3850 = vpop.f32.mrf.mxu0
      %v3851 = vadd.f32 %v3719, %v3850
      %v3852 = vpop.f32.mrf.mxu0
      %v3853 = vadd.f32 %v3723, %v3852
      %v3854 = vpop.f32.mrf.mxu0
      %v3855 = vadd.f32 %v3719, %v3854
      %v3856 = vpop.f32.mrf.mxu0
      %v3857 = vadd.f32 %v3723, %v3856
      %3858 = vmatprep.mubr.bf16.mxu0 0
      %3859 = vmatmul.mubr.bf16.gmra.mxu0 %v944
      %v3860 = vpop.f32.mrf.mxu0
      %v3861 = vadd.f32 %v3719, %v3860
      %v3862 = vpop.f32.mrf.mxu0
      %v3863 = vadd.f32 %v3723, %v3862
      %v3864 = vpop.f32.mrf.mxu0
      %v3865 = vadd.f32 %v3719, %v3864
      %v3866 = vpop.f32.mrf.mxu0
      %v3867 = vadd.f32 %v3723, %v3866
      %3868 = vmatprep.mubr.bf16.mxu0 0
      %3869 = vmatmul.mubr.bf16.gmra.mxu0 %v947
      %v3870 = vpop.f32.mrf.mxu0
      %v3871 = vadd.f32 %v3719, %v3870
      %v3872 = vpop.f32.mrf.mxu0
      %v3873 = vadd.f32 %v3723, %v3872
      %v3874 = vpop.f32.mrf.mxu0
      %v3875 = vadd.f32 %v3719, %v3874
      %v3876 = vpop.f32.mrf.mxu0
      %v3877 = vadd.f32 %v3723, %v3876
      %3878 = vmatprep.mubr.bf16.mxu0 0
      %3879 = vmatmul.mubr.bf16.gmra.mxu0 %v950
      %v3880 = vpop.f32.mrf.mxu0
      %v3881 = vadd.f32 %v3719, %v3880
      %v3882 = vpop.f32.mrf.mxu0
      %v3883 = vadd.f32 %v3723, %v3882
      %v3884 = vpop.f32.mrf.mxu0
      %v3885 = vadd.f32 %v3719, %v3884
      %v3886 = vpop.f32.mrf.mxu0
      %v3887 = vadd.f32 %v3723, %v3886
      %3888 = vmatprep.mubr.bf16.mxu0 0
      %3889 = vmatmul.mubr.bf16.gmra.mxu0 %v953
      %v3890 = vpop.f32.mrf.mxu0
      %v3891 = vadd.f32 %v3719, %v3890
      %v3892 = vpop.f32.mrf.mxu0
      %v3893 = vadd.f32 %v3723, %v3892
      %v3894 = vpop.f32.mrf.mxu0
      %v3895 = vadd.f32 %v3719, %v3894
      %v3896 = vpop.f32.mrf.mxu0
      %v3897 = vadd.f32 %v3723, %v3896
      %3898 = vmatprep.mubr.bf16.mxu0 0
      %3899 = vmatmul.mubr.bf16.gmra.mxu0 %v956
      %v3900 = vpop.f32.mrf.mxu0
      %v3901 = vadd.f32 %v3719, %v3900
      %v3902 = vpop.f32.mrf.mxu0
      %v3903 = vadd.f32 %v3723, %v3902
      %v3904 = vpop.f32.mrf.mxu0
      %v3905 = vadd.f32 %v3719, %v3904
      %v3906 = vpop.f32.mrf.mxu0
      %v3907 = vadd.f32 %v3723, %v3906
      %3908 = vmatprep.mubr.bf16.mxu0 0
      %3909 = vmatmul.mubr.bf16.gmra.mxu0 %v959
      %v3910 = vpop.f32.mrf.mxu0
      %v3911 = vadd.f32 %v3719, %v3910
      %v3912 = vpop.f32.mrf.mxu0
      %v3913 = vadd.f32 %v3723, %v3912
      %v3914 = vpop.f32.mrf.mxu0
      %v3915 = vadd.f32 %v3719, %v3914
      %v3916 = vpop.f32.mrf.mxu0
      %v3917 = vadd.f32 %v3723, %v3916
      %3918 = vmatprep.mubr.bf16.mxu0 0
      %3919 = vmatmul.mubr.bf16.gmra.mxu0 %v962
      %v3920 = vpop.f32.mrf.mxu0
      %v3921 = vadd.f32 %v3719, %v3920
      %v3922 = vpop.f32.mrf.mxu0
      %v3923 = vadd.f32 %v3723, %v3922
      %v3924 = vpop.f32.mrf.mxu0
      %v3925 = vadd.f32 %v3719, %v3924
      %v3926 = vpop.f32.mrf.mxu0
      %v3927 = vadd.f32 %v3723, %v3926
      %3928 = vmatprep.mubr.bf16.mxu0 0
      %3929 = vmatmul.mubr.bf16.gmra.mxu0 %v965
      %v3930 = vpop.f32.mrf.mxu0
      %v3931 = vadd.f32 %v3719, %v3930
      %v3932 = vpop.f32.mrf.mxu0
      %v3933 = vadd.f32 %v3723, %v3932
      %v3934 = vpop.f32.mrf.mxu0
      %v3935 = vadd.f32 %v3719, %v3934
      %v3936 = vpop.f32.mrf.mxu0
      %v3937 = vadd.f32 %v3723, %v3936
      %3938 = vmatprep.mubr.bf16.mxu0 0
      %3939 = vmatmul.mubr.bf16.gmra.mxu0 %v968
      %v3940 = vpop.f32.mrf.mxu0
      %v3941 = vadd.f32 %v3719, %v3940
      %v3942 = vpop.f32.mrf.mxu0
      %v3943 = vadd.f32 %v3723, %v3942
      %v3944 = vpop.f32.mrf.mxu0
      %v3945 = vadd.f32 %v3719, %v3944
      %v3946 = vpop.f32.mrf.mxu0
      %v3947 = vadd.f32 %v3723, %v3946
      %3948 = vmatprep.mubr.bf16.mxu0 0
      %3949 = vmatmul.mubr.bf16.gmra.mxu0 %v971
      %v3950 = vpop.f32.mrf.mxu0
      %v3951 = vadd.f32 %v3719, %v3950
      %v3952 = vpop.f32.mrf.mxu0
      %v3953 = vadd.f32 %v3723, %v3952
      %v3954 = vpop.f32.mrf.mxu0
      %v3955 = vadd.f32 %v3719, %v3954
      %v3956 = vpop.f32.mrf.mxu0
      %v3957 = vadd.f32 %v3723, %v3956
      %3958 = vmatprep.mubr.bf16.mxu0 0
      %3959 = vmatmul.mubr.bf16.gmra.mxu0 %v974
      %v3960 = vpop.f32.mrf.mxu0
      %v3961 = vadd.f32 %v3719, %v3960
      %v3962 = vpop.f32.mrf.mxu0
      %v3963 = vadd.f32 %v3723, %v3962
      %v3964 = vpop.f32.mrf.mxu0
      %v3965 = vadd.f32 %v3719, %v3964
      %v3966 = vpop.f32.mrf.mxu0
      %v3967 = vadd.f32 %v3723, %v3966
      %3968 = vmatprep.mubr.bf16.mxu0 0
      %3969 = vmatmul.mubr.bf16.gmra.mxu0 %v977
      %v3970 = vpop.f32.mrf.mxu0
      %v3971 = vadd.f32 %v3719, %v3970
      %v3972 = vpop.f32.mrf.mxu0
      %v3973 = vadd.f32 %v3723, %v3972
      %v3974 = vpop.f32.mrf.mxu0
      %v3975 = vadd.f32 %v3719, %v3974
      %v3976 = vpop.f32.mrf.mxu0
      %v3977 = vadd.f32 %v3723, %v3976
      %3978 = vmatprep.mubr.bf16.mxu0 0
      %3979 = vmatmul.mubr.bf16.gmra.mxu0 %v980
      %v3980 = vpop.f32.mrf.mxu0
      %v3981 = vadd.f32 %v3719, %v3980
      %v3982 = vpop.f32.mrf.mxu0
      %v3983 = vadd.f32 %v3723, %v3982
      %v3984 = vpop.f32.mrf.mxu0
      %v3985 = vadd.f32 %v3719, %v3984
      %v3986 = vpop.f32.mrf.mxu0
      %v3987 = vadd.f32 %v3723, %v3986
      %3988 = vmatprep.mubr.bf16.mxu0 0
      %3989 = vmatmul.mubr.bf16.gmra.mxu0 %v983
      %v3990 = vpop.f32.mrf.mxu0
      %v3991 = vadd.f32 %v3719, %v3990
      %v3992 = vpop.f32.mrf.mxu0
      %v3993 = vadd.f32 %v3723, %v3992
      %v3994 = vpop.f32.mrf.mxu0
      %v3995 = vadd.f32 %v3719, %v3994
      %v3996 = vpop.f32.mrf.mxu0
      %v3997 = vadd.f32 %v3723, %v3996
      %3998 = vmatprep.mubr.bf16.mxu0 0
      %3999 = vmatmul.mubr.bf16.gmra.mxu0 %v986
      %v4000 = vpop.f32.mrf.mxu0
      %v4001 = vadd.f32 %v3719, %v4000
      %v4002 = vpop.f32.mrf.mxu0
      %v4003 = vadd.f32 %v3723, %v4002
      %v4004 = vpop.f32.mrf.mxu0
      %v4005 = vadd.f32 %v3719, %v4004
      %v4006 = vpop.f32.mrf.mxu0
      %v4007 = vadd.f32 %v3723, %v4006
      %4008 = vdwg.mxu0
      %4009 = vmatprep.subr.bf16.mxu0 0
      %4010 = vmatpush1.bf16.msra.mxu0 0
      %4011 = vmatprep.subr.bf16.mxu0 0
      %4012 = vmatpush1.bf16.msra.mxu0 0
      %4013 = vmatprep.subr.bf16.mxu0 0
      %4014 = vmatpush1.bf16.msra.mxu0 0
      %4015 = vmatprep.subr.bf16.mxu0 0
      %4016 = vmatpush1.bf16.msra.mxu0 0
      %4017 = vmatprep.subr.bf16.mxu0 %v3799
      %4018 = vmatpush1.bf16.msra.mxu0 %v3798
      %4019 = vmatprep.subr.bf16.mxu0 %v3795
      %4020 = vmatpush1.bf16.msra.mxu0 %v3794
      %4021 = vmatprep.subr.bf16.mxu0 %v3791
      %4022 = vmatpush1.bf16.msra.mxu0 %v3790
      %4023 = vmatprep.subr.bf16.mxu0 %v3787
      %4024 = vmatpush1.bf16.msra.mxu0 %v3786
      %4025 = vmatprep.subr.bf16.mxu0 0
      %4026 = vmatpush2.bf16.msra.mxu0 0
      %4027 = vmatprep.subr.bf16.mxu0 0
      %4028 = vmatpush2.bf16.msra.mxu0 0
      %4029 = vmatprep.subr.bf16.mxu0 0
      %4030 = vmatpush2.bf16.msra.mxu0 0
      %4031 = vmatprep.subr.bf16.mxu0 0
      %4032 = vmatpush2.bf16.msra.mxu0 0
      %4033 = vmatprep.subr.bf16.mxu0 0
      %4034 = vmatpush2.bf16.msra.mxu0 0
      %4035 = vmatprep.subr.bf16.mxu0 0
      %4036 = vmatpush2.bf16.msra.mxu0 0
      %4037 = vmatprep.subr.bf16.mxu0 0
      %4038 = vmatpush2.bf16.msra.mxu0 0
      %4039 = vmatprep.subr.bf16.mxu0 0
      %4040 = vmatpush2.bf16.msra.mxu0 0
      %4041 = vmatprep.mubr.bf16.mxu0 0
      %4042 = vmatmul.mubr.bf16.gmra.mxu0 %v941
      %v4043 = vpop.f32.mrf.mxu0
      %v4044 = vadd.f32 %v3727, %v4043
      %v4045 = vpop.f32.mrf.mxu0
      %v4046 = vadd.f32 %v3731, %v4045
      %v4047 = vpop.f32.mrf.mxu0
      %v4048 = vadd.f32 %v3727, %v4047
      %v4049 = vpop.f32.mrf.mxu0
      %v4050 = vadd.f32 %v3731, %v4049
      %4051 = vmatprep.mubr.bf16.mxu0 0
      %4052 = vmatmul.mubr.bf16.gmra.mxu0 %v944
      %v4053 = vpop.f32.mrf.mxu0
      %v4054 = vadd.f32 %v3727, %v4053
      %v4055 = vpop.f32.mrf.mxu0
      %v4056 = vadd.f32 %v3731, %v4055
      %v4057 = vpop.f32.mrf.mxu0
      %v4058 = vadd.f32 %v3727, %v4057
      %v4059 = vpop.f32.mrf.mxu0
      %v4060 = vadd.f32 %v3731, %v4059
      %4061 = vmatprep.mubr.bf16.mxu0 0
      %4062 = vmatmul.mubr.bf16.gmra.mxu0 %v947
      %v4063 = vpop.f32.mrf.mxu0
      %v4064 = vadd.f32 %v3727, %v4063
      %v4065 = vpop.f32.mrf.mxu0
      %v4066 = vadd.f32 %v3731, %v4065
      %v4067 = vpop.f32.mrf.mxu0
      %v4068 = vadd.f32 %v3727, %v4067
      %v4069 = vpop.f32.mrf.mxu0
      %v4070 = vadd.f32 %v3731, %v4069
      %4071 = vmatprep.mubr.bf16.mxu0 0
      %4072 = vmatmul.mubr.bf16.gmra.mxu0 %v950
      %v4073 = vpop.f32.mrf.mxu0
      %v4074 = vadd.f32 %v3727, %v4073
      %v4075 = vpop.f32.mrf.mxu0
      %v4076 = vadd.f32 %v3731, %v4075
      %v4077 = vpop.f32.mrf.mxu0
      %v4078 = vadd.f32 %v3727, %v4077
      %v4079 = vpop.f32.mrf.mxu0
      %v4080 = vadd.f32 %v3731, %v4079
      %4081 = vmatprep.mubr.bf16.mxu0 0
      %4082 = vmatmul.mubr.bf16.gmra.mxu0 %v953
      %v4083 = vpop.f32.mrf.mxu0
      %v4084 = vadd.f32 %v3727, %v4083
      %v4085 = vpop.f32.mrf.mxu0
      %v4086 = vadd.f32 %v3731, %v4085
      %v4087 = vpop.f32.mrf.mxu0
      %v4088 = vadd.f32 %v3727, %v4087
      %v4089 = vpop.f32.mrf.mxu0
      %v4090 = vadd.f32 %v3731, %v4089
      %4091 = vmatprep.mubr.bf16.mxu0 0
      %4092 = vmatmul.mubr.bf16.gmra.mxu0 %v956
      %v4093 = vpop.f32.mrf.mxu0
      %v4094 = vadd.f32 %v3727, %v4093
      %v4095 = vpop.f32.mrf.mxu0
      %v4096 = vadd.f32 %v3731, %v4095
      %v4097 = vpop.f32.mrf.mxu0
      %v4098 = vadd.f32 %v3727, %v4097
      %v4099 = vpop.f32.mrf.mxu0
      %v4100 = vadd.f32 %v3731, %v4099
      %4101 = vmatprep.mubr.bf16.mxu0 0
      %4102 = vmatmul.mubr.bf16.gmra.mxu0 %v959
      %v4103 = vpop.f32.mrf.mxu0
      %v4104 = vadd.f32 %v3727, %v4103
      %v4105 = vpop.f32.mrf.mxu0
      %v4106 = vadd.f32 %v3731, %v4105
      %v4107 = vpop.f32.mrf.mxu0
      %v4108 = vadd.f32 %v3727, %v4107
      %v4109 = vpop.f32.mrf.mxu0
      %v4110 = vadd.f32 %v3731, %v4109
      %4111 = vmatprep.mubr.bf16.mxu0 0
      %4112 = vmatmul.mubr.bf16.gmra.mxu0 %v962
      %v4113 = vpop.f32.mrf.mxu0
      %v4114 = vadd.f32 %v3727, %v4113
      %v4115 = vpop.f32.mrf.mxu0
      %v4116 = vadd.f32 %v3731, %v4115
      %v4117 = vpop.f32.mrf.mxu0
      %v4118 = vadd.f32 %v3727, %v4117
      %v4119 = vpop.f32.mrf.mxu0
      %v4120 = vadd.f32 %v3731, %v4119
      %4121 = vmatprep.mubr.bf16.mxu0 0
      %4122 = vmatmul.mubr.bf16.gmra.mxu0 %v965
      %v4123 = vpop.f32.mrf.mxu0
      %v4124 = vadd.f32 %v3727, %v4123
      %v4125 = vpop.f32.mrf.mxu0
      %v4126 = vadd.f32 %v3731, %v4125
      %v4127 = vpop.f32.mrf.mxu0
      %v4128 = vadd.f32 %v3727, %v4127
      %v4129 = vpop.f32.mrf.mxu0
      %v4130 = vadd.f32 %v3731, %v4129
      %4131 = vmatprep.mubr.bf16.mxu0 0
      %4132 = vmatmul.mubr.bf16.gmra.mxu0 %v968
      %v4133 = vpop.f32.mrf.mxu0
      %v4134 = vadd.f32 %v3727, %v4133
      %v4135 = vpop.f32.mrf.mxu0
      %v4136 = vadd.f32 %v3731, %v4135
      %v4137 = vpop.f32.mrf.mxu0
      %v4138 = vadd.f32 %v3727, %v4137
      %v4139 = vpop.f32.mrf.mxu0
      %v4140 = vadd.f32 %v3731, %v4139
      %4141 = vmatprep.mubr.bf16.mxu0 0
      %4142 = vmatmul.mubr.bf16.gmra.mxu0 %v971
      %v4143 = vpop.f32.mrf.mxu0
      %v4144 = vadd.f32 %v3727, %v4143
      %v4145 = vpop.f32.mrf.mxu0
      %v4146 = vadd.f32 %v3731, %v4145
      %v4147 = vpop.f32.mrf.mxu0
      %v4148 = vadd.f32 %v3727, %v4147
      %v4149 = vpop.f32.mrf.mxu0
      %v4150 = vadd.f32 %v3731, %v4149
      %4151 = vmatprep.mubr.bf16.mxu0 0
      %4152 = vmatmul.mubr.bf16.gmra.mxu0 %v974
      %v4153 = vpop.f32.mrf.mxu0
      %v4154 = vadd.f32 %v3727, %v4153
      %v4155 = vpop.f32.mrf.mxu0
      %v4156 = vadd.f32 %v3731, %v4155
      %v4157 = vpop.f32.mrf.mxu0
      %v4158 = vadd.f32 %v3727, %v4157
      %v4159 = vpop.f32.mrf.mxu0
      %v4160 = vadd.f32 %v3731, %v4159
      %4161 = vmatprep.mubr.bf16.mxu0 0
      %4162 = vmatmul.mubr.bf16.gmra.mxu0 %v977
      %v4163 = vpop.f32.mrf.mxu0
      %v4164 = vadd.f32 %v3727, %v4163
      %v4165 = vpop.f32.mrf.mxu0
      %v4166 = vadd.f32 %v3731, %v4165
      %v4167 = vpop.f32.mrf.mxu0
      %v4168 = vadd.f32 %v3727, %v4167
      %v4169 = vpop.f32.mrf.mxu0
      %v4170 = vadd.f32 %v3731, %v4169
      %4171 = vmatprep.mubr.bf16.mxu0 0
      %4172 = vmatmul.mubr.bf16.gmra.mxu0 %v980
      %v4173 = vpop.f32.mrf.mxu0
      %v4174 = vadd.f32 %v3727, %v4173
      %v4175 = vpop.f32.mrf.mxu0
      %v4176 = vadd.f32 %v3731, %v4175
      %v4177 = vpop.f32.mrf.mxu0
      %v4178 = vadd.f32 %v3727, %v4177
      %v4179 = vpop.f32.mrf.mxu0
      %v4180 = vadd.f32 %v3731, %v4179
      %4181 = vmatprep.mubr.bf16.mxu0 0
      %4182 = vmatmul.mubr.bf16.gmra.mxu0 %v983
      %v4183 = vpop.f32.mrf.mxu0
      %v4184 = vadd.f32 %v3727, %v4183
      %v4185 = vpop.f32.mrf.mxu0
      %v4186 = vadd.f32 %v3731, %v4185
      %v4187 = vpop.f32.mrf.mxu0
      %v4188 = vadd.f32 %v3727, %v4187
      %v4189 = vpop.f32.mrf.mxu0
      %v4190 = vadd.f32 %v3731, %v4189
      %4191 = vmatprep.mubr.bf16.mxu0 0
      %4192 = vmatmul.mubr.bf16.gmra.mxu0 %v986
      %v4193 = vpop.f32.mrf.mxu0
      %v4194 = vadd.f32 %v3727, %v4193
      %v4195 = vpop.f32.mrf.mxu0
      %v4196 = vadd.f32 %v3731, %v4195
      %v4197 = vpop.f32.mrf.mxu0
      %v4198 = vadd.f32 %v3727, %v4197
      %v4199 = vpop.f32.mrf.mxu0
      %v4200 = vadd.f32 %v3731, %v4199
      %4201 = vdwg.mxu0
      %v4202 = vsub.f32 0.0, %v3851
      %v4203 = vsub.f32 0.0, %v3853
      %v4204 = vsub.f32 0.0, %v4044
      %v4205 = vsub.f32 0.0, %v4046
      %v4206 = vsub.f32 0.0, %v3855
      %v4207 = vsub.f32 0.0, %v3857
      %v4208 = vsub.f32 0.0, %v4048
      %v4209 = vsub.f32 0.0, %v4050
      %v4210 = vsub.f32 0.0, %v3861
      %v4211 = vsub.f32 0.0, %v3863
      %v4212 = vsub.f32 0.0, %v4054
      %v4213 = vsub.f32 0.0, %v4056
      %v4214 = vsub.f32 0.0, %v3865
      %v4215 = vsub.f32 0.0, %v3867
      %v4216 = vsub.f32 0.0, %v4058
      %v4217 = vsub.f32 0.0, %v4060
      %v4218 = vsub.f32 0.0, %v3871
      %v4219 = vsub.f32 0.0, %v3873
      %v4220 = vsub.f32 0.0, %v4064
      %v4221 = vsub.f32 0.0, %v4066
      %v4222 = vsub.f32 0.0, %v3875
      %v4223 = vsub.f32 0.0, %v3877
      %v4224 = vsub.f32 0.0, %v4068
      %v4225 = vsub.f32 0.0, %v4070
      %v4226 = vsub.f32 0.0, %v3881
      %v4227 = vsub.f32 0.0, %v3883
      %v4228 = vsub.f32 0.0, %v4074
      %v4229 = vsub.f32 0.0, %v4076
      %v4230 = vsub.f32 0.0, %v3885
      %v4231 = vsub.f32 0.0, %v3887
      %v4232 = vsub.f32 0.0, %v4078
      %v4233 = vsub.f32 0.0, %v4080
      %v4234 = vsub.f32 0.0, %v3891
      %v4235 = vsub.f32 0.0, %v3893
      %v4236 = vsub.f32 0.0, %v4084
      %v4237 = vsub.f32 0.0, %v4086
      %v4238 = vsub.f32 0.0, %v3895
      %v4239 = vsub.f32 0.0, %v3897
      %v4240 = vsub.f32 0.0, %v4088
      %v4241 = vsub.f32 0.0, %v4090
      %v4242 = vsub.f32 0.0, %v3901
      %v4243 = vsub.f32 0.0, %v3903
      %v4244 = vsub.f32 0.0, %v4094
      %v4245 = vsub.f32 0.0, %v4096
      %v4246 = vsub.f32 0.0, %v3905
      %v4247 = vsub.f32 0.0, %v3907
      %v4248 = vsub.f32 0.0, %v4098
      %v4249 = vsub.f32 0.0, %v4100
      %v4250 = vsub.f32 0.0, %v3911
      %v4251 = vsub.f32 0.0, %v3913
      %v4252 = vsub.f32 0.0, %v4104
      %v4253 = vsub.f32 0.0, %v4106
      %v4254 = vsub.f32 0.0, %v3915
      %v4255 = vsub.f32 0.0, %v3917
      %v4256 = vsub.f32 0.0, %v4108
      %v4257 = vsub.f32 0.0, %v4110
      %v4258 = vsub.f32 0.0, %v3921
      %v4259 = vsub.f32 0.0, %v3923
      %v4260 = vsub.f32 0.0, %v4114
      %v4261 = vsub.f32 0.0, %v4116
      %v4262 = vsub.f32 0.0, %v3925
      %v4263 = vsub.f32 0.0, %v3927
      %v4264 = vsub.f32 0.0, %v4118
      %v4265 = vsub.f32 0.0, %v4120
      %v4266 = vsub.f32 0.0, %v3931
      %v4267 = vsub.f32 0.0, %v3933
      %v4268 = vsub.f32 0.0, %v4124
      %v4269 = vsub.f32 0.0, %v4126
      %v4270 = vsub.f32 0.0, %v3935
      %v4271 = vsub.f32 0.0, %v3937
      %v4272 = vsub.f32 0.0, %v4128
      %v4273 = vsub.f32 0.0, %v4130
      %v4274 = vsub.f32 0.0, %v3941
      %v4275 = vsub.f32 0.0, %v3943
      %v4276 = vsub.f32 0.0, %v4134
      %v4277 = vsub.f32 0.0, %v4136
      %v4278 = vsub.f32 0.0, %v3945
      %v4279 = vsub.f32 0.0, %v3947
      %v4280 = vsub.f32 0.0, %v4138
      %v4281 = vsub.f32 0.0, %v4140
      %v4282 = vsub.f32 0.0, %v3951
      %v4283 = vsub.f32 0.0, %v3953
      %v4284 = vsub.f32 0.0, %v4144
      %v4285 = vsub.f32 0.0, %v4146
      %v4286 = vsub.f32 0.0, %v3955
      %v4287 = vsub.f32 0.0, %v3957
      %v4288 = vsub.f32 0.0, %v4148
      %v4289 = vsub.f32 0.0, %v4150
      %v4290 = vsub.f32 0.0, %v3961
      %v4291 = vsub.f32 0.0, %v3963
      %v4292 = vsub.f32 0.0, %v4154
      %v4293 = vsub.f32 0.0, %v4156
      %v4294 = vsub.f32 0.0, %v3965
      %v4295 = vsub.f32 0.0, %v3967
      %v4296 = vsub.f32 0.0, %v4158
      %v4297 = vsub.f32 0.0, %v4160
      %v4298 = vsub.f32 0.0, %v3971
      %v4299 = vsub.f32 0.0, %v3973
      %v4300 = vsub.f32 0.0, %v4164
      %v4301 = vsub.f32 0.0, %v4166
      %v4302 = vsub.f32 0.0, %v3975
      %v4303 = vsub.f32 0.0, %v3977
      %v4304 = vsub.f32 0.0, %v4168
      %v4305 = vsub.f32 0.0, %v4170
      %v4306 = vsub.f32 0.0, %v3981
      %v4307 = vsub.f32 0.0, %v3983
      %v4308 = vsub.f32 0.0, %v4174
      %v4309 = vsub.f32 0.0, %v4176
      %v4310 = vsub.f32 0.0, %v3985
      %v4311 = vsub.f32 0.0, %v3987
      %v4312 = vsub.f32 0.0, %v4178
      %v4313 = vsub.f32 0.0, %v4180
      %v4314 = vsub.f32 0.0, %v3991
      %v4315 = vsub.f32 0.0, %v3993
      %v4316 = vsub.f32 0.0, %v4184
      %v4317 = vsub.f32 0.0, %v4186
      %v4318 = vsub.f32 0.0, %v3995
      %v4319 = vsub.f32 0.0, %v3997
      %v4320 = vsub.f32 0.0, %v4188
      %v4321 = vsub.f32 0.0, %v4190
      %v4322 = vsub.f32 0.0, %v4001
      %v4323 = vsub.f32 0.0, %v4003
      %v4324 = vsub.f32 0.0, %v4194
      %v4325 = vsub.f32 0.0, %v4196
      %v4326 = vsub.f32 0.0, %v4005
      %v4327 = vsub.f32 0.0, %v4007
      %v4328 = vsub.f32 0.0, %v4198
      %v4329 = vsub.f32 0.0, %v4200
      %v4330 = vmul.f32 %v4202, 1.442695
      %v4331 = vpow.pop %v4330
      %v4332 = vmul.f32 %v4203, 1.442695
      %v4333 = vpow.pop %v4332
      %v4334 = vmul.f32 %v4204, 1.442695
      %v4335 = vpow.pop %v4334
      %v4336 = vmul.f32 %v4205, 1.442695
      %v4337 = vpow.pop %v4336
      %v4338 = vmul.f32 %v4206, 1.442695
      %v4339 = vpow.pop %v4338
      %v4340 = vmul.f32 %v4207, 1.442695
      %v4341 = vpow.pop %v4340
      %v4342 = vmul.f32 %v4208, 1.442695
      %v4343 = vpow.pop %v4342
      %v4344 = vmul.f32 %v4209, 1.442695
      %v4345 = vpow.pop %v4344
      %v4346 = vmul.f32 %v4210, 1.442695
      %v4347 = vpow.pop %v4346
      %v4348 = vmul.f32 %v4211, 1.442695
      %v4349 = vpow.pop %v4348
      %v4350 = vmul.f32 %v4212, 1.442695
      %v4351 = vpow.pop %v4350
      %v4352 = vmul.f32 %v4213, 1.442695
      %v4353 = vpow.pop %v4352
      %v4354 = vmul.f32 %v4214, 1.442695
      %v4355 = vpow.pop %v4354
      %v4356 = vmul.f32 %v4215, 1.442695
      %v4357 = vpow.pop %v4356
      %v4358 = vmul.f32 %v4216, 1.442695
      %v4359 = vpow.pop %v4358
      %v4360 = vmul.f32 %v4217, 1.442695
      %v4361 = vpow.pop %v4360
      %v4362 = vmul.f32 %v4218, 1.442695
      %v4363 = vpow.pop %v4362
      %v4364 = vmul.f32 %v4219, 1.442695
      %v4365 = vpow.pop %v4364
      %v4366 = vmul.f32 %v4220, 1.442695
      %v4367 = vpow.pop %v4366
      %v4368 = vmul.f32 %v4221, 1.442695
      %v4369 = vpow.pop %v4368
      %v4370 = vmul.f32 %v4222, 1.442695
      %v4371 = vpow.pop %v4370
      %v4372 = vmul.f32 %v4223, 1.442695
      %v4373 = vpow.pop %v4372
      %v4374 = vmul.f32 %v4224, 1.442695
      %v4375 = vpow.pop %v4374
      %v4376 = vmul.f32 %v4225, 1.442695
      %v4377 = vpow.pop %v4376
      %v4378 = vmul.f32 %v4226, 1.442695
      %v4379 = vpow.pop %v4378
      %v4380 = vmul.f32 %v4227, 1.442695
      %v4381 = vpow.pop %v4380
      %v4382 = vmul.f32 %v4228, 1.442695
      %v4383 = vpow.pop %v4382
      %v4384 = vmul.f32 %v4229, 1.442695
      %v4385 = vpow.pop %v4384
      %v4386 = vmul.f32 %v4230, 1.442695
      %v4387 = vpow.pop %v4386
      %v4388 = vmul.f32 %v4231, 1.442695
      %v4389 = vpow.pop %v4388
      %v4390 = vmul.f32 %v4232, 1.442695
      %v4391 = vpow.pop %v4390
      %v4392 = vmul.f32 %v4233, 1.442695
      %v4393 = vpow.pop %v4392
      %v4394 = vmul.f32 %v4234, 1.442695
      %v4395 = vpow.pop %v4394
      %v4396 = vmul.f32 %v4235, 1.442695
      %v4397 = vpow.pop %v4396
      %v4398 = vmul.f32 %v4236, 1.442695
      %v4399 = vpow.pop %v4398
      %v4400 = vmul.f32 %v4237, 1.442695
      %v4401 = vpow.pop %v4400
      %v4402 = vmul.f32 %v4238, 1.442695
      %v4403 = vpow.pop %v4402
      %v4404 = vmul.f32 %v4239, 1.442695
      %v4405 = vpow.pop %v4404
      %v4406 = vmul.f32 %v4240, 1.442695
      %v4407 = vpow.pop %v4406
      %v4408 = vmul.f32 %v4241, 1.442695
      %v4409 = vpow.pop %v4408
      %v4410 = vmul.f32 %v4242, 1.442695
      %v4411 = vpow.pop %v4410
      %v4412 = vmul.f32 %v4243, 1.442695
      %v4413 = vpow.pop %v4412
      %v4414 = vmul.f32 %v4244, 1.442695
      %v4415 = vpow.pop %v4414
      %v4416 = vmul.f32 %v4245, 1.442695
      %v4417 = vpow.pop %v4416
      %v4418 = vmul.f32 %v4246, 1.442695
      %v4419 = vpow.pop %v4418
      %v4420 = vmul.f32 %v4247, 1.442695
      %v4421 = vpow.pop %v4420
      %v4422 = vmul.f32 %v4248, 1.442695
      %v4423 = vpow.pop %v4422
      %v4424 = vmul.f32 %v4249, 1.442695
      %v4425 = vpow.pop %v4424
      %v4426 = vmul.f32 %v4250, 1.442695
      %v4427 = vpow.pop %v4426
      %v4428 = vmul.f32 %v4251, 1.442695
      %v4429 = vpow.pop %v4428
      %v4430 = vmul.f32 %v4252, 1.442695
      %v4431 = vpow.pop %v4430
      %v4432 = vmul.f32 %v4253, 1.442695
      %v4433 = vpow.pop %v4432
      %v4434 = vmul.f32 %v4254, 1.442695
      %v4435 = vpow.pop %v4434
      %v4436 = vmul.f32 %v4255, 1.442695
      %v4437 = vpow.pop %v4436
      %v4438 = vmul.f32 %v4256, 1.442695
      %v4439 = vpow.pop %v4438
      %v4440 = vmul.f32 %v4257, 1.442695
      %v4441 = vpow.pop %v4440
      %v4442 = vmul.f32 %v4258, 1.442695
      %v4443 = vpow.pop %v4442
      %v4444 = vmul.f32 %v4259, 1.442695
      %v4445 = vpow.pop %v4444
      %v4446 = vmul.f32 %v4260, 1.442695
      %v4447 = vpow.pop %v4446
      %v4448 = vmul.f32 %v4261, 1.442695
      %v4449 = vpow.pop %v4448
      %v4450 = vmul.f32 %v4262, 1.442695
      %v4451 = vpow.pop %v4450
      %v4452 = vmul.f32 %v4263, 1.442695
      %v4453 = vpow.pop %v4452
      %v4454 = vmul.f32 %v4264, 1.442695
      %v4455 = vpow.pop %v4454
      %v4456 = vmul.f32 %v4265, 1.442695
      %v4457 = vpow.pop %v4456
      %v4458 = vmul.f32 %v4266, 1.442695
      %v4459 = vpow.pop %v4458
      %v4460 = vmul.f32 %v4267, 1.442695
      %v4461 = vpow.pop %v4460
      %v4462 = vmul.f32 %v4268, 1.442695
      %v4463 = vpow.pop %v4462
      %v4464 = vmul.f32 %v4269, 1.442695
      %v4465 = vpow.pop %v4464
      %v4466 = vmul.f32 %v4270, 1.442695
      %v4467 = vpow.pop %v4466
      %v4468 = vmul.f32 %v4271, 1.442695
      %v4469 = vpow.pop %v4468
      %v4470 = vmul.f32 %v4272, 1.442695
      %v4471 = vpow.pop %v4470
      %v4472 = vmul.f32 %v4273, 1.442695
      %v4473 = vpow.pop %v4472
      %v4474 = vmul.f32 %v4274, 1.442695
      %v4475 = vpow.pop %v4474
      %v4476 = vmul.f32 %v4275, 1.442695
      %v4477 = vpow.pop %v4476
      %v4478 = vmul.f32 %v4276, 1.442695
      %v4479 = vpow.pop %v4478
      %v4480 = vmul.f32 %v4277, 1.442695
      %v4481 = vpow.pop %v4480
      %v4482 = vmul.f32 %v4278, 1.442695
      %v4483 = vpow.pop %v4482
      %v4484 = vmul.f32 %v4279, 1.442695
      %v4485 = vpow.pop %v4484
      %v4486 = vmul.f32 %v4280, 1.442695
      %v4487 = vpow.pop %v4486
      %v4488 = vmul.f32 %v4281, 1.442695
      %v4489 = vpow.pop %v4488
      %v4490 = vmul.f32 %v4282, 1.442695
      %v4491 = vpow.pop %v4490
      %v4492 = vmul.f32 %v4283, 1.442695
      %v4493 = vpow.pop %v4492
      %v4494 = vmul.f32 %v4284, 1.442695
      %v4495 = vpow.pop %v4494
      %v4496 = vmul.f32 %v4285, 1.442695
      %v4497 = vpow.pop %v4496
      %v4498 = vmul.f32 %v4286, 1.442695
      %v4499 = vpow.pop %v4498
      %v4500 = vmul.f32 %v4287, 1.442695
      %v4501 = vpow.pop %v4500
      %v4502 = vmul.f32 %v4288, 1.442695
      %v4503 = vpow.pop %v4502
      %v4504 = vmul.f32 %v4289, 1.442695
      %v4505 = vpow.pop %v4504
      %v4506 = vmul.f32 %v4290, 1.442695
      %v4507 = vpow.pop %v4506
      %v4508 = vmul.f32 %v4291, 1.442695
      %v4509 = vpow.pop %v4508
      %v4510 = vmul.f32 %v4292, 1.442695
      %v4511 = vpow.pop %v4510
      %v4512 = vmul.f32 %v4293, 1.442695
      %v4513 = vpow.pop %v4512
      %v4514 = vmul.f32 %v4294, 1.442695
      %v4515 = vpow.pop %v4514
      %v4516 = vmul.f32 %v4295, 1.442695
      %v4517 = vpow.pop %v4516
      %v4518 = vmul.f32 %v4296, 1.442695
      %v4519 = vpow.pop %v4518
      %v4520 = vmul.f32 %v4297, 1.442695
      %v4521 = vpow.pop %v4520
      %v4522 = vmul.f32 %v4298, 1.442695
      %v4523 = vpow.pop %v4522
      %v4524 = vmul.f32 %v4299, 1.442695
      %v4525 = vpow.pop %v4524
      %v4526 = vmul.f32 %v4300, 1.442695
      %v4527 = vpow.pop %v4526
      %v4528 = vmul.f32 %v4301, 1.442695
      %v4529 = vpow.pop %v4528
      %v4530 = vmul.f32 %v4302, 1.442695
      %v4531 = vpow.pop %v4530
      %v4532 = vmul.f32 %v4303, 1.442695
      %v4533 = vpow.pop %v4532
      %v4534 = vmul.f32 %v4304, 1.442695
      %v4535 = vpow.pop %v4534
      %v4536 = vmul.f32 %v4305, 1.442695
      %v4537 = vpow.pop %v4536
      %v4538 = vmul.f32 %v4306, 1.442695
      %v4539 = vpow.pop %v4538
      %v4540 = vmul.f32 %v4307, 1.442695
      %v4541 = vpow.pop %v4540
      %v4542 = vmul.f32 %v4308, 1.442695
      %v4543 = vpow.pop %v4542
      %v4544 = vmul.f32 %v4309, 1.442695
      %v4545 = vpow.pop %v4544
      %v4546 = vmul.f32 %v4310, 1.442695
      %v4547 = vpow.pop %v4546
      %v4548 = vmul.f32 %v4311, 1.442695
      %v4549 = vpow.pop %v4548
      %v4550 = vmul.f32 %v4312, 1.442695
      %v4551 = vpow.pop %v4550
      %v4552 = vmul.f32 %v4313, 1.442695
      %v4553 = vpow.pop %v4552
      %v4554 = vmul.f32 %v4314, 1.442695
      %v4555 = vpow.pop %v4554
      %v4556 = vmul.f32 %v4315, 1.442695
      %v4557 = vpow.pop %v4556
      %v4558 = vmul.f32 %v4316, 1.442695
      %v4559 = vpow.pop %v4558
      %v4560 = vmul.f32 %v4317, 1.442695
      %v4561 = vpow.pop %v4560
      %v4562 = vmul.f32 %v4318, 1.442695
      %v4563 = vpow.pop %v4562
      %v4564 = vmul.f32 %v4319, 1.442695
      %v4565 = vpow.pop %v4564
      %v4566 = vmul.f32 %v4320, 1.442695
      %v4567 = vpow.pop %v4566
      %v4568 = vmul.f32 %v4321, 1.442695
      %v4569 = vpow.pop %v4568
      %v4570 = vmul.f32 %v4322, 1.442695
      %v4571 = vpow.pop %v4570
      %v4572 = vmul.f32 %v4323, 1.442695
      %v4573 = vpow.pop %v4572
      %v4574 = vmul.f32 %v4324, 1.442695
      %v4575 = vpow.pop %v4574
      %v4576 = vmul.f32 %v4325, 1.442695
      %v4577 = vpow.pop %v4576
      %v4578 = vmul.f32 %v4326, 1.442695
      %v4579 = vpow.pop %v4578
      %v4580 = vmul.f32 %v4327, 1.442695
      %v4581 = vpow.pop %v4580
      %v4582 = vmul.f32 %v4328, 1.442695
      %v4583 = vpow.pop %v4582
      %v4584 = vmul.f32 %v4329, 1.442695
      %v4585 = vpow.pop %v4584
      %v4586 = vadd.f32 %v4331, 1.0
      %v4587 = vadd.f32 %v4333, 1.0
      %v4588 = vadd.f32 %v4335, 1.0
      %v4589 = vadd.f32 %v4337, 1.0
      %v4590 = vadd.f32 %v4339, 1.0
      %v4591 = vadd.f32 %v4341, 1.0
      %v4592 = vadd.f32 %v4343, 1.0
      %v4593 = vadd.f32 %v4345, 1.0
      %v4594 = vadd.f32 %v4347, 1.0
      %v4595 = vadd.f32 %v4349, 1.0
      %v4596 = vadd.f32 %v4351, 1.0
      %v4597 = vadd.f32 %v4353, 1.0
      %v4598 = vadd.f32 %v4355, 1.0
      %v4599 = vadd.f32 %v4357, 1.0
      %v4600 = vadd.f32 %v4359, 1.0
      %v4601 = vadd.f32 %v4361, 1.0
      %v4602 = vadd.f32 %v4363, 1.0
      %v4603 = vadd.f32 %v4365, 1.0
      %v4604 = vadd.f32 %v4367, 1.0
      %v4605 = vadd.f32 %v4369, 1.0
      %v4606 = vadd.f32 %v4371, 1.0
      %v4607 = vadd.f32 %v4373, 1.0
      %v4608 = vadd.f32 %v4375, 1.0
      %v4609 = vadd.f32 %v4377, 1.0
      %v4610 = vadd.f32 %v4379, 1.0
      %v4611 = vadd.f32 %v4381, 1.0
      %v4612 = vadd.f32 %v4383, 1.0
      %v4613 = vadd.f32 %v4385, 1.0
      %v4614 = vadd.f32 %v4387, 1.0
      %v4615 = vadd.f32 %v4389, 1.0
      %v4616 = vadd.f32 %v4391, 1.0
      %v4617 = vadd.f32 %v4393, 1.0
      %v4618 = vadd.f32 %v4395, 1.0
      %v4619 = vadd.f32 %v4397, 1.0
      %v4620 = vadd.f32 %v4399, 1.0
      %v4621 = vadd.f32 %v4401, 1.0
      %v4622 = vadd.f32 %v4403, 1.0
      %v4623 = vadd.f32 %v4405, 1.0
      %v4624 = vadd.f32 %v4407, 1.0
      %v4625 = vadd.f32 %v4409, 1.0
      %v4626 = vadd.f32 %v4411, 1.0
      %v4627 = vadd.f32 %v4413, 1.0
      %v4628 = vadd.f32 %v4415, 1.0
      %v4629 = vadd.f32 %v4417, 1.0
      %v4630 = vadd.f32 %v4419, 1.0
      %v4631 = vadd.f32 %v4421, 1.0
      %v4632 = vadd.f32 %v4423, 1.0
      %v4633 = vadd.f32 %v4425, 1.0
      %v4634 = vadd.f32 %v4427, 1.0
      %v4635 = vadd.f32 %v4429, 1.0
      %v4636 = vadd.f32 %v4431, 1.0
      %v4637 = vadd.f32 %v4433, 1.0
      %v4638 = vadd.f32 %v4435, 1.0
      %v4639 = vadd.f32 %v4437, 1.0
      %v4640 = vadd.f32 %v4439, 1.0
      %v4641 = vadd.f32 %v4441, 1.0
      %v4642 = vadd.f32 %v4443, 1.0
      %v4643 = vadd.f32 %v4445, 1.0
      %v4644 = vadd.f32 %v4447, 1.0
      %v4645 = vadd.f32 %v4449, 1.0
      %v4646 = vadd.f32 %v4451, 1.0
      %v4647 = vadd.f32 %v4453, 1.0
      %v4648 = vadd.f32 %v4455, 1.0
      %v4649 = vadd.f32 %v4457, 1.0
      %v4650 = vadd.f32 %v4459, 1.0
      %v4651 = vadd.f32 %v4461, 1.0
      %v4652 = vadd.f32 %v4463, 1.0
      %v4653 = vadd.f32 %v4465, 1.0
      %v4654 = vadd.f32 %v4467, 1.0
      %v4655 = vadd.f32 %v4469, 1.0
      %v4656 = vadd.f32 %v4471, 1.0
      %v4657 = vadd.f32 %v4473, 1.0
      %v4658 = vadd.f32 %v4475, 1.0
      %v4659 = vadd.f32 %v4477, 1.0
      %v4660 = vadd.f32 %v4479, 1.0
      %v4661 = vadd.f32 %v4481, 1.0
      %v4662 = vadd.f32 %v4483, 1.0
      %v4663 = vadd.f32 %v4485, 1.0
      %v4664 = vadd.f32 %v4487, 1.0
      %v4665 = vadd.f32 %v4489, 1.0
      %v4666 = vadd.f32 %v4491, 1.0
      %v4667 = vadd.f32 %v4493, 1.0
      %v4668 = vadd.f32 %v4495, 1.0
      %v4669 = vadd.f32 %v4497, 1.0
      %v4670 = vadd.f32 %v4499, 1.0
      %v4671 = vadd.f32 %v4501, 1.0
      %v4672 = vadd.f32 %v4503, 1.0
      %v4673 = vadd.f32 %v4505, 1.0
      %v4674 = vadd.f32 %v4507, 1.0
      %v4675 = vadd.f32 %v4509, 1.0
      %v4676 = vadd.f32 %v4511, 1.0
      %v4677 = vadd.f32 %v4513, 1.0
      %v4678 = vadd.f32 %v4515, 1.0
      %v4679 = vadd.f32 %v4517, 1.0
      %v4680 = vadd.f32 %v4519, 1.0
      %v4681 = vadd.f32 %v4521, 1.0
      %v4682 = vadd.f32 %v4523, 1.0
      %v4683 = vadd.f32 %v4525, 1.0
      %v4684 = vadd.f32 %v4527, 1.0
      %v4685 = vadd.f32 %v4529, 1.0
      %v4686 = vadd.f32 %v4531, 1.0
      %v4687 = vadd.f32 %v4533, 1.0
      %v4688 = vadd.f32 %v4535, 1.0
      %v4689 = vadd.f32 %v4537, 1.0
      %v4690 = vadd.f32 %v4539, 1.0
      %v4691 = vadd.f32 %v4541, 1.0
      %v4692 = vadd.f32 %v4543, 1.0
      %v4693 = vadd.f32 %v4545, 1.0
      %v4694 = vadd.f32 %v4547, 1.0
      %v4695 = vadd.f32 %v4549, 1.0
      %v4696 = vadd.f32 %v4551, 1.0
      %v4697 = vadd.f32 %v4553, 1.0
      %v4698 = vadd.f32 %v4555, 1.0
      %v4699 = vadd.f32 %v4557, 1.0
      %v4700 = vadd.f32 %v4559, 1.0
      %v4701 = vadd.f32 %v4561, 1.0
      %v4702 = vadd.f32 %v4563, 1.0
      %v4703 = vadd.f32 %v4565, 1.0
      %v4704 = vadd.f32 %v4567, 1.0
      %v4705 = vadd.f32 %v4569, 1.0
      %v4706 = vadd.f32 %v4571, 1.0
      %v4707 = vadd.f32 %v4573, 1.0
      %v4708 = vadd.f32 %v4575, 1.0
      %v4709 = vadd.f32 %v4577, 1.0
      %v4710 = vadd.f32 %v4579, 1.0
      %v4711 = vadd.f32 %v4581, 1.0
      %v4712 = vadd.f32 %v4583, 1.0
      %v4713 = vadd.f32 %v4585, 1.0
      %v4714 = vrcp.pop %v4586
      %v4715 = vrcp.pop %v4587
      %v4716 = vrcp.pop %v4588
      %v4717 = vrcp.pop %v4589
      %v4718 = vrcp.pop %v4590
      %v4719 = vrcp.pop %v4591
      %v4720 = vrcp.pop %v4592
      %v4721 = vrcp.pop %v4593
      %v4722 = vrcp.pop %v4594
      %v4723 = vrcp.pop %v4595
      %v4724 = vrcp.pop %v4596
      %v4725 = vrcp.pop %v4597
      %v4726 = vrcp.pop %v4598
      %v4727 = vrcp.pop %v4599
      %v4728 = vrcp.pop %v4600
      %v4729 = vrcp.pop %v4601
      %v4730 = vrcp.pop %v4602
      %v4731 = vrcp.pop %v4603
      %v4732 = vrcp.pop %v4604
      %v4733 = vrcp.pop %v4605
      %v4734 = vrcp.pop %v4606
      %v4735 = vrcp.pop %v4607
      %v4736 = vrcp.pop %v4608
      %v4737 = vrcp.pop %v4609
      %v4738 = vrcp.pop %v4610
      %v4739 = vrcp.pop %v4611
      %v4740 = vrcp.pop %v4612
      %v4741 = vrcp.pop %v4613
      %v4742 = vrcp.pop %v4614
      %v4743 = vrcp.pop %v4615
      %v4744 = vrcp.pop %v4616
      %v4745 = vrcp.pop %v4617
      %v4746 = vrcp.pop %v4618
      %v4747 = vrcp.pop %v4619
      %v4748 = vrcp.pop %v4620
      %v4749 = vrcp.pop %v4621
      %v4750 = vrcp.pop %v4622
      %v4751 = vrcp.pop %v4623
      %v4752 = vrcp.pop %v4624
      %v4753 = vrcp.pop %v4625
      %v4754 = vrcp.pop %v4626
      %v4755 = vrcp.pop %v4627
      %v4756 = vrcp.pop %v4628
      %v4757 = vrcp.pop %v4629
      %v4758 = vrcp.pop %v4630
      %v4759 = vrcp.pop %v4631
      %v4760 = vrcp.pop %v4632
      %v4761 = vrcp.pop %v4633
      %v4762 = vrcp.pop %v4634
      %v4763 = vrcp.pop %v4635
      %v4764 = vrcp.pop %v4636
      %v4765 = vrcp.pop %v4637
      %v4766 = vrcp.pop %v4638
      %v4767 = vrcp.pop %v4639
      %v4768 = vrcp.pop %v4640
      %v4769 = vrcp.pop %v4641
      %v4770 = vrcp.pop %v4642
      %v4771 = vrcp.pop %v4643
      %v4772 = vrcp.pop %v4644
      %v4773 = vrcp.pop %v4645
      %v4774 = vrcp.pop %v4646
      %v4775 = vrcp.pop %v4647
      %v4776 = vrcp.pop %v4648
      %v4777 = vrcp.pop %v4649
      %v4778 = vrcp.pop %v4650
      %v4779 = vrcp.pop %v4651
      %v4780 = vrcp.pop %v4652
      %v4781 = vrcp.pop %v4653
      %v4782 = vrcp.pop %v4654
      %v4783 = vrcp.pop %v4655
      %v4784 = vrcp.pop %v4656
      %v4785 = vrcp.pop %v4657
      %v4786 = vrcp.pop %v4658
      %v4787 = vrcp.pop %v4659
      %v4788 = vrcp.pop %v4660
      %v4789 = vrcp.pop %v4661
      %v4790 = vrcp.pop %v4662
      %v4791 = vrcp.pop %v4663
      %v4792 = vrcp.pop %v4664
      %v4793 = vrcp.pop %v4665
      %v4794 = vrcp.pop %v4666
      %v4795 = vrcp.pop %v4667
      %v4796 = vrcp.pop %v4668
      %v4797 = vrcp.pop %v4669
      %v4798 = vrcp.pop %v4670
      %v4799 = vrcp.pop %v4671
      %v4800 = vrcp.pop %v4672
      %v4801 = vrcp.pop %v4673
      %v4802 = vrcp.pop %v4674
      %v4803 = vrcp.pop %v4675
      %v4804 = vrcp.pop %v4676
      %v4805 = vrcp.pop %v4677
      %v4806 = vrcp.pop %v4678
      %v4807 = vrcp.pop %v4679
      %v4808 = vrcp.pop %v4680
      %v4809 = vrcp.pop %v4681
      %v4810 = vrcp.pop %v4682
      %v4811 = vrcp.pop %v4683
      %v4812 = vrcp.pop %v4684
      %v4813 = vrcp.pop %v4685
      %v4814 = vrcp.pop %v4686
      %v4815 = vrcp.pop %v4687
      %v4816 = vrcp.pop %v4688
      %v4817 = vrcp.pop %v4689
      %v4818 = vrcp.pop %v4690
      %v4819 = vrcp.pop %v4691
      %v4820 = vrcp.pop %v4692
      %v4821 = vrcp.pop %v4693
      %v4822 = vrcp.pop %v4694
      %v4823 = vrcp.pop %v4695
      %v4824 = vrcp.pop %v4696
      %v4825 = vrcp.pop %v4697
      %v4826 = vrcp.pop %v4698
      %v4827 = vrcp.pop %v4699
      %v4828 = vrcp.pop %v4700
      %v4829 = vrcp.pop %v4701
      %v4830 = vrcp.pop %v4702
      %v4831 = vrcp.pop %v4703
      %v4832 = vrcp.pop %v4704
      %v4833 = vrcp.pop %v4705
      %v4834 = vrcp.pop %v4706
      %v4835 = vrcp.pop %v4707
      %v4836 = vrcp.pop %v4708
      %v4837 = vrcp.pop %v4709
      %v4838 = vrcp.pop %v4710
      %v4839 = vrcp.pop %v4711
      %v4840 = vrcp.pop %v4712
      %v4841 = vrcp.pop %v4713
      %v4842 = vmul.f32 %v3851, %v4714
      %v4843 = vmul.f32 %v3853, %v4715
      %v4844 = vmul.f32 %v4044, %v4716
      %v4845 = vmul.f32 %v4046, %v4717
      %v4846 = vmul.f32 %v3855, %v4718
      %v4847 = vmul.f32 %v3857, %v4719
      %v4848 = vmul.f32 %v4048, %v4720
      %v4849 = vmul.f32 %v4050, %v4721
      %v4850 = vmul.f32 %v3861, %v4722
      %v4851 = vmul.f32 %v3863, %v4723
      %v4852 = vmul.f32 %v4054, %v4724
      %v4853 = vmul.f32 %v4056, %v4725
      %v4854 = vmul.f32 %v3865, %v4726
      %v4855 = vmul.f32 %v3867, %v4727
      %v4856 = vmul.f32 %v4058, %v4728
      %v4857 = vmul.f32 %v4060, %v4729
      %v4858 = vmul.f32 %v3871, %v4730
      %v4859 = vmul.f32 %v3873, %v4731
      %v4860 = vmul.f32 %v4064, %v4732
      %v4861 = vmul.f32 %v4066, %v4733
      %v4862 = vmul.f32 %v3875, %v4734
      %v4863 = vmul.f32 %v3877, %v4735
      %v4864 = vmul.f32 %v4068, %v4736
      %v4865 = vmul.f32 %v4070, %v4737
      %v4866 = vmul.f32 %v3881, %v4738
      %v4867 = vmul.f32 %v3883, %v4739
      %v4868 = vmul.f32 %v4074, %v4740
      %v4869 = vmul.f32 %v4076, %v4741
      %v4870 = vmul.f32 %v3885, %v4742
      %v4871 = vmul.f32 %v3887, %v4743
      %v4872 = vmul.f32 %v4078, %v4744
      %v4873 = vmul.f32 %v4080, %v4745
      %v4874 = vmul.f32 %v3891, %v4746
      %v4875 = vmul.f32 %v3893, %v4747
      %v4876 = vmul.f32 %v4084, %v4748
      %v4877 = vmul.f32 %v4086, %v4749
      %v4878 = vmul.f32 %v3895, %v4750
      %v4879 = vmul.f32 %v3897, %v4751
      %v4880 = vmul.f32 %v4088, %v4752
      %v4881 = vmul.f32 %v4090, %v4753
      %v4882 = vmul.f32 %v3901, %v4754
      %v4883 = vmul.f32 %v3903, %v4755
      %v4884 = vmul.f32 %v4094, %v4756
      %v4885 = vmul.f32 %v4096, %v4757
      %v4886 = vmul.f32 %v3905, %v4758
      %v4887 = vmul.f32 %v3907, %v4759
      %v4888 = vmul.f32 %v4098, %v4760
      %v4889 = vmul.f32 %v4100, %v4761
      %v4890 = vmul.f32 %v3911, %v4762
      %v4891 = vmul.f32 %v3913, %v4763
      %v4892 = vmul.f32 %v4104, %v4764
      %v4893 = vmul.f32 %v4106, %v4765
      %v4894 = vmul.f32 %v3915, %v4766
      %v4895 = vmul.f32 %v3917, %v4767
      %v4896 = vmul.f32 %v4108, %v4768
      %v4897 = vmul.f32 %v4110, %v4769
      %v4898 = vmul.f32 %v3921, %v4770
      %v4899 = vmul.f32 %v3923, %v4771
      %v4900 = vmul.f32 %v4114, %v4772
      %v4901 = vmul.f32 %v4116, %v4773
      %v4902 = vmul.f32 %v3925, %v4774
      %v4903 = vmul.f32 %v3927, %v4775
      %v4904 = vmul.f32 %v4118, %v4776
      %v4905 = vmul.f32 %v4120, %v4777
      %v4906 = vmul.f32 %v3931, %v4778
      %v4907 = vmul.f32 %v3933, %v4779
      %v4908 = vmul.f32 %v4124, %v4780
      %v4909 = vmul.f32 %v4126, %v4781
      %v4910 = vmul.f32 %v3935, %v4782
      %v4911 = vmul.f32 %v3937, %v4783
      %v4912 = vmul.f32 %v4128, %v4784
      %v4913 = vmul.f32 %v4130, %v4785
      %v4914 = vmul.f32 %v3941, %v4786
      %v4915 = vmul.f32 %v3943, %v4787
      %v4916 = vmul.f32 %v4134, %v4788
      %v4917 = vmul.f32 %v4136, %v4789
      %v4918 = vmul.f32 %v3945, %v4790
      %v4919 = vmul.f32 %v3947, %v4791
      %v4920 = vmul.f32 %v4138, %v4792
      %v4921 = vmul.f32 %v4140, %v4793
      %v4922 = vmul.f32 %v3951, %v4794
      %v4923 = vmul.f32 %v3953, %v4795
      %v4924 = vmul.f32 %v4144, %v4796
      %v4925 = vmul.f32 %v4146, %v4797
      %v4926 = vmul.f32 %v3955, %v4798
      %v4927 = vmul.f32 %v3957, %v4799
      %v4928 = vmul.f32 %v4148, %v4800
      %v4929 = vmul.f32 %v4150, %v4801
      %v4930 = vmul.f32 %v3961, %v4802
      %v4931 = vmul.f32 %v3963, %v4803
      %v4932 = vmul.f32 %v4154, %v4804
      %v4933 = vmul.f32 %v4156, %v4805
      %v4934 = vmul.f32 %v3965, %v4806
      %v4935 = vmul.f32 %v3967, %v4807
      %v4936 = vmul.f32 %v4158, %v4808
      %v4937 = vmul.f32 %v4160, %v4809
      %v4938 = vmul.f32 %v3971, %v4810
      %v4939 = vmul.f32 %v3973, %v4811
      %v4940 = vmul.f32 %v4164, %v4812
      %v4941 = vmul.f32 %v4166, %v4813
      %v4942 = vmul.f32 %v3975, %v4814
      %v4943 = vmul.f32 %v3977, %v4815
      %v4944 = vmul.f32 %v4168, %v4816
      %v4945 = vmul.f32 %v4170, %v4817
      %v4946 = vmul.f32 %v3981, %v4818
      %v4947 = vmul.f32 %v3983, %v4819
      %v4948 = vmul.f32 %v4174, %v4820
      %v4949 = vmul.f32 %v4176, %v4821
      %v4950 = vmul.f32 %v3985, %v4822
      %v4951 = vmul.f32 %v3987, %v4823
      %v4952 = vmul.f32 %v4178, %v4824
      %v4953 = vmul.f32 %v4180, %v4825
      %v4954 = vmul.f32 %v3991, %v4826
      %v4955 = vmul.f32 %v3993, %v4827
      %v4956 = vmul.f32 %v4184, %v4828
      %v4957 = vmul.f32 %v4186, %v4829
      %v4958 = vmul.f32 %v3995, %v4830
      %v4959 = vmul.f32 %v3997, %v4831
      %v4960 = vmul.f32 %v4188, %v4832
      %v4961 = vmul.f32 %v4190, %v4833
      %v4962 = vmul.f32 %v4001, %v4834
      %v4963 = vmul.f32 %v4003, %v4835
      %v4964 = vmul.f32 %v4194, %v4836
      %v4965 = vmul.f32 %v4196, %v4837
      %v4966 = vmul.f32 %v4005, %v4838
      %v4967 = vmul.f32 %v4007, %v4839
      %v4968 = vmul.f32 %v4198, %v4840
      %v4969 = vmul.f32 %v4200, %v4841
      %4970 = vmatprep.subr.mxu0 %v4903
      %4971 = vmatpush1.msra.mxu0 %v4902
      %4972 = vmatprep.subr.mxu0 %v4899
      %4973 = vmatpush1.msra.mxu0 %v4898
      %4974 = vmatprep.subr.mxu0 %v4895
      %4975 = vmatpush1.msra.mxu0 %v4894
      %4976 = vmatprep.subr.mxu0 %v4891
      %4977 = vmatpush1.msra.mxu0 %v4890
      %4978 = vmatprep.subr.mxu0 %v4887
      %4979 = vmatpush1.msra.mxu0 %v4886
      %4980 = vmatprep.subr.mxu0 %v4883
      %4981 = vmatpush1.msra.mxu0 %v4882
      %4982 = vmatprep.subr.mxu0 %v4879
      %4983 = vmatpush1.msra.mxu0 %v4878
      %4984 = vmatprep.subr.mxu0 %v4875
      %4985 = vmatpush1.msra.mxu0 %v4874
      %4986 = vmatprep.subr.mxu0 %v4871
      %4987 = vmatpush1.msra.mxu0 %v4870
      %4988 = vmatprep.subr.mxu0 %v4867
      %4989 = vmatpush1.msra.mxu0 %v4866
      %4990 = vmatprep.subr.mxu0 %v4863
      %4991 = vmatpush1.msra.mxu0 %v4862
      %4992 = vmatprep.subr.mxu0 %v4859
      %4993 = vmatpush1.msra.mxu0 %v4858
      %4994 = vmatprep.subr.mxu0 %v4855
      %4995 = vmatpush1.msra.mxu0 %v4854
      %4996 = vmatprep.subr.mxu0 %v4851
      %4997 = vmatpush1.msra.mxu0 %v4850
      %4998 = vmatprep.subr.mxu0 %v4847
      %4999 = vmatpush1.msra.mxu0 %v4846
      %5000 = vmatprep.subr.mxu0 %v4843
      %5001 = vmatpush1.msra.mxu0 %v4842
      %5002 = vmatprep.subr.mxu0 %v4967
      %5003 = vmatpush2.msra.mxu0 %v4966
      %5004 = vmatprep.subr.mxu0 %v4963
      %5005 = vmatpush2.msra.mxu0 %v4962
      %5006 = vmatprep.subr.mxu0 %v4959
      %5007 = vmatpush2.msra.mxu0 %v4958
      %5008 = vmatprep.subr.mxu0 %v4955
      %5009 = vmatpush2.msra.mxu0 %v4954
      %5010 = vmatprep.subr.mxu0 %v4951
      %5011 = vmatpush2.msra.mxu0 %v4950
      %5012 = vmatprep.subr.mxu0 %v4947
      %5013 = vmatpush2.msra.mxu0 %v4946
      %5014 = vmatprep.subr.mxu0 %v4943
      %5015 = vmatpush2.msra.mxu0 %v4942
      %5016 = vmatprep.subr.mxu0 %v4939
      %5017 = vmatpush2.msra.mxu0 %v4938
      %5018 = vmatprep.subr.mxu0 %v4935
      %5019 = vmatpush2.msra.mxu0 %v4934
      %5020 = vmatprep.subr.mxu0 %v4931
      %5021 = vmatpush2.msra.mxu0 %v4930
      %5022 = vmatprep.subr.mxu0 %v4927
      %5023 = vmatpush2.msra.mxu0 %v4926
      %5024 = vmatprep.subr.mxu0 %v4923
      %5025 = vmatpush2.msra.mxu0 %v4922
      %5026 = vmatprep.subr.mxu0 %v4919
      %5027 = vmatpush2.msra.mxu0 %v4918
      %5028 = vmatprep.subr.mxu0 %v4915
      %5029 = vmatpush2.msra.mxu0 %v4914
      %5030 = vmatprep.subr.mxu0 %v4911
      %5031 = vmatpush2.msra.mxu0 %v4910
      %5032 = vmatprep.subr.mxu0 %v4907
      %5033 = vmatpush2.msra.mxu0 %v4906
      %5034 = vmatprep.mubr.f32.mxu0 %v820
      %5035 = vmatmul.mubr.f32.gmra.mxu0 %v819
      %v5036 = vpop.f32.mrf.mxu0
      %v5037 = vadd.f32 0.0, %v5036
      %v5038 = vpop.f32.mrf.mxu0
      %v5039 = vadd.f32 0.0, %v5038
      %5040 = vdwg.mxu0
      %5041 = vmatprep.subr.mxu0 %v4905
      %5042 = vmatpush1.msra.mxu0 %v4904
      %5043 = vmatprep.subr.mxu0 %v4901
      %5044 = vmatpush1.msra.mxu0 %v4900
      %5045 = vmatprep.subr.mxu0 %v4897
      %5046 = vmatpush1.msra.mxu0 %v4896
      %5047 = vmatprep.subr.mxu0 %v4893
      %5048 = vmatpush1.msra.mxu0 %v4892
      %5049 = vmatprep.subr.mxu0 %v4889
      %5050 = vmatpush1.msra.mxu0 %v4888
      %5051 = vmatprep.subr.mxu0 %v4885
      %5052 = vmatpush1.msra.mxu0 %v4884
      %5053 = vmatprep.subr.mxu0 %v4881
      %5054 = vmatpush1.msra.mxu0 %v4880
      %5055 = vmatprep.subr.mxu0 %v4877
      %5056 = vmatpush1.msra.mxu0 %v4876
      %5057 = vmatprep.subr.mxu0 %v4873
      %5058 = vmatpush1.msra.mxu0 %v4872
      %5059 = vmatprep.subr.mxu0 %v4869
      %5060 = vmatpush1.msra.mxu0 %v4868
      %5061 = vmatprep.subr.mxu0 %v4865
      %5062 = vmatpush1.msra.mxu0 %v4864
      %5063 = vmatprep.subr.mxu0 %v4861
      %5064 = vmatpush1.msra.mxu0 %v4860
      %5065 = vmatprep.subr.mxu0 %v4857
      %5066 = vmatpush1.msra.mxu0 %v4856
      %5067 = vmatprep.subr.mxu0 %v4853
      %5068 = vmatpush1.msra.mxu0 %v4852
      %5069 = vmatprep.subr.mxu0 %v4849
      %5070 = vmatpush1.msra.mxu0 %v4848
      %5071 = vmatprep.subr.mxu0 %v4845
      %5072 = vmatpush1.msra.mxu0 %v4844
      %5073 = vmatprep.subr.mxu0 %v4969
      %5074 = vmatpush2.msra.mxu0 %v4968
      %5075 = vmatprep.subr.mxu0 %v4965
      %5076 = vmatpush2.msra.mxu0 %v4964
      %5077 = vmatprep.subr.mxu0 %v4961
      %5078 = vmatpush2.msra.mxu0 %v4960
      %5079 = vmatprep.subr.mxu0 %v4957
      %5080 = vmatpush2.msra.mxu0 %v4956
      %5081 = vmatprep.subr.mxu0 %v4953
      %5082 = vmatpush2.msra.mxu0 %v4952
      %5083 = vmatprep.subr.mxu0 %v4949
      %5084 = vmatpush2.msra.mxu0 %v4948
      %5085 = vmatprep.subr.mxu0 %v4945
      %5086 = vmatpush2.msra.mxu0 %v4944
      %5087 = vmatprep.subr.mxu0 %v4941
      %5088 = vmatpush2.msra.mxu0 %v4940
      %5089 = vmatprep.subr.mxu0 %v4937
      %5090 = vmatpush2.msra.mxu0 %v4936
      %5091 = vmatprep.subr.mxu0 %v4933
      %5092 = vmatpush2.msra.mxu0 %v4932
      %5093 = vmatprep.subr.mxu0 %v4929
      %5094 = vmatpush2.msra.mxu0 %v4928
      %5095 = vmatprep.subr.mxu0 %v4925
      %5096 = vmatpush2.msra.mxu0 %v4924
      %5097 = vmatprep.subr.mxu0 %v4921
      %5098 = vmatpush2.msra.mxu0 %v4920
      %5099 = vmatprep.subr.mxu0 %v4917
      %5100 = vmatpush2.msra.mxu0 %v4916
      %5101 = vmatprep.subr.mxu0 %v4913
      %5102 = vmatpush2.msra.mxu0 %v4912
      %5103 = vmatprep.subr.mxu0 %v4909
      %5104 = vmatpush2.msra.mxu0 %v4908
      %5105 = vmatprep.mubr.f32.mxu0 %v820
      %5106 = vmatmul.mubr.f32.gmra.mxu0 %v819
      %v5107 = vpop.f32.mrf.mxu0
      %v5108 = vadd.f32 0.0, %v5107
      %v5109 = vpop.f32.mrf.mxu0
      %v5110 = vadd.f32 0.0, %v5109
      %5111 = vdwg.mxu0
      %v5112 = vld [vmem:[%s3 + $0x30] sm:$0xff]
      %v5113 = vld [vmem:[%s3 + $0x38] sm:$0xff]
      %v5114 = vld [vmem:[%s3 + $0x70] sm:$0xff]
      %v5115 = vld [vmem:[%s3 + $0x78] sm:$0xff]
      %v5116 = vld [vmem:[%s3 + $0xb0] sm:$0xff]
      %v5117 = vld [vmem:[%s3 + $0xb8] sm:$0xff]
      %v5118 = vld [vmem:[%s3 + $0xf0] sm:$0xff]
      %v5119 = vld [vmem:[%s3 + $0xf8] sm:$0xff]
      %v5120 = vld [vmem:[%s3 + $0x130] sm:$0xff]
      %v5121 = vld [vmem:[%s3 + $0x138] sm:$0xff]
      %v5122 = vld [vmem:[%s3 + $0x170] sm:$0xff]
      %v5123 = vld [vmem:[%s3 + $0x178] sm:$0xff]
      %v5124 = vld [vmem:[%s3 + $0x1b0] sm:$0xff]
      %v5125 = vld [vmem:[%s3 + $0x1b8] sm:$0xff]
      %v5126 = vld [vmem:[%s3 + $0x1f0] sm:$0xff]
      %v5127 = vld [vmem:[%s3 + $0x1f8] sm:$0xff]
      %v5128 = vld [vmem:[%s4 + $0xc] sm:$0xf]
      %v5130 = vlaneseq
      %v5131 = vshrl.u32 %v5130, 7
      %v5132 = vsub.s32 0, %v5131
      %v5133 = vrot.slane %v5128, %v5132
      %v5134 = vlaneseq
      %v5135 = vshrl.u32 %v5134, 7
      %v5136 = vsub.s32 1, %v5135
      %v5137 = vrot.slane %v5128, %v5136
      %v5138 = vlaneseq
      %v5139 = vshrl.u32 %v5138, 7
      %v5140 = vsub.s32 2, %v5139
      %v5141 = vrot.slane %v5128, %v5140
      %v5142 = vlaneseq
      %v5143 = vshrl.u32 %v5142, 7
      %v5144 = vsub.s32 3, %v5143
      %v5145 = vrot.slane %v5128, %v5144
      %v5166 = vunpack.c.l.b16 %v5112
      %v5167 = vunpack.c.h.b16 %v5112
      %v5168 = vunpack.c.l.b16 %v5113
      %v5169 = vunpack.c.h.b16 %v5113
      %v5170 = vunpack.c.l.b16 %v5114
      %v5171 = vunpack.c.h.b16 %v5114
      %v5172 = vunpack.c.l.b16 %v5115
      %v5173 = vunpack.c.h.b16 %v5115
      %v5174 = vunpack.c.l.b16 %v5116
      %v5175 = vunpack.c.h.b16 %v5116
      %v5176 = vunpack.c.l.b16 %v5117
      %v5177 = vunpack.c.h.b16 %v5117
      %v5178 = vunpack.c.l.b16 %v5118
      %v5179 = vunpack.c.h.b16 %v5118
      %v5180 = vunpack.c.l.b16 %v5119
      %v5181 = vunpack.c.h.b16 %v5119
      %v5182 = vunpack.c.l.b16 %v5120
      %v5183 = vunpack.c.h.b16 %v5120
      %v5184 = vunpack.c.l.b16 %v5121
      %v5185 = vunpack.c.h.b16 %v5121
      %v5186 = vunpack.c.l.b16 %v5122
      %v5187 = vunpack.c.h.b16 %v5122
      %v5188 = vunpack.c.l.b16 %v5123
      %v5189 = vunpack.c.h.b16 %v5123
      %v5190 = vunpack.c.l.b16 %v5124
      %v5191 = vunpack.c.h.b16 %v5124
      %v5192 = vunpack.c.l.b16 %v5125
      %v5193 = vunpack.c.h.b16 %v5125
      %v5194 = vunpack.c.l.b16 %v5126
      %v5195 = vunpack.c.h.b16 %v5126
      %v5196 = vunpack.c.l.b16 %v5127
      %v5197 = vunpack.c.h.b16 %v5127
      %v5198 = vpack.c.b16 %v5170, %v5166
      %v5199 = vpack.c.b16 %v5171, %v5167
      %v5200 = vpack.c.b16 %v5172, %v5168
      %v5201 = vpack.c.b16 %v5173, %v5169
      %v5202 = vpack.c.b16 %v5178, %v5174
      %v5203 = vpack.c.b16 %v5179, %v5175
      %v5204 = vpack.c.b16 %v5180, %v5176
      %v5205 = vpack.c.b16 %v5181, %v5177
      %v5206 = vpack.c.b16 %v5186, %v5182
      %v5207 = vpack.c.b16 %v5187, %v5183
      %v5208 = vpack.c.b16 %v5188, %v5184
      %v5209 = vpack.c.b16 %v5189, %v5185
      %v5210 = vpack.c.b16 %v5194, %v5190
      %v5211 = vpack.c.b16 %v5195, %v5191
      %v5212 = vpack.c.b16 %v5196, %v5192
      %v5213 = vpack.c.b16 %v5197, %v5193
      %5230 = vmatprep.subr.bf16.mxu0 0
      %5231 = vmatpush1.bf16.msra.mxu0 0
      %5232 = vmatprep.subr.bf16.mxu0 0
      %5233 = vmatpush1.bf16.msra.mxu0 0
      %5234 = vmatprep.subr.bf16.mxu0 0
      %5235 = vmatpush1.bf16.msra.mxu0 0
      %5236 = vmatprep.subr.bf16.mxu0 0
      %5237 = vmatpush1.bf16.msra.mxu0 0
      %5238 = vmatprep.subr.bf16.mxu0 %v5211
      %5239 = vmatpush1.bf16.msra.mxu0 %v5210
      %5240 = vmatprep.subr.bf16.mxu0 %v5207
      %5241 = vmatpush1.bf16.msra.mxu0 %v5206
      %5242 = vmatprep.subr.bf16.mxu0 %v5203
      %5243 = vmatpush1.bf16.msra.mxu0 %v5202
      %5244 = vmatprep.subr.bf16.mxu0 %v5199
      %5245 = vmatpush1.bf16.msra.mxu0 %v5198
      %5246 = vmatprep.subr.bf16.mxu0 0
      %5247 = vmatpush2.bf16.msra.mxu0 0
      %5248 = vmatprep.subr.bf16.mxu0 0
      %5249 = vmatpush2.bf16.msra.mxu0 0
      %5250 = vmatprep.subr.bf16.mxu0 0
      %5251 = vmatpush2.bf16.msra.mxu0 0
      %5252 = vmatprep.subr.bf16.mxu0 0
      %5253 = vmatpush2.bf16.msra.mxu0 0
      %5254 = vmatprep.subr.bf16.mxu0 0
      %5255 = vmatpush2.bf16.msra.mxu0 0
      %5256 = vmatprep.subr.bf16.mxu0 0
      %5257 = vmatpush2.bf16.msra.mxu0 0
      %5258 = vmatprep.subr.bf16.mxu0 0
      %5259 = vmatpush2.bf16.msra.mxu0 0
      %5260 = vmatprep.subr.bf16.mxu0 0
      %5261 = vmatpush2.bf16.msra.mxu0 0
      %5262 = vmatprep.mubr.bf16.mxu0 0
      %5263 = vmatmul.mubr.bf16.gmra.mxu0 %v941
      %v5264 = vpop.f32.mrf.mxu0
      %v5265 = vadd.f32 %v5133, %v5264
      %v5266 = vpop.f32.mrf.mxu0
      %v5267 = vadd.f32 %v5137, %v5266
      %v5268 = vpop.f32.mrf.mxu0
      %v5269 = vadd.f32 %v5133, %v5268
      %v5270 = vpop.f32.mrf.mxu0
      %v5271 = vadd.f32 %v5137, %v5270
      %5272 = vmatprep.mubr.bf16.mxu0 0
      %5273 = vmatmul.mubr.bf16.gmra.mxu0 %v944
      %v5274 = vpop.f32.mrf.mxu0
      %v5275 = vadd.f32 %v5133, %v5274
      %v5276 = vpop.f32.mrf.mxu0
      %v5277 = vadd.f32 %v5137, %v5276
      %v5278 = vpop.f32.mrf.mxu0
      %v5279 = vadd.f32 %v5133, %v5278
      %v5280 = vpop.f32.mrf.mxu0
      %v5281 = vadd.f32 %v5137, %v5280
      %5282 = vmatprep.mubr.bf16.mxu0 0
      %5283 = vmatmul.mubr.bf16.gmra.mxu0 %v947
      %v5284 = vpop.f32.mrf.mxu0
      %v5285 = vadd.f32 %v5133, %v5284
      %v5286 = vpop.f32.mrf.mxu0
      %v5287 = vadd.f32 %v5137, %v5286
      %v5288 = vpop.f32.mrf.mxu0
      %v5289 = vadd.f32 %v5133, %v5288
      %v5290 = vpop.f32.mrf.mxu0
      %v5291 = vadd.f32 %v5137, %v5290
      %5292 = vmatprep.mubr.bf16.mxu0 0
      %5293 = vmatmul.mubr.bf16.gmra.mxu0 %v950
      %v5294 = vpop.f32.mrf.mxu0
      %v5295 = vadd.f32 %v5133, %v5294
      %v5296 = vpop.f32.mrf.mxu0
      %v5297 = vadd.f32 %v5137, %v5296
      %v5298 = vpop.f32.mrf.mxu0
      %v5299 = vadd.f32 %v5133, %v5298
      %v5300 = vpop.f32.mrf.mxu0
      %v5301 = vadd.f32 %v5137, %v5300
      %5302 = vmatprep.mubr.bf16.mxu0 0
      %5303 = vmatmul.mubr.bf16.gmra.mxu0 %v953
      %v5304 = vpop.f32.mrf.mxu0
      %v5305 = vadd.f32 %v5133, %v5304
      %v5306 = vpop.f32.mrf.mxu0
      %v5307 = vadd.f32 %v5137, %v5306
      %v5308 = vpop.f32.mrf.mxu0
      %v5309 = vadd.f32 %v5133, %v5308
      %v5310 = vpop.f32.mrf.mxu0
      %v5311 = vadd.f32 %v5137, %v5310
      %5312 = vmatprep.mubr.bf16.mxu0 0
      %5313 = vmatmul.mubr.bf16.gmra.mxu0 %v956
      %v5314 = vpop.f32.mrf.mxu0
      %v5315 = vadd.f32 %v5133, %v5314
      %v5316 = vpop.f32.mrf.mxu0
      %v5317 = vadd.f32 %v5137, %v5316
      %v5318 = vpop.f32.mrf.mxu0
      %v5319 = vadd.f32 %v5133, %v5318
      %v5320 = vpop.f32.mrf.mxu0
      %v5321 = vadd.f32 %v5137, %v5320
      %5322 = vmatprep.mubr.bf16.mxu0 0
      %5323 = vmatmul.mubr.bf16.gmra.mxu0 %v959
      %v5324 = vpop.f32.mrf.mxu0
      %v5325 = vadd.f32 %v5133, %v5324
      %v5326 = vpop.f32.mrf.mxu0
      %v5327 = vadd.f32 %v5137, %v5326
      %v5328 = vpop.f32.mrf.mxu0
      %v5329 = vadd.f32 %v5133, %v5328
      %v5330 = vpop.f32.mrf.mxu0
      %v5331 = vadd.f32 %v5137, %v5330
      %5332 = vmatprep.mubr.bf16.mxu0 0
      %5333 = vmatmul.mubr.bf16.gmra.mxu0 %v962
      %v5334 = vpop.f32.mrf.mxu0
      %v5335 = vadd.f32 %v5133, %v5334
      %v5336 = vpop.f32.mrf.mxu0
      %v5337 = vadd.f32 %v5137, %v5336
      %v5338 = vpop.f32.mrf.mxu0
      %v5339 = vadd.f32 %v5133, %v5338
      %v5340 = vpop.f32.mrf.mxu0
      %v5341 = vadd.f32 %v5137, %v5340
      %5342 = vmatprep.mubr.bf16.mxu0 0
      %5343 = vmatmul.mubr.bf16.gmra.mxu0 %v965
      %v5344 = vpop.f32.mrf.mxu0
      %v5345 = vadd.f32 %v5133, %v5344
      %v5346 = vpop.f32.mrf.mxu0
      %v5347 = vadd.f32 %v5137, %v5346
      %v5348 = vpop.f32.mrf.mxu0
      %v5349 = vadd.f32 %v5133, %v5348
      %v5350 = vpop.f32.mrf.mxu0
      %v5351 = vadd.f32 %v5137, %v5350
      %5352 = vmatprep.mubr.bf16.mxu0 0
      %5353 = vmatmul.mubr.bf16.gmra.mxu0 %v968
      %v5354 = vpop.f32.mrf.mxu0
      %v5355 = vadd.f32 %v5133, %v5354
      %v5356 = vpop.f32.mrf.mxu0
      %v5357 = vadd.f32 %v5137, %v5356
      %v5358 = vpop.f32.mrf.mxu0
      %v5359 = vadd.f32 %v5133, %v5358
      %v5360 = vpop.f32.mrf.mxu0
      %v5361 = vadd.f32 %v5137, %v5360
      %5362 = vmatprep.mubr.bf16.mxu0 0
      %5363 = vmatmul.mubr.bf16.gmra.mxu0 %v971
      %v5364 = vpop.f32.mrf.mxu0
      %v5365 = vadd.f32 %v5133, %v5364
      %v5366 = vpop.f32.mrf.mxu0
      %v5367 = vadd.f32 %v5137, %v5366
      %v5368 = vpop.f32.mrf.mxu0
      %v5369 = vadd.f32 %v5133, %v5368
      %v5370 = vpop.f32.mrf.mxu0
      %v5371 = vadd.f32 %v5137, %v5370
      %5372 = vmatprep.mubr.bf16.mxu0 0
      %5373 = vmatmul.mubr.bf16.gmra.mxu0 %v974
      %v5374 = vpop.f32.mrf.mxu0
      %v5375 = vadd.f32 %v5133, %v5374
      %v5376 = vpop.f32.mrf.mxu0
      %v5377 = vadd.f32 %v5137, %v5376
      %v5378 = vpop.f32.mrf.mxu0
      %v5379 = vadd.f32 %v5133, %v5378
      %v5380 = vpop.f32.mrf.mxu0
      %v5381 = vadd.f32 %v5137, %v5380
      %5382 = vmatprep.mubr.bf16.mxu0 0
      %5383 = vmatmul.mubr.bf16.gmra.mxu0 %v977
      %v5384 = vpop.f32.mrf.mxu0
      %v5385 = vadd.f32 %v5133, %v5384
      %v5386 = vpop.f32.mrf.mxu0
      %v5387 = vadd.f32 %v5137, %v5386
      %v5388 = vpop.f32.mrf.mxu0
      %v5389 = vadd.f32 %v5133, %v5388
      %v5390 = vpop.f32.mrf.mxu0
      %v5391 = vadd.f32 %v5137, %v5390
      %5392 = vmatprep.mubr.bf16.mxu0 0
      %5393 = vmatmul.mubr.bf16.gmra.mxu0 %v980
      %v5394 = vpop.f32.mrf.mxu0
      %v5395 = vadd.f32 %v5133, %v5394
      %v5396 = vpop.f32.mrf.mxu0
      %v5397 = vadd.f32 %v5137, %v5396
      %v5398 = vpop.f32.mrf.mxu0
      %v5399 = vadd.f32 %v5133, %v5398
      %v5400 = vpop.f32.mrf.mxu0
      %v5401 = vadd.f32 %v5137, %v5400
      %5402 = vmatprep.mubr.bf16.mxu0 0
      %5403 = vmatmul.mubr.bf16.gmra.mxu0 %v983
      %v5404 = vpop.f32.mrf.mxu0
      %v5405 = vadd.f32 %v5133, %v5404
      %v5406 = vpop.f32.mrf.mxu0
      %v5407 = vadd.f32 %v5137, %v5406
      %v5408 = vpop.f32.mrf.mxu0
      %v5409 = vadd.f32 %v5133, %v5408
      %v5410 = vpop.f32.mrf.mxu0
      %v5411 = vadd.f32 %v5137, %v5410
      %5412 = vmatprep.mubr.bf16.mxu0 0
      %5413 = vmatmul.mubr.bf16.gmra.mxu0 %v986
      %v5414 = vpop.f32.mrf.mxu0
      %v5415 = vadd.f32 %v5133, %v5414
      %v5416 = vpop.f32.mrf.mxu0
      %v5417 = vadd.f32 %v5137, %v5416
      %v5418 = vpop.f32.mrf.mxu0
      %v5419 = vadd.f32 %v5133, %v5418
      %v5420 = vpop.f32.mrf.mxu0
      %v5421 = vadd.f32 %v5137, %v5420
      %5422 = vdwg.mxu0
      %5423 = vmatprep.subr.bf16.mxu0 0
      %5424 = vmatpush1.bf16.msra.mxu0 0
      %5425 = vmatprep.subr.bf16.mxu0 0
      %5426 = vmatpush1.bf16.msra.mxu0 0
      %5427 = vmatprep.subr.bf16.mxu0 0
      %5428 = vmatpush1.bf16.msra.mxu0 0
      %5429 = vmatprep.subr.bf16.mxu0 0
      %5430 = vmatpush1.bf16.msra.mxu0 0
      %5431 = vmatprep.subr.bf16.mxu0 %v5213
      %5432 = vmatpush1.bf16.msra.mxu0 %v5212
      %5433 = vmatprep.subr.bf16.mxu0 %v5209
      %5434 = vmatpush1.bf16.msra.mxu0 %v5208
      %5435 = vmatprep.subr.bf16.mxu0 %v5205
      %5436 = vmatpush1.bf16.msra.mxu0 %v5204
      %5437 = vmatprep.subr.bf16.mxu0 %v5201
      %5438 = vmatpush1.bf16.msra.mxu0 %v5200
      %5439 = vmatprep.subr.bf16.mxu0 0
      %5440 = vmatpush2.bf16.msra.mxu0 0
      %5441 = vmatprep.subr.bf16.mxu0 0
      %5442 = vmatpush2.bf16.msra.mxu0 0
      %5443 = vmatprep.subr.bf16.mxu0 0
      %5444 = vmatpush2.bf16.msra.mxu0 0
      %5445 = vmatprep.subr.bf16.mxu0 0
      %5446 = vmatpush2.bf16.msra.mxu0 0
      %5447 = vmatprep.subr.bf16.mxu0 0
      %5448 = vmatpush2.bf16.msra.mxu0 0
      %5449 = vmatprep.subr.bf16.mxu0 0
      %5450 = vmatpush2.bf16.msra.mxu0 0
      %5451 = vmatprep.subr.bf16.mxu0 0
      %5452 = vmatpush2.bf16.msra.mxu0 0
      %5453 = vmatprep.subr.bf16.mxu0 0
      %5454 = vmatpush2.bf16.msra.mxu0 0
      %5455 = vmatprep.mubr.bf16.mxu0 0
      %5456 = vmatmul.mubr.bf16.gmra.mxu0 %v941
      %v5457 = vpop.f32.mrf.mxu0
      %v5458 = vadd.f32 %v5141, %v5457
      %v5459 = vpop.f32.mrf.mxu0
      %v5460 = vadd.f32 %v5145, %v5459
      %v5461 = vpop.f32.mrf.mxu0
      %v5462 = vadd.f32 %v5141, %v5461
      %v5463 = vpop.f32.mrf.mxu0
      %v5464 = vadd.f32 %v5145, %v5463
      %5465 = vmatprep.mubr.bf16.mxu0 0
      %5466 = vmatmul.mubr.bf16.gmra.mxu0 %v944
      %v5467 = vpop.f32.mrf.mxu0
      %v5468 = vadd.f32 %v5141, %v5467
      %v5469 = vpop.f32.mrf.mxu0
      %v5470 = vadd.f32 %v5145, %v5469
      %v5471 = vpop.f32.mrf.mxu0
      %v5472 = vadd.f32 %v5141, %v5471
      %v5473 = vpop.f32.mrf.mxu0
      %v5474 = vadd.f32 %v5145, %v5473
      %5475 = vmatprep.mubr.bf16.mxu0 0
      %5476 = vmatmul.mubr.bf16.gmra.mxu0 %v947
      %v5477 = vpop.f32.mrf.mxu0
      %v5478 = vadd.f32 %v5141, %v5477
      %v5479 = vpop.f32.mrf.mxu0
      %v5480 = vadd.f32 %v5145, %v5479
      %v5481 = vpop.f32.mrf.mxu0
      %v5482 = vadd.f32 %v5141, %v5481
      %v5483 = vpop.f32.mrf.mxu0
      %v5484 = vadd.f32 %v5145, %v5483
      %5485 = vmatprep.mubr.bf16.mxu0 0
      %5486 = vmatmul.mubr.bf16.gmra.mxu0 %v950
      %v5487 = vpop.f32.mrf.mxu0
      %v5488 = vadd.f32 %v5141, %v5487
      %v5489 = vpop.f32.mrf.mxu0
      %v5490 = vadd.f32 %v5145, %v5489
      %v5491 = vpop.f32.mrf.mxu0
      %v5492 = vadd.f32 %v5141, %v5491
      %v5493 = vpop.f32.mrf.mxu0
      %v5494 = vadd.f32 %v5145, %v5493
      %5495 = vmatprep.mubr.bf16.mxu0 0
      %5496 = vmatmul.mubr.bf16.gmra.mxu0 %v953
      %v5497 = vpop.f32.mrf.mxu0
      %v5498 = vadd.f32 %v5141, %v5497
      %v5499 = vpop.f32.mrf.mxu0
      %v5500 = vadd.f32 %v5145, %v5499
      %v5501 = vpop.f32.mrf.mxu0
      %v5502 = vadd.f32 %v5141, %v5501
      %v5503 = vpop.f32.mrf.mxu0
      %v5504 = vadd.f32 %v5145, %v5503
      %5505 = vmatprep.mubr.bf16.mxu0 0
      %5506 = vmatmul.mubr.bf16.gmra.mxu0 %v956
      %v5507 = vpop.f32.mrf.mxu0
      %v5508 = vadd.f32 %v5141, %v5507
      %v5509 = vpop.f32.mrf.mxu0
      %v5510 = vadd.f32 %v5145, %v5509
      %v5511 = vpop.f32.mrf.mxu0
      %v5512 = vadd.f32 %v5141, %v5511
      %v5513 = vpop.f32.mrf.mxu0
      %v5514 = vadd.f32 %v5145, %v5513
      %5515 = vmatprep.mubr.bf16.mxu0 0
      %5516 = vmatmul.mubr.bf16.gmra.mxu0 %v959
      %v5517 = vpop.f32.mrf.mxu0
      %v5518 = vadd.f32 %v5141, %v5517
      %v5519 = vpop.f32.mrf.mxu0
      %v5520 = vadd.f32 %v5145, %v5519
      %v5521 = vpop.f32.mrf.mxu0
      %v5522 = vadd.f32 %v5141, %v5521
      %v5523 = vpop.f32.mrf.mxu0
      %v5524 = vadd.f32 %v5145, %v5523
      %5525 = vmatprep.mubr.bf16.mxu0 0
      %5526 = vmatmul.mubr.bf16.gmra.mxu0 %v962
      %v5527 = vpop.f32.mrf.mxu0
      %v5528 = vadd.f32 %v5141, %v5527
      %v5529 = vpop.f32.mrf.mxu0
      %v5530 = vadd.f32 %v5145, %v5529
      %v5531 = vpop.f32.mrf.mxu0
      %v5532 = vadd.f32 %v5141, %v5531
      %v5533 = vpop.f32.mrf.mxu0
      %v5534 = vadd.f32 %v5145, %v5533
      %5535 = vmatprep.mubr.bf16.mxu0 0
      %5536 = vmatmul.mubr.bf16.gmra.mxu0 %v965
      %v5537 = vpop.f32.mrf.mxu0
      %v5538 = vadd.f32 %v5141, %v5537
      %v5539 = vpop.f32.mrf.mxu0
      %v5540 = vadd.f32 %v5145, %v5539
      %v5541 = vpop.f32.mrf.mxu0
      %v5542 = vadd.f32 %v5141, %v5541
      %v5543 = vpop.f32.mrf.mxu0
      %v5544 = vadd.f32 %v5145, %v5543
      %5545 = vmatprep.mubr.bf16.mxu0 0
      %5546 = vmatmul.mubr.bf16.gmra.mxu0 %v968
      %v5547 = vpop.f32.mrf.mxu0
      %v5548 = vadd.f32 %v5141, %v5547
      %v5549 = vpop.f32.mrf.mxu0
      %v5550 = vadd.f32 %v5145, %v5549
      %v5551 = vpop.f32.mrf.mxu0
      %v5552 = vadd.f32 %v5141, %v5551
      %v5553 = vpop.f32.mrf.mxu0
      %v5554 = vadd.f32 %v5145, %v5553
      %5555 = vmatprep.mubr.bf16.mxu0 0
      %5556 = vmatmul.mubr.bf16.gmra.mxu0 %v971
      %v5557 = vpop.f32.mrf.mxu0
      %v5558 = vadd.f32 %v5141, %v5557
      %v5559 = vpop.f32.mrf.mxu0
      %v5560 = vadd.f32 %v5145, %v5559
      %v5561 = vpop.f32.mrf.mxu0
      %v5562 = vadd.f32 %v5141, %v5561
      %v5563 = vpop.f32.mrf.mxu0
      %v5564 = vadd.f32 %v5145, %v5563
      %5565 = vmatprep.mubr.bf16.mxu0 0
      %5566 = vmatmul.mubr.bf16.gmra.mxu0 %v974
      %v5567 = vpop.f32.mrf.mxu0
      %v5568 = vadd.f32 %v5141, %v5567
      %v5569 = vpop.f32.mrf.mxu0
      %v5570 = vadd.f32 %v5145, %v5569
      %v5571 = vpop.f32.mrf.mxu0
      %v5572 = vadd.f32 %v5141, %v5571
      %v5573 = vpop.f32.mrf.mxu0
      %v5574 = vadd.f32 %v5145, %v5573
      %5575 = vmatprep.mubr.bf16.mxu0 0
      %5576 = vmatmul.mubr.bf16.gmra.mxu0 %v977
      %v5577 = vpop.f32.mrf.mxu0
      %v5578 = vadd.f32 %v5141, %v5577
      %v5579 = vpop.f32.mrf.mxu0
      %v5580 = vadd.f32 %v5145, %v5579
      %v5581 = vpop.f32.mrf.mxu0
      %v5582 = vadd.f32 %v5141, %v5581
      %v5583 = vpop.f32.mrf.mxu0
      %v5584 = vadd.f32 %v5145, %v5583
      %5585 = vmatprep.mubr.bf16.mxu0 0
      %5586 = vmatmul.mubr.bf16.gmra.mxu0 %v980
      %v5587 = vpop.f32.mrf.mxu0
      %v5588 = vadd.f32 %v5141, %v5587
      %v5589 = vpop.f32.mrf.mxu0
      %v5590 = vadd.f32 %v5145, %v5589
      %v5591 = vpop.f32.mrf.mxu0
      %v5592 = vadd.f32 %v5141, %v5591
      %v5593 = vpop.f32.mrf.mxu0
      %v5594 = vadd.f32 %v5145, %v5593
      %5595 = vmatprep.mubr.bf16.mxu0 0
      %5596 = vmatmul.mubr.bf16.gmra.mxu0 %v983
      %v5597 = vpop.f32.mrf.mxu0
      %v5598 = vadd.f32 %v5141, %v5597
      %v5599 = vpop.f32.mrf.mxu0
      %v5600 = vadd.f32 %v5145, %v5599
      %v5601 = vpop.f32.mrf.mxu0
      %v5602 = vadd.f32 %v5141, %v5601
      %v5603 = vpop.f32.mrf.mxu0
      %v5604 = vadd.f32 %v5145, %v5603
      %5605 = vmatprep.mubr.bf16.mxu0 0
      %5606 = vmatmul.mubr.bf16.gmra.mxu0 %v986
      %v5607 = vpop.f32.mrf.mxu0
      %v5608 = vadd.f32 %v5141, %v5607
      %v5609 = vpop.f32.mrf.mxu0
      %v5610 = vadd.f32 %v5145, %v5609
      %v5611 = vpop.f32.mrf.mxu0
      %v5612 = vadd.f32 %v5141, %v5611
      %v5613 = vpop.f32.mrf.mxu0
      %v5614 = vadd.f32 %v5145, %v5613
      %5615 = vdwg.mxu0
      %v5616 = vsub.f32 0.0, %v5265
      %v5617 = vsub.f32 0.0, %v5267
      %v5618 = vsub.f32 0.0, %v5458
      %v5619 = vsub.f32 0.0, %v5460
      %v5620 = vsub.f32 0.0, %v5269
      %v5621 = vsub.f32 0.0, %v5271
      %v5622 = vsub.f32 0.0, %v5462
      %v5623 = vsub.f32 0.0, %v5464
      %v5624 = vsub.f32 0.0, %v5275
      %v5625 = vsub.f32 0.0, %v5277
      %v5626 = vsub.f32 0.0, %v5468
      %v5627 = vsub.f32 0.0, %v5470
      %v5628 = vsub.f32 0.0, %v5279
      %v5629 = vsub.f32 0.0, %v5281
      %v5630 = vsub.f32 0.0, %v5472
      %v5631 = vsub.f32 0.0, %v5474
      %v5632 = vsub.f32 0.0, %v5285
      %v5633 = vsub.f32 0.0, %v5287
      %v5634 = vsub.f32 0.0, %v5478
      %v5635 = vsub.f32 0.0, %v5480
      %v5636 = vsub.f32 0.0, %v5289
      %v5637 = vsub.f32 0.0, %v5291
      %v5638 = vsub.f32 0.0, %v5482
      %v5639 = vsub.f32 0.0, %v5484
      %v5640 = vsub.f32 0.0, %v5295
      %v5641 = vsub.f32 0.0, %v5297
      %v5642 = vsub.f32 0.0, %v5488
      %v5643 = vsub.f32 0.0, %v5490
      %v5644 = vsub.f32 0.0, %v5299
      %v5645 = vsub.f32 0.0, %v5301
      %v5646 = vsub.f32 0.0, %v5492
      %v5647 = vsub.f32 0.0, %v5494
      %v5648 = vsub.f32 0.0, %v5305
      %v5649 = vsub.f32 0.0, %v5307
      %v5650 = vsub.f32 0.0, %v5498
      %v5651 = vsub.f32 0.0, %v5500
      %v5652 = vsub.f32 0.0, %v5309
      %v5653 = vsub.f32 0.0, %v5311
      %v5654 = vsub.f32 0.0, %v5502
      %v5655 = vsub.f32 0.0, %v5504
      %v5656 = vsub.f32 0.0, %v5315
      %v5657 = vsub.f32 0.0, %v5317
      %v5658 = vsub.f32 0.0, %v5508
      %v5659 = vsub.f32 0.0, %v5510
      %v5660 = vsub.f32 0.0, %v5319
      %v5661 = vsub.f32 0.0, %v5321
      %v5662 = vsub.f32 0.0, %v5512
      %v5663 = vsub.f32 0.0, %v5514
      %v5664 = vsub.f32 0.0, %v5325
      %v5665 = vsub.f32 0.0, %v5327
      %v5666 = vsub.f32 0.0, %v5518
      %v5667 = vsub.f32 0.0, %v5520
      %v5668 = vsub.f32 0.0, %v5329
      %v5669 = vsub.f32 0.0, %v5331
      %v5670 = vsub.f32 0.0, %v5522
      %v5671 = vsub.f32 0.0, %v5524
      %v5672 = vsub.f32 0.0, %v5335
      %v5673 = vsub.f32 0.0, %v5337
      %v5674 = vsub.f32 0.0, %v5528
      %v5675 = vsub.f32 0.0, %v5530
      %v5676 = vsub.f32 0.0, %v5339
      %v5677 = vsub.f32 0.0, %v5341
      %v5678 = vsub.f32 0.0, %v5532
      %v5679 = vsub.f32 0.0, %v5534
      %v5680 = vsub.f32 0.0, %v5345
      %v5681 = vsub.f32 0.0, %v5347
      %v5682 = vsub.f32 0.0, %v5538
      %v5683 = vsub.f32 0.0, %v5540
      %v5684 = vsub.f32 0.0, %v5349
      %v5685 = vsub.f32 0.0, %v5351
      %v5686 = vsub.f32 0.0, %v5542
      %v5687 = vsub.f32 0.0, %v5544
      %v5688 = vsub.f32 0.0, %v5355
      %v5689 = vsub.f32 0.0, %v5357
      %v5690 = vsub.f32 0.0, %v5548
      %v5691 = vsub.f32 0.0, %v5550
      %v5692 = vsub.f32 0.0, %v5359
      %v5693 = vsub.f32 0.0, %v5361
      %v5694 = vsub.f32 0.0, %v5552
      %v5695 = vsub.f32 0.0, %v5554
      %v5696 = vsub.f32 0.0, %v5365
      %v5697 = vsub.f32 0.0, %v5367
      %v5698 = vsub.f32 0.0, %v5558
      %v5699 = vsub.f32 0.0, %v5560
      %v5700 = vsub.f32 0.0, %v5369
      %v5701 = vsub.f32 0.0, %v5371
      %v5702 = vsub.f32 0.0, %v5562
      %v5703 = vsub.f32 0.0, %v5564
      %v5704 = vsub.f32 0.0, %v5375
      %v5705 = vsub.f32 0.0, %v5377
      %v5706 = vsub.f32 0.0, %v5568
      %v5707 = vsub.f32 0.0, %v5570
      %v5708 = vsub.f32 0.0, %v5379
      %v5709 = vsub.f32 0.0, %v5381
      %v5710 = vsub.f32 0.0, %v5572
      %v5711 = vsub.f32 0.0, %v5574
      %v5712 = vsub.f32 0.0, %v5385
      %v5713 = vsub.f32 0.0, %v5387
      %v5714 = vsub.f32 0.0, %v5578
      %v5715 = vsub.f32 0.0, %v5580
      %v5716 = vsub.f32 0.0, %v5389
      %v5717 = vsub.f32 0.0, %v5391
      %v5718 = vsub.f32 0.0, %v5582
      %v5719 = vsub.f32 0.0, %v5584
      %v5720 = vsub.f32 0.0, %v5395
      %v5721 = vsub.f32 0.0, %v5397
      %v5722 = vsub.f32 0.0, %v5588
      %v5723 = vsub.f32 0.0, %v5590
      %v5724 = vsub.f32 0.0, %v5399
      %v5725 = vsub.f32 0.0, %v5401
      %v5726 = vsub.f32 0.0, %v5592
      %v5727 = vsub.f32 0.0, %v5594
      %v5728 = vsub.f32 0.0, %v5405
      %v5729 = vsub.f32 0.0, %v5407
      %v5730 = vsub.f32 0.0, %v5598
      %v5731 = vsub.f32 0.0, %v5600
      %v5732 = vsub.f32 0.0, %v5409
      %v5733 = vsub.f32 0.0, %v5411
      %v5734 = vsub.f32 0.0, %v5602
      %v5735 = vsub.f32 0.0, %v5604
      %v5736 = vsub.f32 0.0, %v5415
      %v5737 = vsub.f32 0.0, %v5417
      %v5738 = vsub.f32 0.0, %v5608
      %v5739 = vsub.f32 0.0, %v5610
      %v5740 = vsub.f32 0.0, %v5419
      %v5741 = vsub.f32 0.0, %v5421
      %v5742 = vsub.f32 0.0, %v5612
      %v5743 = vsub.f32 0.0, %v5614
      %v5744 = vmul.f32 %v5616, 1.442695
      %v5745 = vpow.pop %v5744
      %v5746 = vmul.f32 %v5617, 1.442695
      %v5747 = vpow.pop %v5746
      %v5748 = vmul.f32 %v5618, 1.442695
      %v5749 = vpow.pop %v5748
      %v5750 = vmul.f32 %v5619, 1.442695
      %v5751 = vpow.pop %v5750
      %v5752 = vmul.f32 %v5620, 1.442695
      %v5753 = vpow.pop %v5752
      %v5754 = vmul.f32 %v5621, 1.442695
      %v5755 = vpow.pop %v5754
      %v5756 = vmul.f32 %v5622, 1.442695
      %v5757 = vpow.pop %v5756
      %v5758 = vmul.f32 %v5623, 1.442695
      %v5759 = vpow.pop %v5758
      %v5760 = vmul.f32 %v5624, 1.442695
      %v5761 = vpow.pop %v5760
      %v5762 = vmul.f32 %v5625, 1.442695
      %v5763 = vpow.pop %v5762
      %v5764 = vmul.f32 %v5626, 1.442695
      %v5765 = vpow.pop %v5764
      %v5766 = vmul.f32 %v5627, 1.442695
      %v5767 = vpow.pop %v5766
      %v5768 = vmul.f32 %v5628, 1.442695
      %v5769 = vpow.pop %v5768
      %v5770 = vmul.f32 %v5629, 1.442695
      %v5771 = vpow.pop %v5770
      %v5772 = vmul.f32 %v5630, 1.442695
      %v5773 = vpow.pop %v5772
      %v5774 = vmul.f32 %v5631, 1.442695
      %v5775 = vpow.pop %v5774
      %v5776 = vmul.f32 %v5632, 1.442695
      %v5777 = vpow.pop %v5776
      %v5778 = vmul.f32 %v5633, 1.442695
      %v5779 = vpow.pop %v5778
      %v5780 = vmul.f32 %v5634, 1.442695
      %v5781 = vpow.pop %v5780
      %v5782 = vmul.f32 %v5635, 1.442695
      %v5783 = vpow.pop %v5782
      %v5784 = vmul.f32 %v5636, 1.442695
      %v5785 = vpow.pop %v5784
      %v5786 = vmul.f32 %v5637, 1.442695
      %v5787 = vpow.pop %v5786
      %v5788 = vmul.f32 %v5638, 1.442695
      %v5789 = vpow.pop %v5788
      %v5790 = vmul.f32 %v5639, 1.442695
      %v5791 = vpow.pop %v5790
      %v5792 = vmul.f32 %v5640, 1.442695
      %v5793 = vpow.pop %v5792
      %v5794 = vmul.f32 %v5641, 1.442695
      %v5795 = vpow.pop %v5794
      %v5796 = vmul.f32 %v5642, 1.442695
      %v5797 = vpow.pop %v5796
      %v5798 = vmul.f32 %v5643, 1.442695
      %v5799 = vpow.pop %v5798
      %v5800 = vmul.f32 %v5644, 1.442695
      %v5801 = vpow.pop %v5800
      %v5802 = vmul.f32 %v5645, 1.442695
      %v5803 = vpow.pop %v5802
      %v5804 = vmul.f32 %v5646, 1.442695
      %v5805 = vpow.pop %v5804
      %v5806 = vmul.f32 %v5647, 1.442695
      %v5807 = vpow.pop %v5806
      %v5808 = vmul.f32 %v5648, 1.442695
      %v5809 = vpow.pop %v5808
      %v5810 = vmul.f32 %v5649, 1.442695
      %v5811 = vpow.pop %v5810
      %v5812 = vmul.f32 %v5650, 1.442695
      %v5813 = vpow.pop %v5812
      %v5814 = vmul.f32 %v5651, 1.442695
      %v5815 = vpow.pop %v5814
      %v5816 = vmul.f32 %v5652, 1.442695
      %v5817 = vpow.pop %v5816
      %v5818 = vmul.f32 %v5653, 1.442695
      %v5819 = vpow.pop %v5818
      %v5820 = vmul.f32 %v5654, 1.442695
      %v5821 = vpow.pop %v5820
      %v5822 = vmul.f32 %v5655, 1.442695
      %v5823 = vpow.pop %v5822
      %v5824 = vmul.f32 %v5656, 1.442695
      %v5825 = vpow.pop %v5824
      %v5826 = vmul.f32 %v5657, 1.442695
      %v5827 = vpow.pop %v5826
      %v5828 = vmul.f32 %v5658, 1.442695
      %v5829 = vpow.pop %v5828
      %v5830 = vmul.f32 %v5659, 1.442695
      %v5831 = vpow.pop %v5830
      %v5832 = vmul.f32 %v5660, 1.442695
      %v5833 = vpow.pop %v5832
      %v5834 = vmul.f32 %v5661, 1.442695
      %v5835 = vpow.pop %v5834
      %v5836 = vmul.f32 %v5662, 1.442695
      %v5837 = vpow.pop %v5836
      %v5838 = vmul.f32 %v5663, 1.442695
      %v5839 = vpow.pop %v5838
      %v5840 = vmul.f32 %v5664, 1.442695
      %v5841 = vpow.pop %v5840
      %v5842 = vmul.f32 %v5665, 1.442695
      %v5843 = vpow.pop %v5842
      %v5844 = vmul.f32 %v5666, 1.442695
      %v5845 = vpow.pop %v5844
      %v5846 = vmul.f32 %v5667, 1.442695
      %v5847 = vpow.pop %v5846
      %v5848 = vmul.f32 %v5668, 1.442695
      %v5849 = vpow.pop %v5848
      %v5850 = vmul.f32 %v5669, 1.442695
      %v5851 = vpow.pop %v5850
      %v5852 = vmul.f32 %v5670, 1.442695
      %v5853 = vpow.pop %v5852
      %v5854 = vmul.f32 %v5671, 1.442695
      %v5855 = vpow.pop %v5854
      %v5856 = vmul.f32 %v5672, 1.442695
      %v5857 = vpow.pop %v5856
      %v5858 = vmul.f32 %v5673, 1.442695
      %v5859 = vpow.pop %v5858
      %v5860 = vmul.f32 %v5674, 1.442695
      %v5861 = vpow.pop %v5860
      %v5862 = vmul.f32 %v5675, 1.442695
      %v5863 = vpow.pop %v5862
      %v5864 = vmul.f32 %v5676, 1.442695
      %v5865 = vpow.pop %v5864
      %v5866 = vmul.f32 %v5677, 1.442695
      %v5867 = vpow.pop %v5866
      %v5868 = vmul.f32 %v5678, 1.442695
      %v5869 = vpow.pop %v5868
      %v5870 = vmul.f32 %v5679, 1.442695
      %v5871 = vpow.pop %v5870
      %v5872 = vmul.f32 %v5680, 1.442695
      %v5873 = vpow.pop %v5872
      %v5874 = vmul.f32 %v5681, 1.442695
      %v5875 = vpow.pop %v5874
      %v5876 = vmul.f32 %v5682, 1.442695
      %v5877 = vpow.pop %v5876
      %v5878 = vmul.f32 %v5683, 1.442695
      %v5879 = vpow.pop %v5878
      %v5880 = vmul.f32 %v5684, 1.442695
      %v5881 = vpow.pop %v5880
      %v5882 = vmul.f32 %v5685, 1.442695
      %v5883 = vpow.pop %v5882
      %v5884 = vmul.f32 %v5686, 1.442695
      %v5885 = vpow.pop %v5884
      %v5886 = vmul.f32 %v5687, 1.442695
      %v5887 = vpow.pop %v5886
      %v5888 = vmul.f32 %v5688, 1.442695
      %v5889 = vpow.pop %v5888
      %v5890 = vmul.f32 %v5689, 1.442695
      %v5891 = vpow.pop %v5890
      %v5892 = vmul.f32 %v5690, 1.442695
      %v5893 = vpow.pop %v5892
      %v5894 = vmul.f32 %v5691, 1.442695
      %v5895 = vpow.pop %v5894
      %v5896 = vmul.f32 %v5692, 1.442695
      %v5897 = vpow.pop %v5896
      %v5898 = vmul.f32 %v5693, 1.442695
      %v5899 = vpow.pop %v5898
      %v5900 = vmul.f32 %v5694, 1.442695
      %v5901 = vpow.pop %v5900
      %v5902 = vmul.f32 %v5695, 1.442695
      %v5903 = vpow.pop %v5902
      %v5904 = vmul.f32 %v5696, 1.442695
      %v5905 = vpow.pop %v5904
      %v5906 = vmul.f32 %v5697, 1.442695
      %v5907 = vpow.pop %v5906
      %v5908 = vmul.f32 %v5698, 1.442695
      %v5909 = vpow.pop %v5908
      %v5910 = vmul.f32 %v5699, 1.442695
      %v5911 = vpow.pop %v5910
      %v5912 = vmul.f32 %v5700, 1.442695
      %v5913 = vpow.pop %v5912
      %v5914 = vmul.f32 %v5701, 1.442695
      %v5915 = vpow.pop %v5914
      %v5916 = vmul.f32 %v5702, 1.442695
      %v5917 = vpow.pop %v5916
      %v5918 = vmul.f32 %v5703, 1.442695
      %v5919 = vpow.pop %v5918
      %v5920 = vmul.f32 %v5704, 1.442695
      %v5921 = vpow.pop %v5920
      %v5922 = vmul.f32 %v5705, 1.442695
      %v5923 = vpow.pop %v5922
      %v5924 = vmul.f32 %v5706, 1.442695
      %v5925 = vpow.pop %v5924
      %v5926 = vmul.f32 %v5707, 1.442695
      %v5927 = vpow.pop %v5926
      %v5928 = vmul.f32 %v5708, 1.442695
      %v5929 = vpow.pop %v5928
      %v5930 = vmul.f32 %v5709, 1.442695
      %v5931 = vpow.pop %v5930
      %v5932 = vmul.f32 %v5710, 1.442695
      %v5933 = vpow.pop %v5932
      %v5934 = vmul.f32 %v5711, 1.442695
      %v5935 = vpow.pop %v5934
      %v5936 = vmul.f32 %v5712, 1.442695
      %v5937 = vpow.pop %v5936
      %v5938 = vmul.f32 %v5713, 1.442695
      %v5939 = vpow.pop %v5938
      %v5940 = vmul.f32 %v5714, 1.442695
      %v5941 = vpow.pop %v5940
      %v5942 = vmul.f32 %v5715, 1.442695
      %v5943 = vpow.pop %v5942
      %v5944 = vmul.f32 %v5716, 1.442695
      %v5945 = vpow.pop %v5944
      %v5946 = vmul.f32 %v5717, 1.442695
      %v5947 = vpow.pop %v5946
      %v5948 = vmul.f32 %v5718, 1.442695
      %v5949 = vpow.pop %v5948
      %v5950 = vmul.f32 %v5719, 1.442695
      %v5951 = vpow.pop %v5950
      %v5952 = vmul.f32 %v5720, 1.442695
      %v5953 = vpow.pop %v5952
      %v5954 = vmul.f32 %v5721, 1.442695
      %v5955 = vpow.pop %v5954
      %v5956 = vmul.f32 %v5722, 1.442695
      %v5957 = vpow.pop %v5956
      %v5958 = vmul.f32 %v5723, 1.442695
      %v5959 = vpow.pop %v5958
      %v5960 = vmul.f32 %v5724, 1.442695
      %v5961 = vpow.pop %v5960
      %v5962 = vmul.f32 %v5725, 1.442695
      %v5963 = vpow.pop %v5962
      %v5964 = vmul.f32 %v5726, 1.442695
      %v5965 = vpow.pop %v5964
      %v5966 = vmul.f32 %v5727, 1.442695
      %v5967 = vpow.pop %v5966
      %v5968 = vmul.f32 %v5728, 1.442695
      %v5969 = vpow.pop %v5968
      %v5970 = vmul.f32 %v5729, 1.442695
      %v5971 = vpow.pop %v5970
      %v5972 = vmul.f32 %v5730, 1.442695
      %v5973 = vpow.pop %v5972
      %v5974 = vmul.f32 %v5731, 1.442695
      %v5975 = vpow.pop %v5974
      %v5976 = vmul.f32 %v5732, 1.442695
      %v5977 = vpow.pop %v5976
      %v5978 = vmul.f32 %v5733, 1.442695
      %v5979 = vpow.pop %v5978
      %v5980 = vmul.f32 %v5734, 1.442695
      %v5981 = vpow.pop %v5980
      %v5982 = vmul.f32 %v5735, 1.442695
      %v5983 = vpow.pop %v5982
      %v5984 = vmul.f32 %v5736, 1.442695
      %v5985 = vpow.pop %v5984
      %v5986 = vmul.f32 %v5737, 1.442695
      %v5987 = vpow.pop %v5986
      %v5988 = vmul.f32 %v5738, 1.442695
      %v5989 = vpow.pop %v5988
      %v5990 = vmul.f32 %v5739, 1.442695
      %v5991 = vpow.pop %v5990
      %v5992 = vmul.f32 %v5740, 1.442695
      %v5993 = vpow.pop %v5992
      %v5994 = vmul.f32 %v5741, 1.442695
      %v5995 = vpow.pop %v5994
      %v5996 = vmul.f32 %v5742, 1.442695
      %v5997 = vpow.pop %v5996
      %v5998 = vmul.f32 %v5743, 1.442695
      %v5999 = vpow.pop %v5998
      %v6000 = vadd.f32 %v5745, 1.0
      %v6001 = vadd.f32 %v5747, 1.0
      %v6002 = vadd.f32 %v5749, 1.0
      %v6003 = vadd.f32 %v5751, 1.0
      %v6004 = vadd.f32 %v5753, 1.0
      %v6005 = vadd.f32 %v5755, 1.0
      %v6006 = vadd.f32 %v5757, 1.0
      %v6007 = vadd.f32 %v5759, 1.0
      %v6008 = vadd.f32 %v5761, 1.0
      %v6009 = vadd.f32 %v5763, 1.0
      %v6010 = vadd.f32 %v5765, 1.0
      %v6011 = vadd.f32 %v5767, 1.0
      %v6012 = vadd.f32 %v5769, 1.0
      %v6013 = vadd.f32 %v5771, 1.0
      %v6014 = vadd.f32 %v5773, 1.0
      %v6015 = vadd.f32 %v5775, 1.0
      %v6016 = vadd.f32 %v5777, 1.0
      %v6017 = vadd.f32 %v5779, 1.0
      %v6018 = vadd.f32 %v5781, 1.0
      %v6019 = vadd.f32 %v5783, 1.0
      %v6020 = vadd.f32 %v5785, 1.0
      %v6021 = vadd.f32 %v5787, 1.0
      %v6022 = vadd.f32 %v5789, 1.0
      %v6023 = vadd.f32 %v5791, 1.0
      %v6024 = vadd.f32 %v5793, 1.0
      %v6025 = vadd.f32 %v5795, 1.0
      %v6026 = vadd.f32 %v5797, 1.0
      %v6027 = vadd.f32 %v5799, 1.0
      %v6028 = vadd.f32 %v5801, 1.0
      %v6029 = vadd.f32 %v5803, 1.0
      %v6030 = vadd.f32 %v5805, 1.0
      %v6031 = vadd.f32 %v5807, 1.0
      %v6032 = vadd.f32 %v5809, 1.0
      %v6033 = vadd.f32 %v5811, 1.0
      %v6034 = vadd.f32 %v5813, 1.0
      %v6035 = vadd.f32 %v5815, 1.0
      %v6036 = vadd.f32 %v5817, 1.0
      %v6037 = vadd.f32 %v5819, 1.0
      %v6038 = vadd.f32 %v5821, 1.0
      %v6039 = vadd.f32 %v5823, 1.0
      %v6040 = vadd.f32 %v5825, 1.0
      %v6041 = vadd.f32 %v5827, 1.0
      %v6042 = vadd.f32 %v5829, 1.0
      %v6043 = vadd.f32 %v5831, 1.0
      %v6044 = vadd.f32 %v5833, 1.0
      %v6045 = vadd.f32 %v5835, 1.0
      %v6046 = vadd.f32 %v5837, 1.0
      %v6047 = vadd.f32 %v5839, 1.0
      %v6048 = vadd.f32 %v5841, 1.0
      %v6049 = vadd.f32 %v5843, 1.0
      %v6050 = vadd.f32 %v5845, 1.0
      %v6051 = vadd.f32 %v5847, 1.0
      %v6052 = vadd.f32 %v5849, 1.0
      %v6053 = vadd.f32 %v5851, 1.0
      %v6054 = vadd.f32 %v5853, 1.0
      %v6055 = vadd.f32 %v5855, 1.0
      %v6056 = vadd.f32 %v5857, 1.0
      %v6057 = vadd.f32 %v5859, 1.0
      %v6058 = vadd.f32 %v5861, 1.0
      %v6059 = vadd.f32 %v5863, 1.0
      %v6060 = vadd.f32 %v5865, 1.0
      %v6061 = vadd.f32 %v5867, 1.0
      %v6062 = vadd.f32 %v5869, 1.0
      %v6063 = vadd.f32 %v5871, 1.0
      %v6064 = vadd.f32 %v5873, 1.0
      %v6065 = vadd.f32 %v5875, 1.0
      %v6066 = vadd.f32 %v5877, 1.0
      %v6067 = vadd.f32 %v5879, 1.0
      %v6068 = vadd.f32 %v5881, 1.0
      %v6069 = vadd.f32 %v5883, 1.0
      %v6070 = vadd.f32 %v5885, 1.0
      %v6071 = vadd.f32 %v5887, 1.0
      %v6072 = vadd.f32 %v5889, 1.0
      %v6073 = vadd.f32 %v5891, 1.0
      %v6074 = vadd.f32 %v5893, 1.0
      %v6075 = vadd.f32 %v5895, 1.0
      %v6076 = vadd.f32 %v5897, 1.0
      %v6077 = vadd.f32 %v5899, 1.0
      %v6078 = vadd.f32 %v5901, 1.0
      %v6079 = vadd.f32 %v5903, 1.0
      %v6080 = vadd.f32 %v5905, 1.0
      %v6081 = vadd.f32 %v5907, 1.0
      %v6082 = vadd.f32 %v5909, 1.0
      %v6083 = vadd.f32 %v5911, 1.0
      %v6084 = vadd.f32 %v5913, 1.0
      %v6085 = vadd.f32 %v5915, 1.0
      %v6086 = vadd.f32 %v5917, 1.0
      %v6087 = vadd.f32 %v5919, 1.0
      %v6088 = vadd.f32 %v5921, 1.0
      %v6089 = vadd.f32 %v5923, 1.0
      %v6090 = vadd.f32 %v5925, 1.0
      %v6091 = vadd.f32 %v5927, 1.0
      %v6092 = vadd.f32 %v5929, 1.0
      %v6093 = vadd.f32 %v5931, 1.0
      %v6094 = vadd.f32 %v5933, 1.0
      %v6095 = vadd.f32 %v5935, 1.0
      %v6096 = vadd.f32 %v5937, 1.0
      %v6097 = vadd.f32 %v5939, 1.0
      %v6098 = vadd.f32 %v5941, 1.0
      %v6099 = vadd.f32 %v5943, 1.0
      %v6100 = vadd.f32 %v5945, 1.0
      %v6101 = vadd.f32 %v5947, 1.0
      %v6102 = vadd.f32 %v5949, 1.0
      %v6103 = vadd.f32 %v5951, 1.0
      %v6104 = vadd.f32 %v5953, 1.0
      %v6105 = vadd.f32 %v5955, 1.0
      %v6106 = vadd.f32 %v5957, 1.0
      %v6107 = vadd.f32 %v5959, 1.0
      %v6108 = vadd.f32 %v5961, 1.0
      %v6109 = vadd.f32 %v5963, 1.0
      %v6110 = vadd.f32 %v5965, 1.0
      %v6111 = vadd.f32 %v5967, 1.0
      %v6112 = vadd.f32 %v5969, 1.0
      %v6113 = vadd.f32 %v5971, 1.0
      %v6114 = vadd.f32 %v5973, 1.0
      %v6115 = vadd.f32 %v5975, 1.0
      %v6116 = vadd.f32 %v5977, 1.0
      %v6117 = vadd.f32 %v5979, 1.0
      %v6118 = vadd.f32 %v5981, 1.0
      %v6119 = vadd.f32 %v5983, 1.0
      %v6120 = vadd.f32 %v5985, 1.0
      %v6121 = vadd.f32 %v5987, 1.0
      %v6122 = vadd.f32 %v5989, 1.0
      %v6123 = vadd.f32 %v5991, 1.0
      %v6124 = vadd.f32 %v5993, 1.0
      %v6125 = vadd.f32 %v5995, 1.0
      %v6126 = vadd.f32 %v5997, 1.0
      %v6127 = vadd.f32 %v5999, 1.0
      %v6128 = vrcp.pop %v6000
      %v6129 = vrcp.pop %v6001
      %v6130 = vrcp.pop %v6002
      %v6131 = vrcp.pop %v6003
      %v6132 = vrcp.pop %v6004
      %v6133 = vrcp.pop %v6005
      %v6134 = vrcp.pop %v6006
      %v6135 = vrcp.pop %v6007
      %v6136 = vrcp.pop %v6008
      %v6137 = vrcp.pop %v6009
      %v6138 = vrcp.pop %v6010
      %v6139 = vrcp.pop %v6011
      %v6140 = vrcp.pop %v6012
      %v6141 = vrcp.pop %v6013
      %v6142 = vrcp.pop %v6014
      %v6143 = vrcp.pop %v6015
      %v6144 = vrcp.pop %v6016
      %v6145 = vrcp.pop %v6017
      %v6146 = vrcp.pop %v6018
      %v6147 = vrcp.pop %v6019
      %v6148 = vrcp.pop %v6020
      %v6149 = vrcp.pop %v6021
      %v6150 = vrcp.pop %v6022
      %v6151 = vrcp.pop %v6023
      %v6152 = vrcp.pop %v6024
      %v6153 = vrcp.pop %v6025
      %v6154 = vrcp.pop %v6026
      %v6155 = vrcp.pop %v6027
      %v6156 = vrcp.pop %v6028
      %v6157 = vrcp.pop %v6029
      %v6158 = vrcp.pop %v6030
      %v6159 = vrcp.pop %v6031
      %v6160 = vrcp.pop %v6032
      %v6161 = vrcp.pop %v6033
      %v6162 = vrcp.pop %v6034
      %v6163 = vrcp.pop %v6035
      %v6164 = vrcp.pop %v6036
      %v6165 = vrcp.pop %v6037
      %v6166 = vrcp.pop %v6038
      %v6167 = vrcp.pop %v6039
      %v6168 = vrcp.pop %v6040
      %v6169 = vrcp.pop %v6041
      %v6170 = vrcp.pop %v6042
      %v6171 = vrcp.pop %v6043
      %v6172 = vrcp.pop %v6044
      %v6173 = vrcp.pop %v6045
      %v6174 = vrcp.pop %v6046
      %v6175 = vrcp.pop %v6047
      %v6176 = vrcp.pop %v6048
      %v6177 = vrcp.pop %v6049
      %v6178 = vrcp.pop %v6050
      %v6179 = vrcp.pop %v6051
      %v6180 = vrcp.pop %v6052
      %v6181 = vrcp.pop %v6053
      %v6182 = vrcp.pop %v6054
      %v6183 = vrcp.pop %v6055
      %v6184 = vrcp.pop %v6056
      %v6185 = vrcp.pop %v6057
      %v6186 = vrcp.pop %v6058
      %v6187 = vrcp.pop %v6059
      %v6188 = vrcp.pop %v6060
      %v6189 = vrcp.pop %v6061
      %v6190 = vrcp.pop %v6062
      %v6191 = vrcp.pop %v6063
      %v6192 = vrcp.pop %v6064
      %v6193 = vrcp.pop %v6065
      %v6194 = vrcp.pop %v6066
      %v6195 = vrcp.pop %v6067
      %v6196 = vrcp.pop %v6068
      %v6197 = vrcp.pop %v6069
      %v6198 = vrcp.pop %v6070
      %v6199 = vrcp.pop %v6071
      %v6200 = vrcp.pop %v6072
      %v6201 = vrcp.pop %v6073
      %v6202 = vrcp.pop %v6074
      %v6203 = vrcp.pop %v6075
      %v6204 = vrcp.pop %v6076
      %v6205 = vrcp.pop %v6077
      %v6206 = vrcp.pop %v6078
      %v6207 = vrcp.pop %v6079
      %v6208 = vrcp.pop %v6080
      %v6209 = vrcp.pop %v6081
      %v6210 = vrcp.pop %v6082
      %v6211 = vrcp.pop %v6083
      %v6212 = vrcp.pop %v6084
      %v6213 = vrcp.pop %v6085
      %v6214 = vrcp.pop %v6086
      %v6215 = vrcp.pop %v6087
      %v6216 = vrcp.pop %v6088
      %v6217 = vrcp.pop %v6089
      %v6218 = vrcp.pop %v6090
      %v6219 = vrcp.pop %v6091
      %v6220 = vrcp.pop %v6092
      %v6221 = vrcp.pop %v6093
      %v6222 = vrcp.pop %v6094
      %v6223 = vrcp.pop %v6095
      %v6224 = vrcp.pop %v6096
      %v6225 = vrcp.pop %v6097
      %v6226 = vrcp.pop %v6098
      %v6227 = vrcp.pop %v6099
      %v6228 = vrcp.pop %v6100
      %v6229 = vrcp.pop %v6101
      %v6230 = vrcp.pop %v6102
      %v6231 = vrcp.pop %v6103
      %v6232 = vrcp.pop %v6104
      %v6233 = vrcp.pop %v6105
      %v6234 = vrcp.pop %v6106
      %v6235 = vrcp.pop %v6107
      %v6236 = vrcp.pop %v6108
      %v6237 = vrcp.pop %v6109
      %v6238 = vrcp.pop %v6110
      %v6239 = vrcp.pop %v6111
      %v6240 = vrcp.pop %v6112
      %v6241 = vrcp.pop %v6113
      %v6242 = vrcp.pop %v6114
      %v6243 = vrcp.pop %v6115
      %v6244 = vrcp.pop %v6116
      %v6245 = vrcp.pop %v6117
      %v6246 = vrcp.pop %v6118
      %v6247 = vrcp.pop %v6119
      %v6248 = vrcp.pop %v6120
      %v6249 = vrcp.pop %v6121
      %v6250 = vrcp.pop %v6122
      %v6251 = vrcp.pop %v6123
      %v6252 = vrcp.pop %v6124
      %v6253 = vrcp.pop %v6125
      %v6254 = vrcp.pop %v6126
      %v6255 = vrcp.pop %v6127
      %v6256 = vmul.f32 %v5265, %v6128
      %v6257 = vmul.f32 %v5267, %v6129
      %v6258 = vmul.f32 %v5458, %v6130
      %v6259 = vmul.f32 %v5460, %v6131
      %v6260 = vmul.f32 %v5269, %v6132
      %v6261 = vmul.f32 %v5271, %v6133
      %v6262 = vmul.f32 %v5462, %v6134
      %v6263 = vmul.f32 %v5464, %v6135
      %v6264 = vmul.f32 %v5275, %v6136
      %v6265 = vmul.f32 %v5277, %v6137
      %v6266 = vmul.f32 %v5468, %v6138
      %v6267 = vmul.f32 %v5470, %v6139
      %v6268 = vmul.f32 %v5279, %v6140
      %v6269 = vmul.f32 %v5281, %v6141
      %v6270 = vmul.f32 %v5472, %v6142
      %v6271 = vmul.f32 %v5474, %v6143
      %v6272 = vmul.f32 %v5285, %v6144
      %v6273 = vmul.f32 %v5287, %v6145
      %v6274 = vmul.f32 %v5478, %v6146
      %v6275 = vmul.f32 %v5480, %v6147
      %v6276 = vmul.f32 %v5289, %v6148
      %v6277 = vmul.f32 %v5291, %v6149
      %v6278 = vmul.f32 %v5482, %v6150
      %v6279 = vmul.f32 %v5484, %v6151
      %v6280 = vmul.f32 %v5295, %v6152
      %v6281 = vmul.f32 %v5297, %v6153
      %v6282 = vmul.f32 %v5488, %v6154
      %v6283 = vmul.f32 %v5490, %v6155
      %v6284 = vmul.f32 %v5299, %v6156
      %v6285 = vmul.f32 %v5301, %v6157
      %v6286 = vmul.f32 %v5492, %v6158
      %v6287 = vmul.f32 %v5494, %v6159
      %v6288 = vmul.f32 %v5305, %v6160
      %v6289 = vmul.f32 %v5307, %v6161
      %v6290 = vmul.f32 %v5498, %v6162
      %v6291 = vmul.f32 %v5500, %v6163
      %v6292 = vmul.f32 %v5309, %v6164
      %v6293 = vmul.f32 %v5311, %v6165
      %v6294 = vmul.f32 %v5502, %v6166
      %v6295 = vmul.f32 %v5504, %v6167
      %v6296 = vmul.f32 %v5315, %v6168
      %v6297 = vmul.f32 %v5317, %v6169
      %v6298 = vmul.f32 %v5508, %v6170
      %v6299 = vmul.f32 %v5510, %v6171
      %v6300 = vmul.f32 %v5319, %v6172
      %v6301 = vmul.f32 %v5321, %v6173
      %v6302 = vmul.f32 %v5512, %v6174
      %v6303 = vmul.f32 %v5514, %v6175
      %v6304 = vmul.f32 %v5325, %v6176
      %v6305 = vmul.f32 %v5327, %v6177
      %v6306 = vmul.f32 %v5518, %v6178
      %v6307 = vmul.f32 %v5520, %v6179
      %v6308 = vmul.f32 %v5329, %v6180
      %v6309 = vmul.f32 %v5331, %v6181
      %v6310 = vmul.f32 %v5522, %v6182
      %v6311 = vmul.f32 %v5524, %v6183
      %v6312 = vmul.f32 %v5335, %v6184
      %v6313 = vmul.f32 %v5337, %v6185
      %v6314 = vmul.f32 %v5528, %v6186
      %v6315 = vmul.f32 %v5530, %v6187
      %v6316 = vmul.f32 %v5339, %v6188
      %v6317 = vmul.f32 %v5341, %v6189
      %v6318 = vmul.f32 %v5532, %v6190
      %v6319 = vmul.f32 %v5534, %v6191
      %v6320 = vmul.f32 %v5345, %v6192
      %v6321 = vmul.f32 %v5347, %v6193
      %v6322 = vmul.f32 %v5538, %v6194
      %v6323 = vmul.f32 %v5540, %v6195
      %v6324 = vmul.f32 %v5349, %v6196
      %v6325 = vmul.f32 %v5351, %v6197
      %v6326 = vmul.f32 %v5542, %v6198
      %v6327 = vmul.f32 %v5544, %v6199
      %v6328 = vmul.f32 %v5355, %v6200
      %v6329 = vmul.f32 %v5357, %v6201
      %v6330 = vmul.f32 %v5548, %v6202
      %v6331 = vmul.f32 %v5550, %v6203
      %v6332 = vmul.f32 %v5359, %v6204
      %v6333 = vmul.f32 %v5361, %v6205
      %v6334 = vmul.f32 %v5552, %v6206
      %v6335 = vmul.f32 %v5554, %v6207
      %v6336 = vmul.f32 %v5365, %v6208
      %v6337 = vmul.f32 %v5367, %v6209
      %v6338 = vmul.f32 %v5558, %v6210
      %v6339 = vmul.f32 %v5560, %v6211
      %v6340 = vmul.f32 %v5369, %v6212
      %v6341 = vmul.f32 %v5371, %v6213
      %v6342 = vmul.f32 %v5562, %v6214
      %v6343 = vmul.f32 %v5564, %v6215
      %v6344 = vmul.f32 %v5375, %v6216
      %v6345 = vmul.f32 %v5377, %v6217
      %v6346 = vmul.f32 %v5568, %v6218
      %v6347 = vmul.f32 %v5570, %v6219
      %v6348 = vmul.f32 %v5379, %v6220
      %v6349 = vmul.f32 %v5381, %v6221
      %v6350 = vmul.f32 %v5572, %v6222
      %v6351 = vmul.f32 %v5574, %v6223
      %v6352 = vmul.f32 %v5385, %v6224
      %v6353 = vmul.f32 %v5387, %v6225
      %v6354 = vmul.f32 %v5578, %v6226
      %v6355 = vmul.f32 %v5580, %v6227
      %v6356 = vmul.f32 %v5389, %v6228
      %v6357 = vmul.f32 %v5391, %v6229
      %v6358 = vmul.f32 %v5582, %v6230
      %v6359 = vmul.f32 %v5584, %v6231
      %v6360 = vmul.f32 %v5395, %v6232
      %v6361 = vmul.f32 %v5397, %v6233
      %v6362 = vmul.f32 %v5588, %v6234
      %v6363 = vmul.f32 %v5590, %v6235
      %v6364 = vmul.f32 %v5399, %v6236
      %v6365 = vmul.f32 %v5401, %v6237
      %v6366 = vmul.f32 %v5592, %v6238
      %v6367 = vmul.f32 %v5594, %v6239
      %v6368 = vmul.f32 %v5405, %v6240
      %v6369 = vmul.f32 %v5407, %v6241
      %v6370 = vmul.f32 %v5598, %v6242
      %v6371 = vmul.f32 %v5600, %v6243
      %v6372 = vmul.f32 %v5409, %v6244
      %v6373 = vmul.f32 %v5411, %v6245
      %v6374 = vmul.f32 %v5602, %v6246
      %v6375 = vmul.f32 %v5604, %v6247
      %v6376 = vmul.f32 %v5415, %v6248
      %v6377 = vmul.f32 %v5417, %v6249
      %v6378 = vmul.f32 %v5608, %v6250
      %v6379 = vmul.f32 %v5610, %v6251
      %v6380 = vmul.f32 %v5419, %v6252
      %v6381 = vmul.f32 %v5421, %v6253
      %v6382 = vmul.f32 %v5612, %v6254
      %v6383 = vmul.f32 %v5614, %v6255
      %6384 = vmatprep.subr.mxu0 %v6317
      %6385 = vmatpush1.msra.mxu0 %v6316
      %6386 = vmatprep.subr.mxu0 %v6313
      %6387 = vmatpush1.msra.mxu0 %v6312
      %6388 = vmatprep.subr.mxu0 %v6309
      %6389 = vmatpush1.msra.mxu0 %v6308
      %6390 = vmatprep.subr.mxu0 %v6305
      %6391 = vmatpush1.msra.mxu0 %v6304
      %6392 = vmatprep.subr.mxu0 %v6301
      %6393 = vmatpush1.msra.mxu0 %v6300
      %6394 = vmatprep.subr.mxu0 %v6297
      %6395 = vmatpush1.msra.mxu0 %v6296
      %6396 = vmatprep.subr.mxu0 %v6293
      %6397 = vmatpush1.msra.mxu0 %v6292
      %6398 = vmatprep.subr.mxu0 %v6289
      %6399 = vmatpush1.msra.mxu0 %v6288
      %6400 = vmatprep.subr.mxu0 %v6285
      %6401 = vmatpush1.msra.mxu0 %v6284
      %6402 = vmatprep.subr.mxu0 %v6281
      %6403 = vmatpush1.msra.mxu0 %v6280
      %6404 = vmatprep.subr.mxu0 %v6277
      %6405 = vmatpush1.msra.mxu0 %v6276
      %6406 = vmatprep.subr.mxu0 %v6273
      %6407 = vmatpush1.msra.mxu0 %v6272
      %6408 = vmatprep.subr.mxu0 %v6269
      %6409 = vmatpush1.msra.mxu0 %v6268
      %6410 = vmatprep.subr.mxu0 %v6265
      %6411 = vmatpush1.msra.mxu0 %v6264
      %6412 = vmatprep.subr.mxu0 %v6261
      %6413 = vmatpush1.msra.mxu0 %v6260
      %6414 = vmatprep.subr.mxu0 %v6257
      %6415 = vmatpush1.msra.mxu0 %v6256
      %6416 = vmatprep.subr.mxu0 %v6381
      %6417 = vmatpush2.msra.mxu0 %v6380
      %6418 = vmatprep.subr.mxu0 %v6377
      %6419 = vmatpush2.msra.mxu0 %v6376
      %6420 = vmatprep.subr.mxu0 %v6373
      %6421 = vmatpush2.msra.mxu0 %v6372
      %6422 = vmatprep.subr.mxu0 %v6369
      %6423 = vmatpush2.msra.mxu0 %v6368
      %6424 = vmatprep.subr.mxu0 %v6365
      %6425 = vmatpush2.msra.mxu0 %v6364
      %6426 = vmatprep.subr.mxu0 %v6361
      %6427 = vmatpush2.msra.mxu0 %v6360
      %6428 = vmatprep.subr.mxu0 %v6357
      %6429 = vmatpush2.msra.mxu0 %v6356
      %6430 = vmatprep.subr.mxu0 %v6353
      %6431 = vmatpush2.msra.mxu0 %v6352
      %6432 = vmatprep.subr.mxu0 %v6349
      %6433 = vmatpush2.msra.mxu0 %v6348
      %6434 = vmatprep.subr.mxu0 %v6345
      %6435 = vmatpush2.msra.mxu0 %v6344
      %6436 = vmatprep.subr.mxu0 %v6341
      %6437 = vmatpush2.msra.mxu0 %v6340
      %6438 = vmatprep.subr.mxu0 %v6337
      %6439 = vmatpush2.msra.mxu0 %v6336
      %6440 = vmatprep.subr.mxu0 %v6333
      %6441 = vmatpush2.msra.mxu0 %v6332
      %6442 = vmatprep.subr.mxu0 %v6329
      %6443 = vmatpush2.msra.mxu0 %v6328
      %6444 = vmatprep.subr.mxu0 %v6325
      %6445 = vmatpush2.msra.mxu0 %v6324
      %6446 = vmatprep.subr.mxu0 %v6321
      %6447 = vmatpush2.msra.mxu0 %v6320
      %6448 = vmatprep.mubr.f32.mxu0 %v820
      %6449 = vmatmul.mubr.f32.gmra.mxu0 %v819
      %v6450 = vpop.f32.mrf.mxu0
      %v6451 = vadd.f32 0.0, %v6450
      %v6452 = vpop.f32.mrf.mxu0
      %v6453 = vadd.f32 0.0, %v6452
      %6454 = vdwg.mxu0
      %6455 = vmatprep.subr.mxu0 %v6319
      %6456 = vmatpush1.msra.mxu0 %v6318
      %6457 = vmatprep.subr.mxu0 %v6315
      %6458 = vmatpush1.msra.mxu0 %v6314
      %6459 = vmatprep.subr.mxu0 %v6311
      %6460 = vmatpush1.msra.mxu0 %v6310
      %6461 = vmatprep.subr.mxu0 %v6307
      %6462 = vmatpush1.msra.mxu0 %v6306
      %6463 = vmatprep.subr.mxu0 %v6303
      %6464 = vmatpush1.msra.mxu0 %v6302
      %6465 = vmatprep.subr.mxu0 %v6299
      %6466 = vmatpush1.msra.mxu0 %v6298
      %6467 = vmatprep.subr.mxu0 %v6295
      %6468 = vmatpush1.msra.mxu0 %v6294
      %6469 = vmatprep.subr.mxu0 %v6291
      %6470 = vmatpush1.msra.mxu0 %v6290
      %6471 = vmatprep.subr.mxu0 %v6287
      %6472 = vmatpush1.msra.mxu0 %v6286
      %6473 = vmatprep.subr.mxu0 %v6283
      %6474 = vmatpush1.msra.mxu0 %v6282
      %6475 = vmatprep.subr.mxu0 %v6279
      %6476 = vmatpush1.msra.mxu0 %v6278
      %6477 = vmatprep.subr.mxu0 %v6275
      %6478 = vmatpush1.msra.mxu0 %v6274
      %6479 = vmatprep.subr.mxu0 %v6271
      %6480 = vmatpush1.msra.mxu0 %v6270
      %6481 = vmatprep.subr.mxu0 %v6267
      %6482 = vmatpush1.msra.mxu0 %v6266
      %6483 = vmatprep.subr.mxu0 %v6263
      %6484 = vmatpush1.msra.mxu0 %v6262
      %6485 = vmatprep.subr.mxu0 %v6259
      %6486 = vmatpush1.msra.mxu0 %v6258
      %6487 = vmatprep.subr.mxu0 %v6383
      %6488 = vmatpush2.msra.mxu0 %v6382
      %6489 = vmatprep.subr.mxu0 %v6379
      %6490 = vmatpush2.msra.mxu0 %v6378
      %6491 = vmatprep.subr.mxu0 %v6375
      %6492 = vmatpush2.msra.mxu0 %v6374
      %6493 = vmatprep.subr.mxu0 %v6371
      %6494 = vmatpush2.msra.mxu0 %v6370
      %6495 = vmatprep.subr.mxu0 %v6367
      %6496 = vmatpush2.msra.mxu0 %v6366
      %6497 = vmatprep.subr.mxu0 %v6363
      %6498 = vmatpush2.msra.mxu0 %v6362
      %6499 = vmatprep.subr.mxu0 %v6359
      %6500 = vmatpush2.msra.mxu0 %v6358
      %6501 = vmatprep.subr.mxu0 %v6355
      %6502 = vmatpush2.msra.mxu0 %v6354
      %6503 = vmatprep.subr.mxu0 %v6351
      %6504 = vmatpush2.msra.mxu0 %v6350
      %6505 = vmatprep.subr.mxu0 %v6347
      %6506 = vmatpush2.msra.mxu0 %v6346
      %6507 = vmatprep.subr.mxu0 %v6343
      %6508 = vmatpush2.msra.mxu0 %v6342
      %6509 = vmatprep.subr.mxu0 %v6339
      %6510 = vmatpush2.msra.mxu0 %v6338
      %6511 = vmatprep.subr.mxu0 %v6335
      %6512 = vmatpush2.msra.mxu0 %v6334
      %6513 = vmatprep.subr.mxu0 %v6331
      %6514 = vmatpush2.msra.mxu0 %v6330
      %6515 = vmatprep.subr.mxu0 %v6327
      %6516 = vmatpush2.msra.mxu0 %v6326
      %6517 = vmatprep.subr.mxu0 %v6323
      %6518 = vmatpush2.msra.mxu0 %v6322
      %6519 = vmatprep.mubr.f32.mxu0 %v820
      %6520 = vmatmul.mubr.f32.gmra.mxu0 %v819
      %v6521 = vpop.f32.mrf.mxu0
      %v6522 = vadd.f32 0.0, %v6521
      %v6523 = vpop.f32.mrf.mxu0
      %v6524 = vadd.f32 0.0, %v6523
      %6525 = vdwg.mxu0
      %v6526 = vld [vmem:[%s250] sm:$0xff]
      %v6527 = vld [vmem:[%s250 + $0x8] sm:$0xff]
      %v6544 = vcombine.low %v2209, %v2211
      %v6545 = vcombine.low %v2280, %v2282
      %v6546 = vcombine.low %v3623, %v3625
      %v6547 = vcombine.low %v3694, %v3696
      %v6549 = vunpack.c.l.s4 1966171168
      %v6550 = vunpack.c.0.s8 %v6549
      %v6551 = vlaneseq
      %v6552 = vshrl.u32 %v6551, 7
      %v6553 = vsub.s32 %v6550, %v6552
      %v6554 = vrot.slane %v6544, %v6553
      %v6556 = vunpack.c.l.s4 1966171168
      %v6557 = vunpack.c.0.s8 %v6556
      %v6558 = vlaneseq
      %v6559 = vshrl.u32 %v6558, 7
      %v6560 = vsub.s32 %v6557, %v6559
      %v6561 = vrot.slane %v6545, %v6560
      %v6563 = vunpack.c.l.s4 1966171168
      %v6564 = vunpack.c.0.s8 %v6563
      %v6565 = vlaneseq
      %v6566 = vshrl.u32 %v6565, 7
      %v6567 = vsub.s32 %v6564, %v6566
      %v6568 = vrot.slane %v6546, %v6567
      %v6570 = vunpack.c.l.s4 1966171168
      %v6571 = vunpack.c.0.s8 %v6570
      %v6572 = vlaneseq
      %v6573 = vshrl.u32 %v6572, 7
      %v6574 = vsub.s32 %v6571, %v6573
      %v6575 = vrot.slane %v6547, %v6574
      %v6576 = vcombine.low %v6554, %v6561
      %v6577 = vcombine.low %v6568, %v6575
      %v6579 = vunpack.c.l.s4 1966171168
      %v6580 = vunpack.c.0.s8 %v6579
      %v6581 = vlaneseq
      %v6582 = vshrl.u32 %v6581, 7
      %v6583 = vsub.s32 %v6580, %v6582
      %v6584 = vrot.slane %v6576, %v6583
      %v6586 = vunpack.c.l.s4 1966171168
      %v6587 = vunpack.c.0.s8 %v6586
      %v6588 = vlaneseq
      %v6589 = vshrl.u32 %v6588, 7
      %v6590 = vsub.s32 %v6587, %v6589
      %v6591 = vrot.slane %v6577, %v6590
      %v6592 = vcombine.low %v6584, %v6591
      %v6593 = vcombine.low %v5037, %v5039
      %v6594 = vcombine.low %v5108, %v5110
      %v6595 = vcombine.low %v6451, %v6453
      %v6596 = vcombine.low %v6522, %v6524
      %v6598 = vunpack.c.l.s4 1966171168
      %v6599 = vunpack.c.0.s8 %v6598
      %v6600 = vlaneseq
      %v6601 = vshrl.u32 %v6600, 7
      %v6602 = vsub.s32 %v6599, %v6601
      %v6603 = vrot.slane %v6593, %v6602
      %v6605 = vunpack.c.l.s4 1966171168
      %v6606 = vunpack.c.0.s8 %v6605
      %v6607 = vlaneseq
      %v6608 = vshrl.u32 %v6607, 7
      %v6609 = vsub.s32 %v6606, %v6608
      %v6610 = vrot.slane %v6594, %v6609
      %v6612 = vunpack.c.l.s4 1966171168
      %v6613 = vunpack.c.0.s8 %v6612
      %v6614 = vlaneseq
      %v6615 = vshrl.u32 %v6614, 7
      %v6616 = vsub.s32 %v6613, %v6615
      %v6617 = vrot.slane %v6595, %v6616
      %v6619 = vunpack.c.l.s4 1966171168
      %v6620 = vunpack.c.0.s8 %v6619
      %v6621 = vlaneseq
      %v6622 = vshrl.u32 %v6621, 7
      %v6623 = vsub.s32 %v6620, %v6622
      %v6624 = vrot.slane %v6596, %v6623
      %v6625 = vcombine.low %v6603, %v6610
      %v6626 = vcombine.low %v6617, %v6624
      %v6628 = vunpack.c.l.s4 1966171168
      %v6629 = vunpack.c.0.s8 %v6628
      %v6630 = vlaneseq
      %v6631 = vshrl.u32 %v6630, 7
      %v6632 = vsub.s32 %v6629, %v6631
      %v6633 = vrot.slane %v6625, %v6632
      %v6635 = vunpack.c.l.s4 1966171168
      %v6636 = vunpack.c.0.s8 %v6635
      %v6637 = vlaneseq
      %v6638 = vshrl.u32 %v6637, 7
      %v6639 = vsub.s32 %v6636, %v6638
      %v6640 = vrot.slane %v6626, %v6639
      %v6641 = vcombine.low %v6633, %v6640
      %v6644 = vadd.f32 %v6526, %v6592
      %v6645 = vadd.f32 %v6527, %v6641
      %6646 = vst [vmem:[%s250] sm:$0xff] %v6644
      %6647 = vst [vmem:[%s250 + $0x8] sm:$0xff] %v6645
      // Predicated region
      $region45: #{new_efficient2_forward.1} parent=39 // pred_check
        %p6648 = pneg %p252
      $region46: #{new_efficient2_forward.1} parent=39 // pred_check_branch
        %6650 = sbr.rel (%p6648) target = $region48
      $region47: #{new_efficient2_forward.1} parent=39 // pred_region
        %v6651 = vld [vmem:[%s250] sm:$0xff]
        %v6652 = vld [vmem:[%s250 + $0x8] sm:$0xff]
        %v6653 = vmul.f32 %v6651, 0.00390625
        %v6654 = vmul.f32 %v6652, 0.00390625
        %6655 = vst [vmem:[%s250] sm:$0xff] %v6653
        %6656 = vst [vmem:[%s250 + $0x8] sm:$0xff] %v6654
      $region48: #{new_efficient2_forward.1} parent=39 // pred_fallthru
        _
      %p6657 = scmp.lt.s32.totalorder %s20, 1
      %s6658 = scalar_select %p6657, %s20, 1
      %s6659 = smul.addr %s6658, 16
      %s6660 = scalar_lea.vmem %s5, %s6659
      // Predicated region
      $region49: #{new_efficient2_forward.1} parent=39 // pred_check
        %p6661 = pneg %p158
      $region50: #{new_efficient2_forward.1} parent=39 // pred_check_branch
        %6663 = sbr.rel (%p6661) target = $region52
      $region51: #{new_efficient2_forward.1} parent=39 // pred_region
        _
      $region52: #{new_efficient2_forward.1} parent=39 // pred_fallthru
        _
    $region40: #{new_efficient2_forward.1} parent=5 // pred_fallthru
      _
    %p6664 = scmp.le.s32.totalorder 2, %s11
    // Predicated region
    $region53: #{new_efficient2_forward.1} parent=5 // pred_check
      %p6665 = pneg %p6664
    $region54: #{new_efficient2_forward.1} parent=5 // pred_check_branch
      %6667 = sbr.rel (%p6665) target = $region56
    $region55: #{new_efficient2_forward.1} parent=5 // pred_region
      %s6668 = ssub.s32 %s11, 2
      // Predicated region
      $region57: #{new_efficient2_forward.1} parent=55 // pred_check
        %p6669 = pneg %p164
      $region58: #{new_efficient2_forward.1} parent=55 // pred_check_branch
        %6671 = sbr.rel (%p6669) target = $region60
      $region59: #{new_efficient2_forward.1} parent=55 // pred_region
        %p6672 = scmp.lt.s32.totalorder %s22, 1
        %s6673 = scalar_select %p6672, %s22, 1
        %s6674 = smul.addr %s6673, 16
        %s6675 = scalar_lea.vmem %s5, %s6674
      $region60: #{new_efficient2_forward.1} parent=55 // pred_fallthru
        _
    $region56: #{new_efficient2_forward.1} parent=5 // pred_fallthru
      _
  $region6: #{new_efficient2_forward.1} parent=0 // loop_footer
    %s15 = sadd.s32 1, %s11
  $region7: #{new_efficient2_forward.1} parent=0 // loop_footer_branch
    %10 = sbr.rel target = $region3
  $region8: #{new_efficient2_forward.1} parent=0 // loop_exit
    _

</llo_original>
